<compile_context>
chip_gen: v6e
topology: v6e:2x2x1
jax: 0.10.0
libtpu: 0.0.40
codegen_flags: <defaults>
</compile_context>

<pallas_src>
import jax
import jax.numpy as jnp
from jax.experimental import pallas as pl
from jax.experimental.pallas import tpu as pltpu

BN_EPS = 1e-5
NUM_CLASSES = 2
OUT_PAD = 128  # lane-dense padded FC output width


# ------------------------------ fused kernel -------------------------------

def _fused_pneumonia_kernel(
    x_ref,            # (1, H, W, 3)            one NHWC image
    w1_ref,           # (27, 12)                conv1 im2col weight
    s1_ref, sh1_ref,  # (1, 12)                 conv1 bias + BN1 folded
    w2_ref,           # (108, 20)               conv2 im2col weight
    b2_ref,           # (1, 20)                 conv2 bias
    w3_ref,           # (180, 32)               conv3 im2col weight
    s3_ref, sh3_ref,  # (1, 32)                 conv3 bias + BN3 folded
    wf_ref,           # (NUM_CLASSES, Hp*Wp, 32) fc weight [class, pixel, chan]
    bf_ref,           # (1, OUT_PAD)            fc bias (lane padded)
    o_ref,            # (1, 1, OUT_PAD)
    xp1_ref,          # VMEM (H+2,  W+2,  3)    padded conv1 input
    pat1_ref,         # VMEM (H*W,  27)         conv1 im2col patches
    xp2_ref,          # VMEM (Hp+2, Wp+2, 12)   padded conv2 input
    pat2_ref,         # VMEM (Hp*Wp, 108)
    xp3_ref,          # VMEM (Hp+2, Wp+2, 20)   padded conv3 input
    pat3_ref,         # VMEM (Hp*Wp, 180)
):
    f32 = jnp.float32
    H, W, C0 = x_ref.shape[1], x_ref.shape[2], x_ref.shape[3]
    Hp, Wp = H // 2, W // 2
    C1 = w1_ref.shape[1]
    C2 = w2_ref.shape[1]

    def im2col(xp_ref, pat_ref, h, w, cin):
        # xp_ref holds the zero-padded (h+2, w+2, cin) activation; assemble the
        # (h*w, 9*cin) patch matrix in VMEM (9 shifted slice-stores, 1 load).
        xp = xp_ref[...]
        t = 0
        for dy in range(3):
            for dx in range(3):
                pat_ref[:, t * cin:(t + 1) * cin] = (
                    xp[dy:dy + h, dx:dx + w, :].reshape(h * w, cin))
                t += 1
        return pat_ref[...]

    # ---- conv1 (3x3, pad 1) + folded BN1 + ReLU, fused 2x2 max-pool --------
    xp1_ref[...] = jnp.zeros_like(xp1_ref)
    xp1_ref[1:H + 1, 1:W + 1, :] = x_ref[0]
    p1 = im2col(xp1_ref, pat1_ref, H, W, C0)                   # (H*W, 27)
    y1 = jnp.dot(p1, w1_ref[...], preferred_element_type=f32)  # (H*W, 12)
    y1 = jnp.maximum(y1 * s1_ref[...] + sh1_ref[...], 0.0)
    y1 = y1.reshape(H, W, C1)
    y1 = jnp.max(y1.reshape(H, Wp, 2, C1), axis=2)             # pool along W
    y1 = jnp.max(y1.reshape(Hp, 2, Wp, C1), axis=1)            # pool along H

    # ---- conv2 (3x3, pad 1) + bias + ReLU ----------------------------------
    xp2_ref[...] = jnp.zeros_like(xp2_ref)
    xp2_ref[1:Hp + 1, 1:Wp + 1, :] = y1
    p2 = im2col(xp2_ref, pat2_ref, Hp, Wp, C1)                 # (Hp*Wp, 108)
    y2 = jnp.dot(p2, w2_ref[...], preferred_element_type=f32)  # (Hp*Wp, 20)
    y2 = jnp.maximum(y2 + b2_ref[...], 0.0)

    # ---- conv3 (3x3, pad 1) + folded BN3 + ReLU ----------------------------
    xp3_ref[...] = jnp.zeros_like(xp3_ref)
    xp3_ref[1:Hp + 1, 1:Wp + 1, :] = y2.reshape(Hp, Wp, C2)
    p3 = im2col(xp3_ref, pat3_ref, Hp, Wp, C2)                 # (Hp*Wp, 180)
    y3 = jnp.dot(p3, w3_ref[...], preferred_element_type=f32)  # (Hp*Wp, 32)
    y3 = jnp.maximum(y3 * s3_ref[...] + sh3_ref[...], 0.0)

    # ---- fc: flatten order handled host-side via the weight permutation ----
    lane = jax.lax.broadcasted_iota(jnp.int32, (1, OUT_PAD), 1)
    out = jnp.zeros((1, OUT_PAD), f32)
    for j in range(NUM_CLASSES):
        sj = jnp.sum(y3 * wf_ref[j])       # full (Hp*Wp, 32) contraction
        out = jnp.where(lane == j, sj, out)
    o_ref[0] = out + bf_ref[...]           # lane-dense (1, 128) store


# ------------------------------ host wrappers -------------------------------

def fold_bn(bias, gamma, beta, mean, var, eps=BN_EPS):
    inv = gamma / jnp.sqrt(var + eps)
    scale = inv
    shift = inv * (bias - mean) + beta
    return scale.reshape(1, -1), shift.reshape(1, -1)


def pack_params(p):
    """One-time host-side re-layout of the weights for the fused kernel."""
    s1, sh1 = fold_bn(p["b1"], p["g1"], p["be1"], p["m1"], p["v1"])
    s3, sh3 = fold_bn(p["b3"], p["g3"], p["be3"], p["m3"], p["v3"])
    w1 = p["w1"].reshape(9 * 3, 12)        # HWIO -> (kh*kw*Cin, Cout)
    w2 = p["w2"].reshape(9 * 12, 20)
    w3 = p["w3"].reshape(9 * 20, 32)
    b2 = p["b2"].reshape(1, -1)

    # fc: PyTorch flattens NCHW (index c*Hp*Wp + pixel); kernel activations are
    # (pixel, channel), so regroup rows to [class, pixel, channel].
    c3 = 32
    hw = p["wf"].shape[0] // c3
    wf = jnp.transpose(p["wf"].reshape(c3, hw, NUM_CLASSES), (2, 1, 0))
    bf = jnp.zeros((1, OUT_PAD), jnp.float32).at[0, :NUM_CLASSES].set(p["bf"])
    return dict(w1=w1, s1=s1, sh1=sh1, w2=w2, b2=b2,
                w3=w3, s3=s3, sh3=sh3, wf=wf, bf=bf)


def forward(x_nchw, pk):
    N, Cin, H, W = x_nchw.shape
    Hp, Wp = H // 2, W // 2
    C1, C2 = pk["w1"].shape[1], pk["w2"].shape[1]
    x = jnp.transpose(x_nchw, (0, 2, 3, 1))            # NCHW -> NHWC (input only)

    out_padded = pl.pallas_call(
        _fused_pneumonia_kernel,
        out_shape=jax.ShapeDtypeStruct((N, 1, OUT_PAD), jnp.float32),
        grid=(N,),
        in_specs=[
            pl.BlockSpec((1, H, W, Cin), lambda n: (n, 0, 0, 0)),
            pl.BlockSpec(pk["w1"].shape, lambda n: (0, 0)),
            pl.BlockSpec(pk["s1"].shape, lambda n: (0, 0)),
            pl.BlockSpec(pk["sh1"].shape, lambda n: (0, 0)),
            pl.BlockSpec(pk["w2"].shape, lambda n: (0, 0)),
            pl.BlockSpec(pk["b2"].shape, lambda n: (0, 0)),
            pl.BlockSpec(pk["w3"].shape, lambda n: (0, 0)),
            pl.BlockSpec(pk["s3"].shape, lambda n: (0, 0)),
            pl.BlockSpec(pk["sh3"].shape, lambda n: (0, 0)),
            pl.BlockSpec(pk["wf"].shape, lambda n: (0, 0, 0)),
            pl.BlockSpec(pk["bf"].shape, lambda n: (0, 0)),
        ],
        out_specs=pl.BlockSpec((1, 1, OUT_PAD), lambda n: (n, 0, 0)),
        scratch_shapes=[
            pltpu.VMEM((H + 2, W + 2, Cin), jnp.float32),
            pltpu.VMEM((H * W, 9 * Cin), jnp.float32),
            pltpu.VMEM((Hp + 2, Wp + 2, C1), jnp.float32),
            pltpu.VMEM((Hp * Wp, 9 * C1), jnp.float32),
            pltpu.VMEM((Hp + 2, Wp + 2, C2), jnp.float32),
            pltpu.VMEM((Hp * Wp, 9 * C2), jnp.float32),
        ],
        compiler_params=pltpu.CompilerParams(
            dimension_semantics=("parallel",)),   # one image per TC on v7x
    )(x, pk["w1"], pk["s1"], pk["sh1"], pk["w2"], pk["b2"],
      pk["w3"], pk["s3"], pk["sh3"], pk["wf"], pk["bf"])

    return out_padded[:, 0, :NUM_CLASSES]


# ------------------------------ params & reference --------------------------

def init_params(key):
    ks = jax.random.split(key, 8)
    p = {}
    # conv weights stored as (kh, kw, Cin, Cout) = HWIO
    p["w1"] = 0.05 * jax.random.normal(ks[0], (3, 3, 3, 12), jnp.float32)
    p["b1"] = 0.05 * jax.random.normal(ks[1], (12,), jnp.float32)
    p["g1"], p["be1"] = jnp.ones((12,), jnp.float32), jnp.zeros((12,), jnp.float32)
    p["m1"], p["v1"] = jnp.zeros((12,), jnp.float32), jnp.ones((12,), jnp.float32)

    p["w2"] = 0.05 * jax.random.normal(ks[2], (3, 3, 12, 20), jnp.float32)
    p["b2"] = 0.05 * jax.random.normal(ks[3], (20,), jnp.float32)

    p["w3"] = 0.05 * jax.random.normal(ks[4], (3, 3, 20, 32), jnp.float32)
    p["b3"] = 0.05 * jax.random.normal(ks[5], (32,), jnp.float32)
    p["g3"], p["be3"] = jnp.ones((32,), jnp.float32), jnp.zeros((32,), jnp.float32)
    p["m3"], p["v3"] = jnp.zeros((32,), jnp.float32), jnp.ones((32,), jnp.float32)

    # fc: in_features = 32 * (H/2) * (W/2) for the small test shape
    F = 32 * 8 * 8
    p["wf"] = 0.02 * jax.random.normal(ks[6], (F, 2), jnp.float32)
    p["bf"] = 0.02 * jax.random.normal(ks[7], (2,), jnp.float32)
    return p


# pure-JAX reference (mirrors the PyTorch forward, eval-mode BN)
def reference(x_nchw, p):
    def conv(x, w, b):
        y = jax.lax.conv_general_dilated(
            x, w, (1, 1), "SAME",
            dimension_numbers=("NCHW", "HWIO", "NCHW"))
        return y + b[None, :, None, None]

    def bn(x, g, be, m, v):
        return ((x - m[None, :, None, None])
                / jnp.sqrt(v + BN_EPS)[None, :, None, None]
                * g[None, :, None, None] + be[None, :, None, None])

    y = jax.nn.relu(bn(conv(x_nchw, p["w1"], p["b1"]),
                       p["g1"], p["be1"], p["m1"], p["v1"]))
    y = jax.lax.reduce_window(y, -jnp.inf, jax.lax.max,
                              (1, 1, 2, 2), (1, 1, 2, 2), "VALID")
    y = jax.nn.relu(conv(y, p["w2"], p["b2"]))
    y = jax.nn.relu(bn(conv(y, p["w3"], p["b3"]),
                       p["g3"], p["be3"], p["m3"], p["v3"]))
    y = y.reshape(y.shape[0], -1)
    return y @ p["wf"] + p["bf"]


if __name__ == "__main__":
    key = jax.random.PRNGKey(0)
    kx, kp = jax.random.split(key)
    # small shape consistent with the module: N=2, C=3, H=W=16 (fc = 32*8*8)
    x = jax.random.normal(kx, (2, 3, 16, 16), jnp.float32)
    params = init_params(kp)
    packed = pack_params(params)   # one-time host-side weight re-layout

    out = forward(x, packed)
    out = jax.block_until_ready(out)

    ref = reference(x, params)
    assert out.shape == (2, 2), out.shape
    assert jnp.allclose(out, ref, rtol=1e-3, atol=1e-3), (
        f"mismatch: max abs diff {jnp.max(jnp.abs(out - ref))}")
    print("KERNEL_OK")
</pallas_src>

<mosaic_0001>
module attributes {stable_mosaic.version = 11 : i64} {
  func.func @_fused_pneumonia_kernel(%arg0: i32, %arg1: memref<1x16x16x3xf32, #tpu.memory_space<vmem>>, %arg2: memref<27x12xf32, #tpu.memory_space<vmem>>, %arg3: memref<1x12xf32, #tpu.memory_space<vmem>>, %arg4: memref<1x12xf32, #tpu.memory_space<vmem>>, %arg5: memref<108x20xf32, #tpu.memory_space<vmem>>, %arg6: memref<1x20xf32, #tpu.memory_space<vmem>>, %arg7: memref<180x32xf32, #tpu.memory_space<vmem>>, %arg8: memref<1x32xf32, #tpu.memory_space<vmem>>, %arg9: memref<1x32xf32, #tpu.memory_space<vmem>>, %arg10: memref<2x64x32xf32, #tpu.memory_space<vmem>>, %arg11: memref<1x128xf32, #tpu.memory_space<vmem>>, %arg12: memref<1x1x128xf32, #tpu.memory_space<vmem>>, %arg13: memref<18x18x3xf32, #tpu.memory_space<vmem>>, %arg14: memref<256x27xf32, #tpu.memory_space<vmem>>, %arg15: memref<10x10x12xf32, #tpu.memory_space<vmem>>, %arg16: memref<64x108xf32, #tpu.memory_space<vmem>>, %arg17: memref<10x10x20xf32, #tpu.memory_space<vmem>>, %arg18: memref<64x180xf32, #tpu.memory_space<vmem>>) attributes {dimension_semantics = [#tpu.dimension_semantics<parallel>], iteration_bounds = array<i64: 2>, scalar_prefetch = 0 : i64, scratch_operands = 6 : i64, tpu.core_type = #tpu.core_type<tc>, window_params = [{transform_indices = @transform_0, window_bounds = array<i64: 1, 16, 16, 3>}, {pipeline_mode = #tpu.pipeline_mode<synchronous>, transform_indices = @transform_1, window_bounds = array<i64: 27, 12>}, {pipeline_mode = #tpu.pipeline_mode<synchronous>, transform_indices = @transform_2, window_bounds = array<i64: 1, 12>}, {pipeline_mode = #tpu.pipeline_mode<synchronous>, transform_indices = @transform_3, window_bounds = array<i64: 1, 12>}, {pipeline_mode = #tpu.pipeline_mode<synchronous>, transform_indices = @transform_4, window_bounds = array<i64: 108, 20>}, {pipeline_mode = #tpu.pipeline_mode<synchronous>, transform_indices = @transform_5, window_bounds = array<i64: 1, 20>}, {pipeline_mode = #tpu.pipeline_mode<synchronous>, transform_indices = @transform_6, window_bounds = array<i64: 180, 32>}, {pipeline_mode = #tpu.pipeline_mode<synchronous>, transform_indices = @transform_7, window_bounds = array<i64: 1, 32>}, {pipeline_mode = #tpu.pipeline_mode<synchronous>, transform_indices = @transform_8, window_bounds = array<i64: 1, 32>}, {pipeline_mode = #tpu.pipeline_mode<synchronous>, transform_indices = @transform_9, window_bounds = array<i64: 2, 64, 32>}, {pipeline_mode = #tpu.pipeline_mode<synchronous>, transform_indices = @transform_10, window_bounds = array<i64: 1, 128>}, {transform_indices = @transform_11, window_bounds = array<i64: 1, 1, 128>}]} {
    %cst = arith.constant 0.000000e+00 : f32
    %0 = vector.broadcast %cst : f32 to vector<18x18x3xf32>
    %c0 = arith.constant 0 : index
    %c0_0 = arith.constant 0 : index
    %c0_1 = arith.constant 0 : index
    %1 = vector.load %arg13[%c0, %c0_0, %c0_1] : memref<18x18x3xf32, #tpu.memory_space<vmem>>, vector<18x18x3xf32>
    tpu.vector_store %arg13[%c0, %c0_0, %c0_1], %0 {strides = array<i32>} : memref<18x18x3xf32, #tpu.memory_space<vmem>>, vector<18x18x3xf32>,
    %c0_2 = arith.constant 0 : index
    %c0_3 = arith.constant 0 : index
    %c0_4 = arith.constant 0 : index
    %c0_5 = arith.constant 0 : index
    %2 = vector.load %arg1[%c0_2, %c0_3, %c0_4, %c0_5] : memref<1x16x16x3xf32, #tpu.memory_space<vmem>>, vector<1x16x16x3xf32>
    %3 = vector.shape_cast %2 : vector<1x16x16x3xf32> to vector<16x16x3xf32>
    %c1 = arith.constant 1 : index
    %c1_6 = arith.constant 1 : index
    %c0_7 = arith.constant 0 : index
    %4 = vector.load %arg13[%c1, %c1_6, %c0_7] : memref<18x18x3xf32, #tpu.memory_space<vmem>>, vector<16x16x3xf32>
    tpu.vector_store %arg13[%c1, %c1_6, %c0_7], %3 {strides = array<i32>} : memref<18x18x3xf32, #tpu.memory_space<vmem>>, vector<16x16x3xf32>,
    %c0_8 = arith.constant 0 : index
    %c0_9 = arith.constant 0 : index
    %c0_10 = arith.constant 0 : index
    %5 = vector.load %arg13[%c0_8, %c0_9, %c0_10] : memref<18x18x3xf32, #tpu.memory_space<vmem>>, vector<18x18x3xf32>
    %6 = vector.extract_strided_slice %5 {offsets = [0, 0, 0], sizes = [16, 16, 3], strides = [1, 1, 1]} : vector<18x18x3xf32> to vector<16x16x3xf32>
    %7 = vector.shape_cast %6 : vector<16x16x3xf32> to vector<256x3xf32>
    %c0_11 = arith.constant 0 : index
    %c0_12 = arith.constant 0 : index
    %8 = vector.load %arg14[%c0_11, %c0_12] : memref<256x27xf32, #tpu.memory_space<vmem>>, vector<256x3xf32>
    tpu.vector_store %arg14[%c0_11, %c0_12], %7 {strides = array<i32>} : memref<256x27xf32, #tpu.memory_space<vmem>>, vector<256x3xf32>,
    %9 = vector.extract_strided_slice %5 {offsets = [0, 1, 0], sizes = [16, 16, 3], strides = [1, 1, 1]} : vector<18x18x3xf32> to vector<16x16x3xf32>
    %10 = vector.shape_cast %9 : vector<16x16x3xf32> to vector<256x3xf32>
    %c0_13 = arith.constant 0 : index
    %c3 = arith.constant 3 : index
    %11 = vector.load %arg14[%c0_13, %c3] : memref<256x27xf32, #tpu.memory_space<vmem>>, vector<256x3xf32>
    tpu.vector_store %arg14[%c0_13, %c3], %10 {strides = array<i32>} : memref<256x27xf32, #tpu.memory_space<vmem>>, vector<256x3xf32>,
    %12 = vector.extract_strided_slice %5 {offsets = [0, 2, 0], sizes = [16, 16, 3], strides = [1, 1, 1]} : vector<18x18x3xf32> to vector<16x16x3xf32>
    %13 = vector.shape_cast %12 : vector<16x16x3xf32> to vector<256x3xf32>
    %c0_14 = arith.constant 0 : index
    %c6 = arith.constant 6 : index
    %14 = vector.load %arg14[%c0_14, %c6] : memref<256x27xf32, #tpu.memory_space<vmem>>, vector<256x3xf32>
    tpu.vector_store %arg14[%c0_14, %c6], %13 {strides = array<i32>} : memref<256x27xf32, #tpu.memory_space<vmem>>, vector<256x3xf32>,
    %15 = vector.extract_strided_slice %5 {offsets = [1, 0, 0], sizes = [16, 16, 3], strides = [1, 1, 1]} : vector<18x18x3xf32> to vector<16x16x3xf32>
    %16 = vector.shape_cast %15 : vector<16x16x3xf32> to vector<256x3xf32>
    %c0_15 = arith.constant 0 : index
    %c9 = arith.constant 9 : index
    %17 = vector.load %arg14[%c0_15, %c9] : memref<256x27xf32, #tpu.memory_space<vmem>>, vector<256x3xf32>
    tpu.vector_store %arg14[%c0_15, %c9], %16 {strides = array<i32>} : memref<256x27xf32, #tpu.memory_space<vmem>>, vector<256x3xf32>,
    %18 = vector.extract_strided_slice %5 {offsets = [1, 1, 0], sizes = [16, 16, 3], strides = [1, 1, 1]} : vector<18x18x3xf32> to vector<16x16x3xf32>
    %19 = vector.shape_cast %18 : vector<16x16x3xf32> to vector<256x3xf32>
    %c0_16 = arith.constant 0 : index
    %c12 = arith.constant 12 : index
    %20 = vector.load %arg14[%c0_16, %c12] : memref<256x27xf32, #tpu.memory_space<vmem>>, vector<256x3xf32>
    tpu.vector_store %arg14[%c0_16, %c12], %19 {strides = array<i32>} : memref<256x27xf32, #tpu.memory_space<vmem>>, vector<256x3xf32>,
    %21 = vector.extract_strided_slice %5 {offsets = [1, 2, 0], sizes = [16, 16, 3], strides = [1, 1, 1]} : vector<18x18x3xf32> to vector<16x16x3xf32>
    %22 = vector.shape_cast %21 : vector<16x16x3xf32> to vector<256x3xf32>
    %c0_17 = arith.constant 0 : index
    %c15 = arith.constant 15 : index
    %23 = vector.load %arg14[%c0_17, %c15] : memref<256x27xf32, #tpu.memory_space<vmem>>, vector<256x3xf32>
    tpu.vector_store %arg14[%c0_17, %c15], %22 {strides = array<i32>} : memref<256x27xf32, #tpu.memory_space<vmem>>, vector<256x3xf32>,
    %24 = vector.extract_strided_slice %5 {offsets = [2, 0, 0], sizes = [16, 16, 3], strides = [1, 1, 1]} : vector<18x18x3xf32> to vector<16x16x3xf32>
    %25 = vector.shape_cast %24 : vector<16x16x3xf32> to vector<256x3xf32>
    %c0_18 = arith.constant 0 : index
    %c18 = arith.constant 18 : index
    %26 = vector.load %arg14[%c0_18, %c18] : memref<256x27xf32, #tpu.memory_space<vmem>>, vector<256x3xf32>
    tpu.vector_store %arg14[%c0_18, %c18], %25 {strides = array<i32>} : memref<256x27xf32, #tpu.memory_space<vmem>>, vector<256x3xf32>,
    %27 = vector.extract_strided_slice %5 {offsets = [2, 1, 0], sizes = [16, 16, 3], strides = [1, 1, 1]} : vector<18x18x3xf32> to vector<16x16x3xf32>
    %28 = vector.shape_cast %27 : vector<16x16x3xf32> to vector<256x3xf32>
    %c0_19 = arith.constant 0 : index
    %c21 = arith.constant 21 : index
    %29 = vector.load %arg14[%c0_19, %c21] : memref<256x27xf32, #tpu.memory_space<vmem>>, vector<256x3xf32>
    tpu.vector_store %arg14[%c0_19, %c21], %28 {strides = array<i32>} : memref<256x27xf32, #tpu.memory_space<vmem>>, vector<256x3xf32>,
    %30 = vector.extract_strided_slice %5 {offsets = [2, 2, 0], sizes = [16, 16, 3], strides = [1, 1, 1]} : vector<18x18x3xf32> to vector<16x16x3xf32>
    %31 = vector.shape_cast %30 : vector<16x16x3xf32> to vector<256x3xf32>
    %c0_20 = arith.constant 0 : index
    %c24 = arith.constant 24 : index
    %32 = vector.load %arg14[%c0_20, %c24] : memref<256x27xf32, #tpu.memory_space<vmem>>, vector<256x3xf32>
    tpu.vector_store %arg14[%c0_20, %c24], %31 {strides = array<i32>} : memref<256x27xf32, #tpu.memory_space<vmem>>, vector<256x3xf32>,
    %c0_21 = arith.constant 0 : index
    %c0_22 = arith.constant 0 : index
    %33 = vector.load %arg14[%c0_21, %c0_22] : memref<256x27xf32, #tpu.memory_space<vmem>>, vector<256x27xf32>
    %c0_23 = arith.constant 0 : index
    %c0_24 = arith.constant 0 : index
    %34 = vector.load %arg2[%c0_23, %c0_24] : memref<27x12xf32, #tpu.memory_space<vmem>>, vector<27x12xf32>
    %cst_25 = arith.constant dense<0.000000e+00> : vector<256x12xf32>
    %35 = tpu.matmul %33, %34, %cst_25 {dimension_numbers = #tpu.dot_dimension_numbers<[1], [0], [0], [1], [0, 0, 1, 1], [], []>} : vector<256x27xf32>, vector<27x12xf32>, vector<256x12xf32> -> vector<256x12xf32>
    %c0_26 = arith.constant 0 : index
    %c0_27 = arith.constant 0 : index
    %36 = vector.load %arg3[%c0_26, %c0_27] : memref<1x12xf32, #tpu.memory_space<vmem>>, vector<1x12xf32>
    %37 = vector.broadcast %36 : vector<1x12xf32> to vector<256x12xf32>
    %38 = arith.mulf %35, %37 : vector<256x12xf32>
    %c0_28 = arith.constant 0 : index
    %c0_29 = arith.constant 0 : index
    %39 = vector.load %arg4[%c0_28, %c0_29] : memref<1x12xf32, #tpu.memory_space<vmem>>, vector<1x12xf32>
    %40 = vector.broadcast %39 : vector<1x12xf32> to vector<256x12xf32>
    %41 = arith.addf %38, %40 : vector<256x12xf32>
    %cst_30 = arith.constant 0.000000e+00 : f32
    %42 = vector.broadcast %cst_30 : f32 to vector<256x12xf32>
    %43 = arith.maximumf %41, %42 : vector<256x12xf32>
    %44 = vector.shape_cast %43 : vector<256x12xf32> to vector<16x16x12xf32>
    %45 = vector.shape_cast %44 : vector<16x16x12xf32> to vector<16x8x2x12xf32>
    %cst_31 = arith.constant dense<0xFF800000> : vector<16x8x12xf32>
    %46 = vector.multi_reduction <maximumf>, %45, %cst_31 [2] : vector<16x8x2x12xf32> to vector<16x8x12xf32>
    %47 = vector.shape_cast %46 : vector<16x8x12xf32> to vector<8x2x8x12xf32>
    %cst_32 = arith.constant dense<0xFF800000> : vector<8x8x12xf32>
    %48 = vector.multi_reduction <maximumf>, %47, %cst_32 [1] : vector<8x2x8x12xf32> to vector<8x8x12xf32>
    %cst_33 = arith.constant 0.000000e+00 : f32
    %49 = vector.broadcast %cst_33 : f32 to vector<10x10x12xf32>
    %c0_34 = arith.constant 0 : index
    %c0_35 = arith.constant 0 : index
    %c0_36 = arith.constant 0 : index
    %50 = vector.load %arg15[%c0_34, %c0_35, %c0_36] : memref<10x10x12xf32, #tpu.memory_space<vmem>>, vector<10x10x12xf32>
    tpu.vector_store %arg15[%c0_34, %c0_35, %c0_36], %49 {strides = array<i32>} : memref<10x10x12xf32, #tpu.memory_space<vmem>>, vector<10x10x12xf32>,
    %c1_37 = arith.constant 1 : index
    %c1_38 = arith.constant 1 : index
    %c0_39 = arith.constant 0 : index
    %51 = vector.load %arg15[%c1_37, %c1_38, %c0_39] : memref<10x10x12xf32, #tpu.memory_space<vmem>>, vector<8x8x12xf32>
    tpu.vector_store %arg15[%c1_37, %c1_38, %c0_39], %48 {strides = array<i32>} : memref<10x10x12xf32, #tpu.memory_space<vmem>>, vector<8x8x12xf32>,
    %c0_40 = arith.constant 0 : index
    %c0_41 = arith.constant 0 : index
    %c0_42 = arith.constant 0 : index
    %52 = vector.load %arg15[%c0_40, %c0_41, %c0_42] : memref<10x10x12xf32, #tpu.memory_space<vmem>>, vector<10x10x12xf32>
    %53 = vector.extract_strided_slice %52 {offsets = [0, 0, 0], sizes = [8, 8, 12], strides = [1, 1, 1]} : vector<10x10x12xf32> to vector<8x8x12xf32>
    %54 = vector.shape_cast %53 : vector<8x8x12xf32> to vector<64x12xf32>
    %c0_43 = arith.constant 0 : index
    %c0_44 = arith.constant 0 : index
    %55 = vector.load %arg16[%c0_43, %c0_44] : memref<64x108xf32, #tpu.memory_space<vmem>>, vector<64x12xf32>
    tpu.vector_store %arg16[%c0_43, %c0_44], %54 {strides = array<i32>} : memref<64x108xf32, #tpu.memory_space<vmem>>, vector<64x12xf32>,
    %56 = vector.extract_strided_slice %52 {offsets = [0, 1, 0], sizes = [8, 8, 12], strides = [1, 1, 1]} : vector<10x10x12xf32> to vector<8x8x12xf32>
    %57 = vector.shape_cast %56 : vector<8x8x12xf32> to vector<64x12xf32>
    %c0_45 = arith.constant 0 : index
    %c12_46 = arith.constant 12 : index
    %58 = vector.load %arg16[%c0_45, %c12_46] : memref<64x108xf32, #tpu.memory_space<vmem>>, vector<64x12xf32>
    tpu.vector_store %arg16[%c0_45, %c12_46], %57 {strides = array<i32>} : memref<64x108xf32, #tpu.memory_space<vmem>>, vector<64x12xf32>,
    %59 = vector.extract_strided_slice %52 {offsets = [0, 2, 0], sizes = [8, 8, 12], strides = [1, 1, 1]} : vector<10x10x12xf32> to vector<8x8x12xf32>
    %60 = vector.shape_cast %59 : vector<8x8x12xf32> to vector<64x12xf32>
    %c0_47 = arith.constant 0 : index
    %c24_48 = arith.constant 24 : index
    %61 = vector.load %arg16[%c0_47, %c24_48] : memref<64x108xf32, #tpu.memory_space<vmem>>, vector<64x12xf32>
    tpu.vector_store %arg16[%c0_47, %c24_48], %60 {strides = array<i32>} : memref<64x108xf32, #tpu.memory_space<vmem>>, vector<64x12xf32>,
    %62 = vector.extract_strided_slice %52 {offsets = [1, 0, 0], sizes = [8, 8, 12], strides = [1, 1, 1]} : vector<10x10x12xf32> to vector<8x8x12xf32>
    %63 = vector.shape_cast %62 : vector<8x8x12xf32> to vector<64x12xf32>
    %c0_49 = arith.constant 0 : index
    %c36 = arith.constant 36 : index
    %64 = vector.load %arg16[%c0_49, %c36] : memref<64x108xf32, #tpu.memory_space<vmem>>, vector<64x12xf32>
    tpu.vector_store %arg16[%c0_49, %c36], %63 {strides = array<i32>} : memref<64x108xf32, #tpu.memory_space<vmem>>, vector<64x12xf32>,
    %65 = vector.extract_strided_slice %52 {offsets = [1, 1, 0], sizes = [8, 8, 12], strides = [1, 1, 1]} : vector<10x10x12xf32> to vector<8x8x12xf32>
    %66 = vector.shape_cast %65 : vector<8x8x12xf32> to vector<64x12xf32>
    %c0_50 = arith.constant 0 : index
    %c48 = arith.constant 48 : index
    %67 = vector.load %arg16[%c0_50, %c48] : memref<64x108xf32, #tpu.memory_space<vmem>>, vector<64x12xf32>
    tpu.vector_store %arg16[%c0_50, %c48], %66 {strides = array<i32>} : memref<64x108xf32, #tpu.memory_space<vmem>>, vector<64x12xf32>,
    %68 = vector.extract_strided_slice %52 {offsets = [1, 2, 0], sizes = [8, 8, 12], strides = [1, 1, 1]} : vector<10x10x12xf32> to vector<8x8x12xf32>
    %69 = vector.shape_cast %68 : vector<8x8x12xf32> to vector<64x12xf32>
    %c0_51 = arith.constant 0 : index
    %c60 = arith.constant 60 : index
    %70 = vector.load %arg16[%c0_51, %c60] : memref<64x108xf32, #tpu.memory_space<vmem>>, vector<64x12xf32>
    tpu.vector_store %arg16[%c0_51, %c60], %69 {strides = array<i32>} : memref<64x108xf32, #tpu.memory_space<vmem>>, vector<64x12xf32>,
    %71 = vector.extract_strided_slice %52 {offsets = [2, 0, 0], sizes = [8, 8, 12], strides = [1, 1, 1]} : vector<10x10x12xf32> to vector<8x8x12xf32>
    %72 = vector.shape_cast %71 : vector<8x8x12xf32> to vector<64x12xf32>
    %c0_52 = arith.constant 0 : index
    %c72 = arith.constant 72 : index
    %73 = vector.load %arg16[%c0_52, %c72] : memref<64x108xf32, #tpu.memory_space<vmem>>, vector<64x12xf32>
    tpu.vector_store %arg16[%c0_52, %c72], %72 {strides = array<i32>} : memref<64x108xf32, #tpu.memory_space<vmem>>, vector<64x12xf32>,
    %74 = vector.extract_strided_slice %52 {offsets = [2, 1, 0], sizes = [8, 8, 12], strides = [1, 1, 1]} : vector<10x10x12xf32> to vector<8x8x12xf32>
    %75 = vector.shape_cast %74 : vector<8x8x12xf32> to vector<64x12xf32>
    %c0_53 = arith.constant 0 : index
    %c84 = arith.constant 84 : index
    %76 = vector.load %arg16[%c0_53, %c84] : memref<64x108xf32, #tpu.memory_space<vmem>>, vector<64x12xf32>
    tpu.vector_store %arg16[%c0_53, %c84], %75 {strides = array<i32>} : memref<64x108xf32, #tpu.memory_space<vmem>>, vector<64x12xf32>,
    %77 = vector.extract_strided_slice %52 {offsets = [2, 2, 0], sizes = [8, 8, 12], strides = [1, 1, 1]} : vector<10x10x12xf32> to vector<8x8x12xf32>
    %78 = vector.shape_cast %77 : vector<8x8x12xf32> to vector<64x12xf32>
    %c0_54 = arith.constant 0 : index
    %c96 = arith.constant 96 : index
    %79 = vector.load %arg16[%c0_54, %c96] : memref<64x108xf32, #tpu.memory_space<vmem>>, vector<64x12xf32>
    tpu.vector_store %arg16[%c0_54, %c96], %78 {strides = array<i32>} : memref<64x108xf32, #tpu.memory_space<vmem>>, vector<64x12xf32>,
    %c0_55 = arith.constant 0 : index
    %c0_56 = arith.constant 0 : index
    %80 = vector.load %arg16[%c0_55, %c0_56] : memref<64x108xf32, #tpu.memory_space<vmem>>, vector<64x108xf32>
    %c0_57 = arith.constant 0 : index
    %c0_58 = arith.constant 0 : index
    %81 = vector.load %arg5[%c0_57, %c0_58] : memref<108x20xf32, #tpu.memory_space<vmem>>, vector<108x20xf32>
    %cst_59 = arith.constant dense<0.000000e+00> : vector<64x20xf32>
    %82 = tpu.matmul %80, %81, %cst_59 {dimension_numbers = #tpu.dot_dimension_numbers<[1], [0], [0], [1], [0, 0, 1, 1], [], []>} : vector<64x108xf32>, vector<108x20xf32>, vector<64x20xf32> -> vector<64x20xf32>
    %c0_60 = arith.constant 0 : index
    %c0_61 = arith.constant 0 : index
    %83 = vector.load %arg6[%c0_60, %c0_61] : memref<1x20xf32, #tpu.memory_space<vmem>>, vector<1x20xf32>
    %84 = vector.broadcast %83 : vector<1x20xf32> to vector<64x20xf32>
    %85 = arith.addf %82, %84 : vector<64x20xf32>
    %cst_62 = arith.constant 0.000000e+00 : f32
    %86 = vector.broadcast %cst_62 : f32 to vector<64x20xf32>
    %87 = arith.maximumf %85, %86 : vector<64x20xf32>
    %cst_63 = arith.constant 0.000000e+00 : f32
    %88 = vector.broadcast %cst_63 : f32 to vector<10x10x20xf32>
    %c0_64 = arith.constant 0 : index
    %c0_65 = arith.constant 0 : index
    %c0_66 = arith.constant 0 : index
    %89 = vector.load %arg17[%c0_64, %c0_65, %c0_66] : memref<10x10x20xf32, #tpu.memory_space<vmem>>, vector<10x10x20xf32>
    tpu.vector_store %arg17[%c0_64, %c0_65, %c0_66], %88 {strides = array<i32>} : memref<10x10x20xf32, #tpu.memory_space<vmem>>, vector<10x10x20xf32>,
    %90 = vector.shape_cast %87 : vector<64x20xf32> to vector<8x8x20xf32>
    %c1_67 = arith.constant 1 : index
    %c1_68 = arith.constant 1 : index
    %c0_69 = arith.constant 0 : index
    %91 = vector.load %arg17[%c1_67, %c1_68, %c0_69] : memref<10x10x20xf32, #tpu.memory_space<vmem>>, vector<8x8x20xf32>
    tpu.vector_store %arg17[%c1_67, %c1_68, %c0_69], %90 {strides = array<i32>} : memref<10x10x20xf32, #tpu.memory_space<vmem>>, vector<8x8x20xf32>,
    %c0_70 = arith.constant 0 : index
    %c0_71 = arith.constant 0 : index
    %c0_72 = arith.constant 0 : index
    %92 = vector.load %arg17[%c0_70, %c0_71, %c0_72] : memref<10x10x20xf32, #tpu.memory_space<vmem>>, vector<10x10x20xf32>
    %93 = vector.extract_strided_slice %92 {offsets = [0, 0, 0], sizes = [8, 8, 20], strides = [1, 1, 1]} : vector<10x10x20xf32> to vector<8x8x20xf32>
    %94 = vector.shape_cast %93 : vector<8x8x20xf32> to vector<64x20xf32>
    %c0_73 = arith.constant 0 : index
    %c0_74 = arith.constant 0 : index
    %95 = vector.load %arg18[%c0_73, %c0_74] : memref<64x180xf32, #tpu.memory_space<vmem>>, vector<64x20xf32>
    tpu.vector_store %arg18[%c0_73, %c0_74], %94 {strides = array<i32>} : memref<64x180xf32, #tpu.memory_space<vmem>>, vector<64x20xf32>,
    %96 = vector.extract_strided_slice %92 {offsets = [0, 1, 0], sizes = [8, 8, 20], strides = [1, 1, 1]} : vector<10x10x20xf32> to vector<8x8x20xf32>
    %97 = vector.shape_cast %96 : vector<8x8x20xf32> to vector<64x20xf32>
    %c0_75 = arith.constant 0 : index
    %c20 = arith.constant 20 : index
    %98 = vector.load %arg18[%c0_75, %c20] : memref<64x180xf32, #tpu.memory_space<vmem>>, vector<64x20xf32>
    tpu.vector_store %arg18[%c0_75, %c20], %97 {strides = array<i32>} : memref<64x180xf32, #tpu.memory_space<vmem>>, vector<64x20xf32>,
    %99 = vector.extract_strided_slice %92 {offsets = [0, 2, 0], sizes = [8, 8, 20], strides = [1, 1, 1]} : vector<10x10x20xf32> to vector<8x8x20xf32>
    %100 = vector.shape_cast %99 : vector<8x8x20xf32> to vector<64x20xf32>
    %c0_76 = arith.constant 0 : index
    %c40 = arith.constant 40 : index
    %101 = vector.load %arg18[%c0_76, %c40] : memref<64x180xf32, #tpu.memory_space<vmem>>, vector<64x20xf32>
    tpu.vector_store %arg18[%c0_76, %c40], %100 {strides = array<i32>} : memref<64x180xf32, #tpu.memory_space<vmem>>, vector<64x20xf32>,
    %102 = vector.extract_strided_slice %92 {offsets = [1, 0, 0], sizes = [8, 8, 20], strides = [1, 1, 1]} : vector<10x10x20xf32> to vector<8x8x20xf32>
    %103 = vector.shape_cast %102 : vector<8x8x20xf32> to vector<64x20xf32>
    %c0_77 = arith.constant 0 : index
    %c60_78 = arith.constant 60 : index
    %104 = vector.load %arg18[%c0_77, %c60_78] : memref<64x180xf32, #tpu.memory_space<vmem>>, vector<64x20xf32>
    tpu.vector_store %arg18[%c0_77, %c60_78], %103 {strides = array<i32>} : memref<64x180xf32, #tpu.memory_space<vmem>>, vector<64x20xf32>,
    %105 = vector.extract_strided_slice %92 {offsets = [1, 1, 0], sizes = [8, 8, 20], strides = [1, 1, 1]} : vector<10x10x20xf32> to vector<8x8x20xf32>
    %106 = vector.shape_cast %105 : vector<8x8x20xf32> to vector<64x20xf32>
    %c0_79 = arith.constant 0 : index
    %c80 = arith.constant 80 : index
    %107 = vector.load %arg18[%c0_79, %c80] : memref<64x180xf32, #tpu.memory_space<vmem>>, vector<64x20xf32>
    tpu.vector_store %arg18[%c0_79, %c80], %106 {strides = array<i32>} : memref<64x180xf32, #tpu.memory_space<vmem>>, vector<64x20xf32>,
    %108 = vector.extract_strided_slice %92 {offsets = [1, 2, 0], sizes = [8, 8, 20], strides = [1, 1, 1]} : vector<10x10x20xf32> to vector<8x8x20xf32>
    %109 = vector.shape_cast %108 : vector<8x8x20xf32> to vector<64x20xf32>
    %c0_80 = arith.constant 0 : index
    %c100 = arith.constant 100 : index
    %110 = vector.load %arg18[%c0_80, %c100] : memref<64x180xf32, #tpu.memory_space<vmem>>, vector<64x20xf32>
    tpu.vector_store %arg18[%c0_80, %c100], %109 {strides = array<i32>} : memref<64x180xf32, #tpu.memory_space<vmem>>, vector<64x20xf32>,
    %111 = vector.extract_strided_slice %92 {offsets = [2, 0, 0], sizes = [8, 8, 20], strides = [1, 1, 1]} : vector<10x10x20xf32> to vector<8x8x20xf32>
    %112 = vector.shape_cast %111 : vector<8x8x20xf32> to vector<64x20xf32>
    %c0_81 = arith.constant 0 : index
    %c120 = arith.constant 120 : index
    %113 = vector.load %arg18[%c0_81, %c120] : memref<64x180xf32, #tpu.memory_space<vmem>>, vector<64x20xf32>
    tpu.vector_store %arg18[%c0_81, %c120], %112 {strides = array<i32>} : memref<64x180xf32, #tpu.memory_space<vmem>>, vector<64x20xf32>,
    %114 = vector.extract_strided_slice %92 {offsets = [2, 1, 0], sizes = [8, 8, 20], strides = [1, 1, 1]} : vector<10x10x20xf32> to vector<8x8x20xf32>
    %115 = vector.shape_cast %114 : vector<8x8x20xf32> to vector<64x20xf32>
    %c0_82 = arith.constant 0 : index
    %c140 = arith.constant 140 : index
    %116 = vector.load %arg18[%c0_82, %c140] : memref<64x180xf32, #tpu.memory_space<vmem>>, vector<64x20xf32>
    tpu.vector_store %arg18[%c0_82, %c140], %115 {strides = array<i32>} : memref<64x180xf32, #tpu.memory_space<vmem>>, vector<64x20xf32>,
    %117 = vector.extract_strided_slice %92 {offsets = [2, 2, 0], sizes = [8, 8, 20], strides = [1, 1, 1]} : vector<10x10x20xf32> to vector<8x8x20xf32>
    %118 = vector.shape_cast %117 : vector<8x8x20xf32> to vector<64x20xf32>
    %c0_83 = arith.constant 0 : index
    %c160 = arith.constant 160 : index
    %119 = vector.load %arg18[%c0_83, %c160] : memref<64x180xf32, #tpu.memory_space<vmem>>, vector<64x20xf32>
    tpu.vector_store %arg18[%c0_83, %c160], %118 {strides = array<i32>} : memref<64x180xf32, #tpu.memory_space<vmem>>, vector<64x20xf32>,
    %c0_84 = arith.constant 0 : index
    %c0_85 = arith.constant 0 : index
    %120 = vector.load %arg18[%c0_84, %c0_85] : memref<64x180xf32, #tpu.memory_space<vmem>>, vector<64x180xf32>
    %c0_86 = arith.constant 0 : index
    %c0_87 = arith.constant 0 : index
    %121 = vector.load %arg7[%c0_86, %c0_87] : memref<180x32xf32, #tpu.memory_space<vmem>>, vector<180x32xf32>
    %cst_88 = arith.constant dense<0.000000e+00> : vector<64x32xf32>
    %122 = tpu.matmul %120, %121, %cst_88 {dimension_numbers = #tpu.dot_dimension_numbers<[1], [0], [0], [1], [0, 0, 1, 1], [], []>} : vector<64x180xf32>, vector<180x32xf32>, vector<64x32xf32> -> vector<64x32xf32>
    %c0_89 = arith.constant 0 : index
    %c0_90 = arith.constant 0 : index
    %123 = vector.load %arg8[%c0_89, %c0_90] : memref<1x32xf32, #tpu.memory_space<vmem>>, vector<1x32xf32>
    %124 = vector.broadcast %123 : vector<1x32xf32> to vector<64x32xf32>
    %125 = arith.mulf %122, %124 : vector<64x32xf32>
    %c0_91 = arith.constant 0 : index
    %c0_92 = arith.constant 0 : index
    %126 = vector.load %arg9[%c0_91, %c0_92] : memref<1x32xf32, #tpu.memory_space<vmem>>, vector<1x32xf32>
    %127 = vector.broadcast %126 : vector<1x32xf32> to vector<64x32xf32>
    %128 = arith.addf %125, %127 : vector<64x32xf32>
    %cst_93 = arith.constant 0.000000e+00 : f32
    %129 = vector.broadcast %cst_93 : f32 to vector<64x32xf32>
    %130 = arith.maximumf %128, %129 : vector<64x32xf32>
    %131 = tpu.iota {dimensions = array<i32: 1>} : vector<1x128xi32>
    %cst_94 = arith.constant 0.000000e+00 : f32
    %132 = vector.broadcast %cst_94 : f32 to vector<1x128xf32>
    %c0_95 = arith.constant 0 : index
    %c0_96 = arith.constant 0 : index
    %c0_97 = arith.constant 0 : index
    %133 = vector.load %arg10[%c0_95, %c0_96, %c0_97] : memref<2x64x32xf32, #tpu.memory_space<vmem>>, vector<1x64x32xf32>
    %134 = vector.shape_cast %133 : vector<1x64x32xf32> to vector<64x32xf32>
    %135 = arith.mulf %130, %134 : vector<64x32xf32>
    %136 = vector.shape_cast %135 : vector<64x32xf32> to vector<1x64x32xf32>
    %cst_98 = arith.constant dense<0.000000e+00> : vector<1xf32>
    %137 = vector.multi_reduction <add>, %136, %cst_98 [1, 2] : vector<1x64x32xf32> to vector<1xf32>
    %138 = vector.shape_cast %137 : vector<1xf32> to vector<1x1x1xf32>
    %139 = vector.extract %138[0, 0, 0] : f32 from vector<1x1x1xf32>
    %c0_i32 = arith.constant 0 : i32
    %140 = vector.broadcast %c0_i32 : i32 to vector<1x128xi32>
    %141 = arith.cmpi eq, %131, %140 : vector<1x128xi32>
    %142 = vector.broadcast %139 : f32 to vector<1x128xf32>
    %143 = arith.select %141, %142, %132 : vector<1x128xi1>, vector<1x128xf32>
    %c1_99 = arith.constant 1 : index
    %c0_100 = arith.constant 0 : index
    %c0_101 = arith.constant 0 : index
    %144 = vector.load %arg10[%c1_99, %c0_100, %c0_101] : memref<2x64x32xf32, #tpu.memory_space<vmem>>, vector<1x64x32xf32>
    %145 = vector.shape_cast %144 : vector<1x64x32xf32> to vector<64x32xf32>
    %146 = arith.mulf %130, %145 : vector<64x32xf32>
    %147 = vector.shape_cast %146 : vector<64x32xf32> to vector<1x64x32xf32>
    %cst_102 = arith.constant dense<0.000000e+00> : vector<1xf32>
    %148 = vector.multi_reduction <add>, %147, %cst_102 [1, 2] : vector<1x64x32xf32> to vector<1xf32>
    %149 = vector.shape_cast %148 : vector<1xf32> to vector<1x1x1xf32>
    %150 = vector.extract %149[0, 0, 0] : f32 from vector<1x1x1xf32>
    %c1_i32 = arith.constant 1 : i32
    %151 = vector.broadcast %c1_i32 : i32 to vector<1x128xi32>
    %152 = arith.cmpi eq, %131, %151 : vector<1x128xi32>
    %153 = vector.broadcast %150 : f32 to vector<1x128xf32>
    %154 = arith.select %152, %153, %143 : vector<1x128xi1>, vector<1x128xf32>
    %c0_103 = arith.constant 0 : index
    %c0_104 = arith.constant 0 : index
    %155 = vector.load %arg11[%c0_103, %c0_104] : memref<1x128xf32, #tpu.memory_space<vmem>>, vector<1x128xf32>
    %156 = arith.addf %154, %155 : vector<1x128xf32>
    %c0_105 = arith.constant 0 : index
    %c0_106 = arith.constant 0 : index
    %c0_107 = arith.constant 0 : index
    %157 = vector.load %arg12[%c0_105, %c0_106, %c0_107] : memref<1x1x128xf32, #tpu.memory_space<vmem>>, vector<1x1x128xf32>
    %158 = vector.shape_cast %157 : vector<1x1x128xf32> to vector<1x128xf32>
    %159 = vector.shape_cast %156 : vector<1x128xf32> to vector<1x1x128xf32>
    tpu.vector_store %arg12[%c0_105, %c0_106, %c0_107], %159 {strides = array<i32>} : memref<1x1x128xf32, #tpu.memory_space<vmem>>, vector<1x1x128xf32>,
    return
  }
  func.func @transform_0(%arg0: i32) -> (i32, i32, i32, i32) {
    %c0_i32 = arith.constant 0 : i32
    %c0_i32_0 = arith.constant 0 : i32
    %c0_i32_1 = arith.constant 0 : i32
    %c0_i32_2 = arith.constant 0 : i32
    return %arg0, %c0_i32, %c0_i32_0, %c0_i32_1 : i32, i32, i32, i32
  }
  func.func @transform_1(%arg0: i32) -> (i32, i32) {
    %c0_i32 = arith.constant 0 : i32
    %c0_i32_0 = arith.constant 0 : i32
    %c0_i32_1 = arith.constant 0 : i32
    return %c0_i32, %c0_i32_0 : i32, i32
  }
  func.func @transform_2(%arg0: i32) -> (i32, i32) {
    %c0_i32 = arith.constant 0 : i32
    %c0_i32_0 = arith.constant 0 : i32
    %c0_i32_1 = arith.constant 0 : i32
    return %c0_i32, %c0_i32_0 : i32, i32
  }
  func.func @transform_3(%arg0: i32) -> (i32, i32) {
    %c0_i32 = arith.constant 0 : i32
    %c0_i32_0 = arith.constant 0 : i32
    %c0_i32_1 = arith.constant 0 : i32
    return %c0_i32, %c0_i32_0 : i32, i32
  }
  func.func @transform_4(%arg0: i32) -> (i32, i32) {
    %c0_i32 = arith.constant 0 : i32
    %c0_i32_0 = arith.constant 0 : i32
    %c0_i32_1 = arith.constant 0 : i32
    return %c0_i32, %c0_i32_0 : i32, i32
  }
  func.func @transform_5(%arg0: i32) -> (i32, i32) {
    %c0_i32 = arith.constant 0 : i32
    %c0_i32_0 = arith.constant 0 : i32
    %c0_i32_1 = arith.constant 0 : i32
    return %c0_i32, %c0_i32_0 : i32, i32
  }
  func.func @transform_6(%arg0: i32) -> (i32, i32) {
    %c0_i32 = arith.constant 0 : i32
    %c0_i32_0 = arith.constant 0 : i32
    %c0_i32_1 = arith.constant 0 : i32
    return %c0_i32, %c0_i32_0 : i32, i32
  }
  func.func @transform_7(%arg0: i32) -> (i32, i32) {
    %c0_i32 = arith.constant 0 : i32
    %c0_i32_0 = arith.constant 0 : i32
    %c0_i32_1 = arith.constant 0 : i32
    return %c0_i32, %c0_i32_0 : i32, i32
  }
  func.func @transform_8(%arg0: i32) -> (i32, i32) {
    %c0_i32 = arith.constant 0 : i32
    %c0_i32_0 = arith.constant 0 : i32
    %c0_i32_1 = arith.constant 0 : i32
    return %c0_i32, %c0_i32_0 : i32, i32
  }
  func.func @transform_9(%arg0: i32) -> (i32, i32, i32) {
    %c0_i32 = arith.constant 0 : i32
    %c0_i32_0 = arith.constant 0 : i32
    %c0_i32_1 = arith.constant 0 : i32
    %c0_i32_2 = arith.constant 0 : i32
    return %c0_i32, %c0_i32_0, %c0_i32_1 : i32, i32, i32
  }
  func.func @transform_10(%arg0: i32) -> (i32, i32) {
    %c0_i32 = arith.constant 0 : i32
    %c0_i32_0 = arith.constant 0 : i32
    %c0_i32_1 = arith.constant 0 : i32
    return %c0_i32, %c0_i32_0 : i32, i32
  }
  func.func @transform_11(%arg0: i32) -> (i32, i32, i32) {
    %c0_i32 = arith.constant 0 : i32
    %c0_i32_0 = arith.constant 0 : i32
    %c0_i32_1 = arith.constant 0 : i32
    return %arg0, %c0_i32, %c0_i32_0 : i32, i32, i32
  }
}

</mosaic_0001>

<llo_original>
// kernel: tpu_custom_call.1
$region0: #{tpu_custom_call.1}
  #allocation0 [shape = 'u32[]', space=smem, size = 0x4, offset = 0x4, fixed_abs, tag = 'smem constant byte address 0x4 - core index']
  #allocation1 [shape = 'u32[144,128]{1,0:T(1,128)}', space=vmem, size = 0x12000, scoped, tag = 'internal scratch']
  #allocation2 [shape = 'f32[18,18,3]{2,1,0:T(8,128)}', space=vmem, size = 0x36000, scoped, tag = 'scratch operand']
  #allocation3 [shape = 'f32[256,27]{1,0:T(8,128)}', space=vmem, size = 0x20000, scoped, tag = 'scratch operand']
  #allocation4 [shape = 'f32[10,10,12]{2,1,0:T(8,128)}', space=vmem, size = 0x14000, scoped, tag = 'scratch operand']
  #allocation5 [shape = 'f32[64,108]{1,0:T(8,128)}', space=vmem, size = 0x8000, scoped, tag = 'scratch operand']
  #allocation6 [shape = 'f32[10,10,20]{2,1,0:T(8,128)}', space=vmem, size = 0x14000, scoped, tag = 'scratch operand']
  #allocation7 [shape = 'f32[64,180]{1,0:T(8,128)}', space=vmem, size = 0x10000, scoped, tag = 'scratch operand']
  %s0 = inlined_call_operand.vmem [shape: f32[2,16,16,3], index: 0, kind: input, shape index: {}]
  %s1 = inlined_call_operand.vmem [shape: f32[27,12], index: 1, kind: input, shape index: {}]
  %s2 = inlined_call_operand.vmem [shape: f32[1,12], index: 2, kind: input, shape index: {}]
  %s3 = inlined_call_operand.vmem [shape: f32[1,12], index: 3, kind: input, shape index: {}]
  %s4 = inlined_call_operand.vmem [shape: f32[108,20], index: 4, kind: input, shape index: {}]
  %s5 = inlined_call_operand.vmem [shape: f32[1,20], index: 5, kind: input, shape index: {}]
  %s6 = inlined_call_operand.vmem [shape: f32[180,32], index: 6, kind: input, shape index: {}]
  %s7 = inlined_call_operand.vmem [shape: f32[1,32], index: 7, kind: input, shape index: {}]
  %s8 = inlined_call_operand.vmem [shape: f32[1,32], index: 8, kind: input, shape index: {}]
  %s9 = inlined_call_operand.vmem [shape: f32[2,64,32], index: 9, kind: input, shape index: {}]
  %s10 = inlined_call_operand.vmem [shape: f32[1,128], index: 10, kind: input, shape index: {}]
  %s11 = inlined_call_operand.hbm [shape: f32[2,1,128], index: 11, kind: output, shape index: {}]
  %s12 = sld [smem:[#allocation0]]
  $region77: #{tpu_custom_call.1} parent=0
    _
  %s14 = ssub.s32 1, %s12
  %s15 = scalar_select 0, %s14, %s12
  $region1: #{tpu_custom_call.1} parent=0
    #allocation8 [shape = 'u8[1024]{0}', space=vmem, size = 0x400, scoped, tag = 'output window, operand 0']
    #allocation9 [shape = 's32[2]{0}', space=sflag, size = 0x8, scoped, tag = 'scoped memory for tpu_custom_call.1']
    %16 = vsyncpa [#allocation9], 0
    %s17 = scalar_lea.sflag [#allocation9], 1
    %18 = vsyncpa %s17, 0
    loop: start=0, step=1, limit=4
    $region2: #{tpu_custom_call.1} parent=1 // loop_pre_header
      _
    $region3: #{tpu_custom_call.1} parent=1 // loop_header
      %s20 = sphi 0, %s24
      %p21 = scmp.ge.s32.totalorder %s20, 4
      %s30 = sphi 0, %s32
      %s33 = sphi 0, %s30
      %s34 = sphi 0, %s33
      %s50 = sphi 0, %s34
      %s54 = sphi 0, %s54
      %s56 = sphi 0, %s54
      %s57 = sphi 0, %s56
      %s71 = sphi 0, %s57
      %s75 = sphi 0, %s75
      %s77 = sphi 0, %s75
      %s78 = sphi 0, %s77
      %s92 = sphi 0, %s78
      %s96 = sphi 0, %s96
      %s98 = sphi 0, %s96
      %s99 = sphi 0, %s98
      %s113 = sphi 0, %s99
      %s117 = sphi 0, %s117
      %s119 = sphi 0, %s117
      %s120 = sphi 0, %s119
      %s134 = sphi 0, %s120
      %s138 = sphi 0, %s138
      %s140 = sphi 0, %s138
      %s141 = sphi 0, %s140
      %s155 = sphi 0, %s141
      %s159 = sphi 0, %s159
      %s161 = sphi 0, %s159
      %s162 = sphi 0, %s161
      %s176 = sphi 0, %s162
      %s180 = sphi 0, %s180
      %s182 = sphi 0, %s180
      %s183 = sphi 0, %s182
      %s197 = sphi 0, %s183
      %s201 = sphi 0, %s201
      %s203 = sphi 0, %s201
      %s204 = sphi 0, %s203
      %s218 = sphi 0, %s204
      %s222 = sphi 0, %s222
      %s224 = sphi 0, %s222
      %s225 = sphi 0, %s224
      %s239 = sphi 0, %s225
      %s243 = sphi 0, %s243
      %s245 = sphi 0, %s243
      %s246 = sphi 0, %s245
      %s260 = sphi 0, %s246
      %s266 = sphi 0, %s268
      %s269 = sphi 0, %s266
      %s270 = sphi 0, %s269
      %s286 = sphi 0, %s270
    $region4: #{tpu_custom_call.1} parent=1 // loop_header_branch
      %23 = sbr.rel (%p21) target = $region8
    $region5: #{tpu_custom_call.1} parent=1 // loop_body
      %s25 = ssub.s32 %s20, 1
      %s26 = ssub.s32 %s20, 2
      %s27 = sadd.s32 %s20, 1
      %s28 = ssub.s32 %s20, %s27
      %p29 = scmp.eq.s32.totalorder %s28, 0
      %s31 = sadd.s32 %s30, 1
      %s32 = scalar_select %p29, %s30, %s31
      %p35 = pneg %p29
      %p36 = scmp.eq.s32.totalorder %s20, 1
      %p37 = por %p35, %p36
      %p38 = scmp.ne.s32.totalorder %s30, %s33
      %p39 = scmp.eq.s32.totalorder %s20, 0
      %p40 = por %p38, %p39
      %p41 = scmp.ne.s32.totalorder %s30, %s33
      %p42 = scmp.eq.s32.totalorder %s25, 1
      %p43 = por %p41, %p42
      %p44 = scmp.ne.s32.totalorder %s33, %s34
      %p45 = scmp.eq.s32.totalorder %s25, 0
      %p46 = por %p44, %p45
      %p47 = scmp.ne.s32.totalorder %s33, %s34
      %p48 = scmp.eq.s32.totalorder %s26, 1
      %p49 = por %p47, %p48
      %p51 = scmp.ne.s32.totalorder %s34, %s50
      %p52 = scmp.eq.s32.totalorder %s26, 0
      %p53 = por %p51, %p52
      %s55 = sadd.s32 %s54, 1
      %p58 = scmp.eq.s32.totalorder %s20, 1
      %p59 = scmp.ne.s32.totalorder %s54, %s56
      %p60 = scmp.eq.s32.totalorder %s20, 0
      %p61 = por %p59, %p60
      %p62 = scmp.ne.s32.totalorder %s54, %s56
      %p63 = scmp.eq.s32.totalorder %s25, 1
      %p64 = por %p62, %p63
      %p65 = scmp.ne.s32.totalorder %s56, %s57
      %p66 = scmp.eq.s32.totalorder %s25, 0
      %p67 = por %p65, %p66
      %p68 = scmp.ne.s32.totalorder %s56, %s57
      %p69 = scmp.eq.s32.totalorder %s26, 1
      %p70 = por %p68, %p69
      %p72 = scmp.ne.s32.totalorder %s57, %s71
      %p73 = scmp.eq.s32.totalorder %s26, 0
      %p74 = por %p72, %p73
      %s76 = sadd.s32 %s75, 1
      %p79 = scmp.eq.s32.totalorder %s20, 1
      %p80 = scmp.ne.s32.totalorder %s75, %s77
      %p81 = scmp.eq.s32.totalorder %s20, 0
      %p82 = por %p80, %p81
      %p83 = scmp.ne.s32.totalorder %s75, %s77
      %p84 = scmp.eq.s32.totalorder %s25, 1
      %p85 = por %p83, %p84
      %p86 = scmp.ne.s32.totalorder %s77, %s78
      %p87 = scmp.eq.s32.totalorder %s25, 0
      %p88 = por %p86, %p87
      %p89 = scmp.ne.s32.totalorder %s77, %s78
      %p90 = scmp.eq.s32.totalorder %s26, 1
      %p91 = por %p89, %p90
      %p93 = scmp.ne.s32.totalorder %s78, %s92
      %p94 = scmp.eq.s32.totalorder %s26, 0
      %p95 = por %p93, %p94
      %s97 = sadd.s32 %s96, 1
      %p100 = scmp.eq.s32.totalorder %s20, 1
      %p101 = scmp.ne.s32.totalorder %s96, %s98
      %p102 = scmp.eq.s32.totalorder %s20, 0
      %p103 = por %p101, %p102
      %p104 = scmp.ne.s32.totalorder %s96, %s98
      %p105 = scmp.eq.s32.totalorder %s25, 1
      %p106 = por %p104, %p105
      %p107 = scmp.ne.s32.totalorder %s98, %s99
      %p108 = scmp.eq.s32.totalorder %s25, 0
      %p109 = por %p107, %p108
      %p110 = scmp.ne.s32.totalorder %s98, %s99
      %p111 = scmp.eq.s32.totalorder %s26, 1
      %p112 = por %p110, %p111
      %p114 = scmp.ne.s32.totalorder %s99, %s113
      %p115 = scmp.eq.s32.totalorder %s26, 0
      %p116 = por %p114, %p115
      %s118 = sadd.s32 %s117, 1
      %p121 = scmp.eq.s32.totalorder %s20, 1
      %p122 = scmp.ne.s32.totalorder %s117, %s119
      %p123 = scmp.eq.s32.totalorder %s20, 0
      %p124 = por %p122, %p123
      %p125 = scmp.ne.s32.totalorder %s117, %s119
      %p126 = scmp.eq.s32.totalorder %s25, 1
      %p127 = por %p125, %p126
      %p128 = scmp.ne.s32.totalorder %s119, %s120
      %p129 = scmp.eq.s32.totalorder %s25, 0
      %p130 = por %p128, %p129
      %p131 = scmp.ne.s32.totalorder %s119, %s120
      %p132 = scmp.eq.s32.totalorder %s26, 1
      %p133 = por %p131, %p132
      %p135 = scmp.ne.s32.totalorder %s120, %s134
      %p136 = scmp.eq.s32.totalorder %s26, 0
      %p137 = por %p135, %p136
      %s139 = sadd.s32 %s138, 1
      %p142 = scmp.eq.s32.totalorder %s20, 1
      %p143 = scmp.ne.s32.totalorder %s138, %s140
      %p144 = scmp.eq.s32.totalorder %s20, 0
      %p145 = por %p143, %p144
      %p146 = scmp.ne.s32.totalorder %s138, %s140
      %p147 = scmp.eq.s32.totalorder %s25, 1
      %p148 = por %p146, %p147
      %p149 = scmp.ne.s32.totalorder %s140, %s141
      %p150 = scmp.eq.s32.totalorder %s25, 0
      %p151 = por %p149, %p150
      %p152 = scmp.ne.s32.totalorder %s140, %s141
      %p153 = scmp.eq.s32.totalorder %s26, 1
      %p154 = por %p152, %p153
      %p156 = scmp.ne.s32.totalorder %s141, %s155
      %p157 = scmp.eq.s32.totalorder %s26, 0
      %p158 = por %p156, %p157
      %s160 = sadd.s32 %s159, 1
      %p163 = scmp.eq.s32.totalorder %s20, 1
      %p164 = scmp.ne.s32.totalorder %s159, %s161
      %p165 = scmp.eq.s32.totalorder %s20, 0
      %p166 = por %p164, %p165
      %p167 = scmp.ne.s32.totalorder %s159, %s161
      %p168 = scmp.eq.s32.totalorder %s25, 1
      %p169 = por %p167, %p168
      %p170 = scmp.ne.s32.totalorder %s161, %s162
      %p171 = scmp.eq.s32.totalorder %s25, 0
      %p172 = por %p170, %p171
      %p173 = scmp.ne.s32.totalorder %s161, %s162
      %p174 = scmp.eq.s32.totalorder %s26, 1
      %p175 = por %p173, %p174
      %p177 = scmp.ne.s32.totalorder %s162, %s176
      %p178 = scmp.eq.s32.totalorder %s26, 0
      %p179 = por %p177, %p178
      %s181 = sadd.s32 %s180, 1
      %p184 = scmp.eq.s32.totalorder %s20, 1
      %p185 = scmp.ne.s32.totalorder %s180, %s182
      %p186 = scmp.eq.s32.totalorder %s20, 0
      %p187 = por %p185, %p186
      %p188 = scmp.ne.s32.totalorder %s180, %s182
      %p189 = scmp.eq.s32.totalorder %s25, 1
      %p190 = por %p188, %p189
      %p191 = scmp.ne.s32.totalorder %s182, %s183
      %p192 = scmp.eq.s32.totalorder %s25, 0
      %p193 = por %p191, %p192
      %p194 = scmp.ne.s32.totalorder %s182, %s183
      %p195 = scmp.eq.s32.totalorder %s26, 1
      %p196 = por %p194, %p195
      %p198 = scmp.ne.s32.totalorder %s183, %s197
      %p199 = scmp.eq.s32.totalorder %s26, 0
      %p200 = por %p198, %p199
      %s202 = sadd.s32 %s201, 1
      %p205 = scmp.eq.s32.totalorder %s20, 1
      %p206 = scmp.ne.s32.totalorder %s201, %s203
      %p207 = scmp.eq.s32.totalorder %s20, 0
      %p208 = por %p206, %p207
      %p209 = scmp.ne.s32.totalorder %s201, %s203
      %p210 = scmp.eq.s32.totalorder %s25, 1
      %p211 = por %p209, %p210
      %p212 = scmp.ne.s32.totalorder %s203, %s204
      %p213 = scmp.eq.s32.totalorder %s25, 0
      %p214 = por %p212, %p213
      %p215 = scmp.ne.s32.totalorder %s203, %s204
      %p216 = scmp.eq.s32.totalorder %s26, 1
      %p217 = por %p215, %p216
      %p219 = scmp.ne.s32.totalorder %s204, %s218
      %p220 = scmp.eq.s32.totalorder %s26, 0
      %p221 = por %p219, %p220
      %s223 = sadd.s32 %s222, 1
      %p226 = scmp.eq.s32.totalorder %s20, 1
      %p227 = scmp.ne.s32.totalorder %s222, %s224
      %p228 = scmp.eq.s32.totalorder %s20, 0
      %p229 = por %p227, %p228
      %p230 = scmp.ne.s32.totalorder %s222, %s224
      %p231 = scmp.eq.s32.totalorder %s25, 1
      %p232 = por %p230, %p231
      %p233 = scmp.ne.s32.totalorder %s224, %s225
      %p234 = scmp.eq.s32.totalorder %s25, 0
      %p235 = por %p233, %p234
      %p236 = scmp.ne.s32.totalorder %s224, %s225
      %p237 = scmp.eq.s32.totalorder %s26, 1
      %p238 = por %p236, %p237
      %p240 = scmp.ne.s32.totalorder %s225, %s239
      %p241 = scmp.eq.s32.totalorder %s26, 0
      %p242 = por %p240, %p241
      %s244 = sadd.s32 %s243, 1
      %p247 = scmp.eq.s32.totalorder %s20, 1
      %p248 = scmp.ne.s32.totalorder %s243, %s245
      %p249 = scmp.eq.s32.totalorder %s20, 0
      %p250 = por %p248, %p249
      %p251 = scmp.ne.s32.totalorder %s243, %s245
      %p252 = scmp.eq.s32.totalorder %s25, 1
      %p253 = por %p251, %p252
      %p254 = scmp.ne.s32.totalorder %s245, %s246
      %p255 = scmp.eq.s32.totalorder %s25, 0
      %p256 = por %p254, %p255
      %p257 = scmp.ne.s32.totalorder %s245, %s246
      %p258 = scmp.eq.s32.totalorder %s26, 1
      %p259 = por %p257, %p258
      %p261 = scmp.ne.s32.totalorder %s246, %s260
      %p262 = scmp.eq.s32.totalorder %s26, 0
      %p263 = por %p261, %p262
      %s264 = ssub.s32 %s20, %s27
      %p265 = scmp.eq.s32.totalorder %s264, 0
      %s267 = sadd.s32 %s266, 1
      %s268 = scalar_select %p265, %s266, %s267
      %p271 = pneg %p265
      %p272 = scmp.eq.s32.totalorder %s20, 1
      %p273 = por %p271, %p272
      %p274 = scmp.ne.s32.totalorder %s266, %s269
      %p275 = scmp.eq.s32.totalorder %s20, 0
      %p276 = por %p274, %p275
      %p277 = scmp.ne.s32.totalorder %s266, %s269
      %p278 = scmp.eq.s32.totalorder %s25, 1
      %p279 = por %p277, %p278
      %p280 = scmp.ne.s32.totalorder %s269, %s270
      %p281 = scmp.eq.s32.totalorder %s25, 0
      %p282 = por %p280, %p281
      %p283 = scmp.ne.s32.totalorder %s269, %s270
      %p284 = scmp.eq.s32.totalorder %s26, 1
      %p285 = por %p283, %p284
      %p287 = scmp.ne.s32.totalorder %s270, %s286
      %p288 = scmp.eq.s32.totalorder %s26, 0
      %p289 = por %p287, %p288
      %p290 = scmp.le.s32.totalorder 1, %s20
      %p291 = scmp.lt.s32.totalorder %s20, 3
      %p292 = pnand %p290, %p291
      %p293 = pneg %p292
      // Predicated region
      $region9: #{tpu_custom_call.1} parent=5 // pred_check
        _
      $region10: #{tpu_custom_call.1} parent=5 // pred_check_branch
        %295 = sbr.rel (%p292) target = $region12
      $region11: #{tpu_custom_call.1} parent=5 // pred_region
        %s296 = ssub.s32 %s20, 1
        // Predicated region
        $region13: #{tpu_custom_call.1} parent=11 // pred_check
          %p297 = pneg %p67
        $region14: #{tpu_custom_call.1} parent=11 // pred_check_branch
          %299 = sbr.rel (%p297) target = $region16
        $region15: #{tpu_custom_call.1} parent=11 // pred_region
          _
        $region16: #{tpu_custom_call.1} parent=11 // pred_fallthru
          _
        // Predicated region
        $region17: #{tpu_custom_call.1} parent=11 // pred_check
          %p300 = pneg %p88
        $region18: #{tpu_custom_call.1} parent=11 // pred_check_branch
          %302 = sbr.rel (%p300) target = $region20
        $region19: #{tpu_custom_call.1} parent=11 // pred_region
          _
        $region20: #{tpu_custom_call.1} parent=11 // pred_fallthru
          _
        // Predicated region
        $region21: #{tpu_custom_call.1} parent=11 // pred_check
          %p303 = pneg %p109
        $region22: #{tpu_custom_call.1} parent=11 // pred_check_branch
          %305 = sbr.rel (%p303) target = $region24
        $region23: #{tpu_custom_call.1} parent=11 // pred_region
          _
        $region24: #{tpu_custom_call.1} parent=11 // pred_fallthru
          _
        // Predicated region
        $region25: #{tpu_custom_call.1} parent=11 // pred_check
          %p306 = pneg %p130
        $region26: #{tpu_custom_call.1} parent=11 // pred_check_branch
          %308 = sbr.rel (%p306) target = $region28
        $region27: #{tpu_custom_call.1} parent=11 // pred_region
          _
        $region28: #{tpu_custom_call.1} parent=11 // pred_fallthru
          _
        // Predicated region
        $region29: #{tpu_custom_call.1} parent=11 // pred_check
          %p309 = pneg %p151
        $region30: #{tpu_custom_call.1} parent=11 // pred_check_branch
          %311 = sbr.rel (%p309) target = $region32
        $region31: #{tpu_custom_call.1} parent=11 // pred_region
          _
        $region32: #{tpu_custom_call.1} parent=11 // pred_fallthru
          _
        // Predicated region
        $region33: #{tpu_custom_call.1} parent=11 // pred_check
          %p312 = pneg %p172
        $region34: #{tpu_custom_call.1} parent=11 // pred_check_branch
          %314 = sbr.rel (%p312) target = $region36
        $region35: #{tpu_custom_call.1} parent=11 // pred_region
          _
        $region36: #{tpu_custom_call.1} parent=11 // pred_fallthru
          _
        // Predicated region
        $region37: #{tpu_custom_call.1} parent=11 // pred_check
          %p315 = pneg %p193
        $region38: #{tpu_custom_call.1} parent=11 // pred_check_branch
          %317 = sbr.rel (%p315) target = $region40
        $region39: #{tpu_custom_call.1} parent=11 // pred_region
          _
        $region40: #{tpu_custom_call.1} parent=11 // pred_fallthru
          _
        // Predicated region
        $region41: #{tpu_custom_call.1} parent=11 // pred_check
          %p318 = pneg %p214
        $region42: #{tpu_custom_call.1} parent=11 // pred_check_branch
          %320 = sbr.rel (%p318) target = $region44
        $region43: #{tpu_custom_call.1} parent=11 // pred_region
          _
        $region44: #{tpu_custom_call.1} parent=11 // pred_fallthru
          _
        // Predicated region
        $region45: #{tpu_custom_call.1} parent=11 // pred_check
          %p321 = pneg %p235
        $region46: #{tpu_custom_call.1} parent=11 // pred_check_branch
          %323 = sbr.rel (%p321) target = $region48
        $region47: #{tpu_custom_call.1} parent=11 // pred_region
          _
        $region48: #{tpu_custom_call.1} parent=11 // pred_fallthru
          _
        // Predicated region
        $region49: #{tpu_custom_call.1} parent=11 // pred_check
          %p324 = pneg %p256
        $region50: #{tpu_custom_call.1} parent=11 // pred_check_branch
          %326 = sbr.rel (%p324) target = $region52
        $region51: #{tpu_custom_call.1} parent=11 // pred_region
          _
        $region52: #{tpu_custom_call.1} parent=11 // pred_fallthru
          _
      $region12: #{tpu_custom_call.1} parent=5 // pred_fallthru
        _
      %p327 = scmp.lt.s32.totalorder %s20, 2
      // Predicated region
      $region53: #{tpu_custom_call.1} parent=5 // pred_check
        %p328 = pneg %p327
      $region54: #{tpu_custom_call.1} parent=5 // pred_check_branch
        %330 = sbr.rel (%p328) target = $region56
      $region55: #{tpu_custom_call.1} parent=5 // pred_region
        // Predicated region
        $region57: #{tpu_custom_call.1} parent=55 // pred_check
          %p331 = pneg %p40
        $region58: #{tpu_custom_call.1} parent=55 // pred_check_branch
          %333 = sbr.rel (%p331) target = $region60
        $region59: #{tpu_custom_call.1} parent=55 // pred_region
          %p334 = scmp.lt.s32.totalorder %s20, 1
          %s335 = scalar_select %p334, %s20, 1
          %s336 = smul.addr %s335, 32
          %s337 = smul.addr %s336, 8
          %s338 = scalar_lea.vmem %s0, %s337
        $region60: #{tpu_custom_call.1} parent=55 // pred_fallthru
          _
      $region56: #{tpu_custom_call.1} parent=5 // pred_fallthru
        _
      %p339 = scmp.le.s32.totalorder 1, %s20
      %p340 = scmp.lt.s32.totalorder %s20, 3
      %p341 = pnand %p339, %p340
      %p342 = pneg %p341
      // Predicated region
      $region61: #{tpu_custom_call.1} parent=5 // pred_check
        _
      $region62: #{tpu_custom_call.1} parent=5 // pred_check_branch
        %344 = sbr.rel (%p341) target = $region64
      $region63: #{tpu_custom_call.1} parent=5 // pred_region
        %s345 = ssub.s32 %s20, 1
        %p346 = scmp.lt.s32.totalorder %s25, 1
        %s347 = scalar_select %p346, %s25, 1
        %s348 = smul.addr %s347, 32
        %s349 = smul.addr %s348, 8
        %s350 = scalar_lea.vmem %s0, %s349
        %p351 = pneg %p46
        %p352 = pneg %p43
        %p353 = pneg %p67
        %p354 = pneg %p64
        %p355 = pneg %p88
        %p356 = pneg %p85
        %p357 = pneg %p109
        %p358 = pneg %p106
        %p359 = pneg %p130
        %p360 = pneg %p127
        %p361 = pneg %p151
        %p362 = pneg %p148
        %p363 = pneg %p172
        %p364 = pneg %p169
        %p365 = pneg %p193
        %p366 = pneg %p190
        %p367 = pneg %p214
        %p368 = pneg %p211
        %p369 = pneg %p235
        %p370 = pneg %p232
        %p371 = pneg %p256
        %p372 = pneg %p253
        %p373 = pneg %p282
        %p374 = pneg %p279
        %s375 = sand.u32 %s269, 1
        %s376 = scalar_lea.sflag [#allocation9], %s375
        %s377 = sand.u32 %s269, 1
        %s378 = scalar_lea.vmem [#allocation8], %s377
        %p379 = scmp.lt.s32.totalorder %s25, 1
        %s380 = scalar_select %p379, %s25, 1
        %s381 = smul.addr %s380, 32
        %s382 = smul.addr %s381, 8
        %s383 = scalar_lea.vmem %s0, %s382
        %vm384 = vcmask 23552
        %385 = vst.msk [vmem:[#allocation2] sm:$0xff] %vm384, 0.0
        %386 = vst.msk [vmem:[#allocation2 + $0x8] sm:$0xff] %vm384, 0.0
        %vm387 = vcmask 17408
        %388 = vst.msk [vmem:[#allocation2 + $0x10] sm:$0x3] %vm387, 0.0
        %389 = vst.msk [vmem:[#allocation2 + $0x18] sm:$0xff] %vm384, 0.0
        %390 = vst.msk [vmem:[#allocation2 + $0x20] sm:$0xff] %vm384, 0.0
        %391 = vst.msk [vmem:[#allocation2 + $0x28] sm:$0x3] %vm387, 0.0
        %392 = vst.msk [vmem:[#allocation2 + $0x30] sm:$0xff] %vm384, 0.0
        %393 = vst.msk [vmem:[#allocation2 + $0x38] sm:$0xff] %vm384, 0.0
        %394 = vst.msk [vmem:[#allocation2 + $0x40] sm:$0x3] %vm387, 0.0
        %395 = vst.msk [vmem:[#allocation2 + $0x48] sm:$0xff] %vm384, 0.0
        %396 = vst.msk [vmem:[#allocation2 + $0x50] sm:$0xff] %vm384, 0.0
        %397 = vst.msk [vmem:[#allocation2 + $0x58] sm:$0x3] %vm387, 0.0
        %398 = vst.msk [vmem:[#allocation2 + $0x60] sm:$0xff] %vm384, 0.0
        %399 = vst.msk [vmem:[#allocation2 + $0x68] sm:$0xff] %vm384, 0.0
        %400 = vst.msk [vmem:[#allocation2 + $0x70] sm:$0x3] %vm387, 0.0
        %401 = vst.msk [vmem:[#allocation2 + $0x78] sm:$0xff] %vm384, 0.0
        %402 = vst.msk [vmem:[#allocation2 + $0x80] sm:$0xff] %vm384, 0.0
        %403 = vst.msk [vmem:[#allocation2 + $0x88] sm:$0x3] %vm387, 0.0
        %404 = vst.msk [vmem:[#allocation2 + $0x90] sm:$0xff] %vm384, 0.0
        %405 = vst.msk [vmem:[#allocation2 + $0x98] sm:$0xff] %vm384, 0.0
        %406 = vst.msk [vmem:[#allocation2 + $0xa0] sm:$0x3] %vm387, 0.0
        %407 = vst.msk [vmem:[#allocation2 + $0xa8] sm:$0xff] %vm384, 0.0
        %408 = vst.msk [vmem:[#allocation2 + $0xb0] sm:$0xff] %vm384, 0.0
        %409 = vst.msk [vmem:[#allocation2 + $0xb8] sm:$0x3] %vm387, 0.0
        %410 = vst.msk [vmem:[#allocation2 + $0xc0] sm:$0xff] %vm384, 0.0
        %411 = vst.msk [vmem:[#allocation2 + $0xc8] sm:$0xff] %vm384, 0.0
        %412 = vst.msk [vmem:[#allocation2 + $0xd0] sm:$0x3] %vm387, 0.0
        %413 = vst.msk [vmem:[#allocation2 + $0xd8] sm:$0xff] %vm384, 0.0
        %414 = vst.msk [vmem:[#allocation2 + $0xe0] sm:$0xff] %vm384, 0.0
        %415 = vst.msk [vmem:[#allocation2 + $0xe8] sm:$0x3] %vm387, 0.0
        %416 = vst.msk [vmem:[#allocation2 + $0xf0] sm:$0xff] %vm384, 0.0
        %417 = vst.msk [vmem:[#allocation2 + $0xf8] sm:$0xff] %vm384, 0.0
        %418 = vst.msk [vmem:[#allocation2 + $0x100] sm:$0x3] %vm387, 0.0
        %419 = vst.msk [vmem:[#allocation2 + $0x108] sm:$0xff] %vm384, 0.0
        %420 = vst.msk [vmem:[#allocation2 + $0x110] sm:$0xff] %vm384, 0.0
        %421 = vst.msk [vmem:[#allocation2 + $0x118] sm:$0x3] %vm387, 0.0
        %422 = vst.msk [vmem:[#allocation2 + $0x120] sm:$0xff] %vm384, 0.0
        %423 = vst.msk [vmem:[#allocation2 + $0x128] sm:$0xff] %vm384, 0.0
        %424 = vst.msk [vmem:[#allocation2 + $0x130] sm:$0x3] %vm387, 0.0
        %425 = vst.msk [vmem:[#allocation2 + $0x138] sm:$0xff] %vm384, 0.0
        %426 = vst.msk [vmem:[#allocation2 + $0x140] sm:$0xff] %vm384, 0.0
        %427 = vst.msk [vmem:[#allocation2 + $0x148] sm:$0x3] %vm387, 0.0
        %428 = vst.msk [vmem:[#allocation2 + $0x150] sm:$0xff] %vm384, 0.0
        %429 = vst.msk [vmem:[#allocation2 + $0x158] sm:$0xff] %vm384, 0.0
        %430 = vst.msk [vmem:[#allocation2 + $0x160] sm:$0x3] %vm387, 0.0
        %431 = vst.msk [vmem:[#allocation2 + $0x168] sm:$0xff] %vm384, 0.0
        %432 = vst.msk [vmem:[#allocation2 + $0x170] sm:$0xff] %vm384, 0.0
        %433 = vst.msk [vmem:[#allocation2 + $0x178] sm:$0x3] %vm387, 0.0
        %434 = vst.msk [vmem:[#allocation2 + $0x180] sm:$0xff] %vm384, 0.0
        %435 = vst.msk [vmem:[#allocation2 + $0x188] sm:$0xff] %vm384, 0.0
        %436 = vst.msk [vmem:[#allocation2 + $0x190] sm:$0x3] %vm387, 0.0
        %437 = vst.msk [vmem:[#allocation2 + $0x198] sm:$0xff] %vm384, 0.0
        %438 = vst.msk [vmem:[#allocation2 + $0x1a0] sm:$0xff] %vm384, 0.0
        %439 = vst.msk [vmem:[#allocation2 + $0x1a8] sm:$0x3] %vm387, 0.0
        %v440 = vld [vmem:[%s383] sm:$0xff]
        %v441 = vld [vmem:[%s383 + $0x8] sm:$0xff]
        %v442 = vld [vmem:[%s383 + $0x10] sm:$0xff]
        %v443 = vld [vmem:[%s383 + $0x18] sm:$0xff]
        %v444 = vld [vmem:[%s383 + $0x20] sm:$0xff]
        %v445 = vld [vmem:[%s383 + $0x28] sm:$0xff]
        %v446 = vld [vmem:[%s383 + $0x30] sm:$0xff]
        %v447 = vld [vmem:[%s383 + $0x38] sm:$0xff]
        %v448 = vld [vmem:[%s383 + $0x40] sm:$0xff]
        %v449 = vld [vmem:[%s383 + $0x48] sm:$0xff]
        %v450 = vld [vmem:[%s383 + $0x50] sm:$0xff]
        %v451 = vld [vmem:[%s383 + $0x58] sm:$0xff]
        %v452 = vld [vmem:[%s383 + $0x60] sm:$0xff]
        %v453 = vld [vmem:[%s383 + $0x68] sm:$0xff]
        %v454 = vld [vmem:[%s383 + $0x70] sm:$0xff]
        %v455 = vld [vmem:[%s383 + $0x78] sm:$0xff]
        %v456 = vld [vmem:[%s383 + $0x80] sm:$0xff]
        %v457 = vld [vmem:[%s383 + $0x88] sm:$0xff]
        %v458 = vld [vmem:[%s383 + $0x90] sm:$0xff]
        %v459 = vld [vmem:[%s383 + $0x98] sm:$0xff]
        %v460 = vld [vmem:[%s383 + $0xa0] sm:$0xff]
        %v461 = vld [vmem:[%s383 + $0xa8] sm:$0xff]
        %v462 = vld [vmem:[%s383 + $0xb0] sm:$0xff]
        %v463 = vld [vmem:[%s383 + $0xb8] sm:$0xff]
        %v464 = vld [vmem:[%s383 + $0xc0] sm:$0xff]
        %v465 = vld [vmem:[%s383 + $0xc8] sm:$0xff]
        %v466 = vld [vmem:[%s383 + $0xd0] sm:$0xff]
        %v467 = vld [vmem:[%s383 + $0xd8] sm:$0xff]
        %v468 = vld [vmem:[%s383 + $0xe0] sm:$0xff]
        %v469 = vld [vmem:[%s383 + $0xe8] sm:$0xff]
        %v470 = vld [vmem:[%s383 + $0xf0] sm:$0xff]
        %v471 = vld [vmem:[%s383 + $0xf8] sm:$0xff]
        %s472 = scalar_lea.vmem [#allocation2], 24
        %473 = vst.msk [vmem:[%s472 + $0x1] sm:$0xff] %vm384, %v440
        %474 = vst.msk [vmem:[%s472 + $0x9] sm:$0xff] %vm384, %v441
        %475 = vst.msk [vmem:[%s472 + $0x19] sm:$0xff] %vm384, %v442
        %476 = vst.msk [vmem:[%s472 + $0x21] sm:$0xff] %vm384, %v443
        %477 = vst.msk [vmem:[%s472 + $0x31] sm:$0xff] %vm384, %v444
        %478 = vst.msk [vmem:[%s472 + $0x39] sm:$0xff] %vm384, %v445
        %479 = vst.msk [vmem:[%s472 + $0x49] sm:$0xff] %vm384, %v446
        %480 = vst.msk [vmem:[%s472 + $0x51] sm:$0xff] %vm384, %v447
        %481 = vst.msk [vmem:[%s472 + $0x61] sm:$0xff] %vm384, %v448
        %482 = vst.msk [vmem:[%s472 + $0x69] sm:$0xff] %vm384, %v449
        %483 = vst.msk [vmem:[%s472 + $0x79] sm:$0xff] %vm384, %v450
        %484 = vst.msk [vmem:[%s472 + $0x81] sm:$0xff] %vm384, %v451
        %485 = vst.msk [vmem:[%s472 + $0x91] sm:$0xff] %vm384, %v452
        %486 = vst.msk [vmem:[%s472 + $0x99] sm:$0xff] %vm384, %v453
        %487 = vst.msk [vmem:[%s472 + $0xa9] sm:$0xff] %vm384, %v454
        %488 = vst.msk [vmem:[%s472 + $0xb1] sm:$0xff] %vm384, %v455
        %489 = vst.msk [vmem:[%s472 + $0xc1] sm:$0xff] %vm384, %v456
        %490 = vst.msk [vmem:[%s472 + $0xc9] sm:$0xff] %vm384, %v457
        %491 = vst.msk [vmem:[%s472 + $0xd9] sm:$0xff] %vm384, %v458
        %492 = vst.msk [vmem:[%s472 + $0xe1] sm:$0xff] %vm384, %v459
        %493 = vst.msk [vmem:[%s472 + $0xf1] sm:$0xff] %vm384, %v460
        %494 = vst.msk [vmem:[%s472 + $0xf9] sm:$0xff] %vm384, %v461
        %495 = vst.msk [vmem:[%s472 + $0x109] sm:$0xff] %vm384, %v462
        %496 = vst.msk [vmem:[%s472 + $0x111] sm:$0xff] %vm384, %v463
        %497 = vst.msk [vmem:[%s472 + $0x121] sm:$0xff] %vm384, %v464
        %498 = vst.msk [vmem:[%s472 + $0x129] sm:$0xff] %vm384, %v465
        %499 = vst.msk [vmem:[%s472 + $0x139] sm:$0xff] %vm384, %v466
        %500 = vst.msk [vmem:[%s472 + $0x141] sm:$0xff] %vm384, %v467
        %501 = vst.msk [vmem:[%s472 + $0x151] sm:$0xff] %vm384, %v468
        %502 = vst.msk [vmem:[%s472 + $0x159] sm:$0xff] %vm384, %v469
        %503 = vst.msk [vmem:[%s472 + $0x169] sm:$0xff] %vm384, %v470
        %504 = vst.msk [vmem:[%s472 + $0x171] sm:$0xff] %vm384, %v471
        %v505 = vld [vmem:[#allocation2] sm:$0xff]
        %v506 = vld [vmem:[#allocation2 + $0x8] sm:$0xff]
        %v507 = vld [vmem:[#allocation2 + $0x10] sm:$0x3]
        %v508 = vld [vmem:[#allocation2 + $0x18] sm:$0xff]
        %v509 = vld [vmem:[#allocation2 + $0x20] sm:$0xff]
        %v510 = vld [vmem:[#allocation2 + $0x28] sm:$0x3]
        %v511 = vld [vmem:[#allocation2 + $0x30] sm:$0xff]
        %v512 = vld [vmem:[#allocation2 + $0x38] sm:$0xff]
        %v513 = vld [vmem:[#allocation2 + $0x40] sm:$0x3]
        %v514 = vld [vmem:[#allocation2 + $0x48] sm:$0xff]
        %v515 = vld [vmem:[#allocation2 + $0x50] sm:$0xff]
        %v516 = vld [vmem:[#allocation2 + $0x58] sm:$0x3]
        %v517 = vld [vmem:[#allocation2 + $0x60] sm:$0xff]
        %v518 = vld [vmem:[#allocation2 + $0x68] sm:$0xff]
        %v519 = vld [vmem:[#allocation2 + $0x70] sm:$0x3]
        %v520 = vld [vmem:[#allocation2 + $0x78] sm:$0xff]
        %v521 = vld [vmem:[#allocation2 + $0x80] sm:$0xff]
        %v522 = vld [vmem:[#allocation2 + $0x88] sm:$0x3]
        %v523 = vld [vmem:[#allocation2 + $0x90] sm:$0xff]
        %v524 = vld [vmem:[#allocation2 + $0x98] sm:$0xff]
        %v525 = vld [vmem:[#allocation2 + $0xa0] sm:$0x3]
        %v526 = vld [vmem:[#allocation2 + $0xa8] sm:$0xff]
        %v527 = vld [vmem:[#allocation2 + $0xb0] sm:$0xff]
        %v528 = vld [vmem:[#allocation2 + $0xb8] sm:$0x3]
        %v529 = vld [vmem:[#allocation2 + $0xc0] sm:$0xff]
        %v530 = vld [vmem:[#allocation2 + $0xc8] sm:$0xff]
        %v531 = vld [vmem:[#allocation2 + $0xd0] sm:$0x3]
        %v532 = vld [vmem:[#allocation2 + $0xd8] sm:$0xff]
        %v533 = vld [vmem:[#allocation2 + $0xe0] sm:$0xff]
        %v534 = vld [vmem:[#allocation2 + $0xe8] sm:$0x3]
        %v535 = vld [vmem:[#allocation2 + $0xf0] sm:$0xff]
        %v536 = vld [vmem:[#allocation2 + $0xf8] sm:$0xff]
        %v537 = vld [vmem:[#allocation2 + $0x100] sm:$0x3]
        %v538 = vld [vmem:[#allocation2 + $0x108] sm:$0xff]
        %v539 = vld [vmem:[#allocation2 + $0x110] sm:$0xff]
        %v540 = vld [vmem:[#allocation2 + $0x118] sm:$0x3]
        %v541 = vld [vmem:[#allocation2 + $0x120] sm:$0xff]
        %v542 = vld [vmem:[#allocation2 + $0x128] sm:$0xff]
        %v543 = vld [vmem:[#allocation2 + $0x130] sm:$0x3]
        %v544 = vld [vmem:[#allocation2 + $0x138] sm:$0xff]
        %v545 = vld [vmem:[#allocation2 + $0x140] sm:$0xff]
        %v546 = vld [vmem:[#allocation2 + $0x148] sm:$0x3]
        %v547 = vld [vmem:[#allocation2 + $0x150] sm:$0xff]
        %v548 = vld [vmem:[#allocation2 + $0x158] sm:$0xff]
        %v549 = vld [vmem:[#allocation2 + $0x160] sm:$0x3]
        %v550 = vld [vmem:[#allocation2 + $0x168] sm:$0xff]
        %v551 = vld [vmem:[#allocation2 + $0x170] sm:$0xff]
        %v552 = vld [vmem:[#allocation2 + $0x178] sm:$0x3]
        %v553 = vld [vmem:[#allocation2 + $0x180] sm:$0xff]
        %v554 = vld [vmem:[#allocation2 + $0x188] sm:$0xff]
        %v555 = vld [vmem:[#allocation2 + $0x190] sm:$0x3]
        %v556 = vld [vmem:[#allocation2 + $0x198] sm:$0xff]
        %v557 = vld [vmem:[#allocation2 + $0x1a0] sm:$0xff]
        %v558 = vld [vmem:[#allocation2 + $0x1a8] sm:$0x3]
        %559 = vst.msk [vmem:[#allocation3] sm:$0xff] %vm384, %v505
        %560 = vst.msk [vmem:[#allocation3 + $0x8] sm:$0xff] %vm384, %v506
        %561 = vst.msk [vmem:[#allocation3 + $0x10] sm:$0xff] %vm384, %v508
        %562 = vst.msk [vmem:[#allocation3 + $0x18] sm:$0xff] %vm384, %v509
        %563 = vst.msk [vmem:[#allocation3 + $0x20] sm:$0xff] %vm384, %v511
        %564 = vst.msk [vmem:[#allocation3 + $0x28] sm:$0xff] %vm384, %v512
        %565 = vst.msk [vmem:[#allocation3 + $0x30] sm:$0xff] %vm384, %v514
        %566 = vst.msk [vmem:[#allocation3 + $0x38] sm:$0xff] %vm384, %v515
        %567 = vst.msk [vmem:[#allocation3 + $0x40] sm:$0xff] %vm384, %v517
        %568 = vst.msk [vmem:[#allocation3 + $0x48] sm:$0xff] %vm384, %v518
        %569 = vst.msk [vmem:[#allocation3 + $0x50] sm:$0xff] %vm384, %v520
        %570 = vst.msk [vmem:[#allocation3 + $0x58] sm:$0xff] %vm384, %v521
        %571 = vst.msk [vmem:[#allocation3 + $0x60] sm:$0xff] %vm384, %v523
        %572 = vst.msk [vmem:[#allocation3 + $0x68] sm:$0xff] %vm384, %v524
        %573 = vst.msk [vmem:[#allocation3 + $0x70] sm:$0xff] %vm384, %v526
        %574 = vst.msk [vmem:[#allocation3 + $0x78] sm:$0xff] %vm384, %v527
        %575 = vst.msk [vmem:[#allocation3 + $0x80] sm:$0xff] %vm384, %v529
        %576 = vst.msk [vmem:[#allocation3 + $0x88] sm:$0xff] %vm384, %v530
        %577 = vst.msk [vmem:[#allocation3 + $0x90] sm:$0xff] %vm384, %v532
        %578 = vst.msk [vmem:[#allocation3 + $0x98] sm:$0xff] %vm384, %v533
        %579 = vst.msk [vmem:[#allocation3 + $0xa0] sm:$0xff] %vm384, %v535
        %580 = vst.msk [vmem:[#allocation3 + $0xa8] sm:$0xff] %vm384, %v536
        %581 = vst.msk [vmem:[#allocation3 + $0xb0] sm:$0xff] %vm384, %v538
        %582 = vst.msk [vmem:[#allocation3 + $0xb8] sm:$0xff] %vm384, %v539
        %583 = vst.msk [vmem:[#allocation3 + $0xc0] sm:$0xff] %vm384, %v541
        %584 = vst.msk [vmem:[#allocation3 + $0xc8] sm:$0xff] %vm384, %v542
        %585 = vst.msk [vmem:[#allocation3 + $0xd0] sm:$0xff] %vm384, %v544
        %586 = vst.msk [vmem:[#allocation3 + $0xd8] sm:$0xff] %vm384, %v545
        %587 = vst.msk [vmem:[#allocation3 + $0xe0] sm:$0xff] %vm384, %v547
        %588 = vst.msk [vmem:[#allocation3 + $0xe8] sm:$0xff] %vm384, %v548
        %589 = vst.msk [vmem:[#allocation3 + $0xf0] sm:$0xff] %vm384, %v550
        %590 = vst.msk [vmem:[#allocation3 + $0xf8] sm:$0xff] %vm384, %v551
        %vm639 = vcmask 1046528
        %v640 = vrot.slane %v505, 1
        %v641 = vrot.slane %v506, 1
        %v642 = vsel %vm639, %v640, %v641
        %v643 = vrot.slane %v507, 1
        %v644 = vsel %vm639, %v641, %v643
        %v645 = vrot.slane %v508, 1
        %v646 = vrot.slane %v509, 1
        %v647 = vsel %vm639, %v645, %v646
        %v648 = vrot.slane %v510, 1
        %v649 = vsel %vm639, %v646, %v648
        %v650 = vrot.slane %v511, 1
        %v651 = vrot.slane %v512, 1
        %v652 = vsel %vm639, %v650, %v651
        %v653 = vrot.slane %v513, 1
        %v654 = vsel %vm639, %v651, %v653
        %v655 = vrot.slane %v514, 1
        %v656 = vrot.slane %v515, 1
        %v657 = vsel %vm639, %v655, %v656
        %v658 = vrot.slane %v516, 1
        %v659 = vsel %vm639, %v656, %v658
        %v660 = vrot.slane %v517, 1
        %v661 = vrot.slane %v518, 1
        %v662 = vsel %vm639, %v660, %v661
        %v663 = vrot.slane %v519, 1
        %v664 = vsel %vm639, %v661, %v663
        %v665 = vrot.slane %v520, 1
        %v666 = vrot.slane %v521, 1
        %v667 = vsel %vm639, %v665, %v666
        %v668 = vrot.slane %v522, 1
        %v669 = vsel %vm639, %v666, %v668
        %v670 = vrot.slane %v523, 1
        %v671 = vrot.slane %v524, 1
        %v672 = vsel %vm639, %v670, %v671
        %v673 = vrot.slane %v525, 1
        %v674 = vsel %vm639, %v671, %v673
        %v675 = vrot.slane %v526, 1
        %v676 = vrot.slane %v527, 1
        %v677 = vsel %vm639, %v675, %v676
        %v678 = vrot.slane %v528, 1
        %v679 = vsel %vm639, %v676, %v678
        %v680 = vrot.slane %v529, 1
        %v681 = vrot.slane %v530, 1
        %v682 = vsel %vm639, %v680, %v681
        %v683 = vrot.slane %v531, 1
        %v684 = vsel %vm639, %v681, %v683
        %v685 = vrot.slane %v532, 1
        %v686 = vrot.slane %v533, 1
        %v687 = vsel %vm639, %v685, %v686
        %v688 = vrot.slane %v534, 1
        %v689 = vsel %vm639, %v686, %v688
        %v690 = vrot.slane %v535, 1
        %v691 = vrot.slane %v536, 1
        %v692 = vsel %vm639, %v690, %v691
        %v693 = vrot.slane %v537, 1
        %v694 = vsel %vm639, %v691, %v693
        %v695 = vrot.slane %v538, 1
        %v696 = vrot.slane %v539, 1
        %v697 = vsel %vm639, %v695, %v696
        %v698 = vrot.slane %v540, 1
        %v699 = vsel %vm639, %v696, %v698
        %v700 = vrot.slane %v541, 1
        %v701 = vrot.slane %v542, 1
        %v702 = vsel %vm639, %v700, %v701
        %v703 = vrot.slane %v543, 1
        %v704 = vsel %vm639, %v701, %v703
        %v705 = vrot.slane %v544, 1
        %v706 = vrot.slane %v545, 1
        %v707 = vsel %vm639, %v705, %v706
        %v708 = vrot.slane %v546, 1
        %v709 = vsel %vm639, %v706, %v708
        %v710 = vrot.slane %v547, 1
        %v711 = vrot.slane %v548, 1
        %v712 = vsel %vm639, %v710, %v711
        %v713 = vrot.slane %v549, 1
        %v714 = vsel %vm639, %v711, %v713
        %v715 = vrot.slane %v550, 1
        %v716 = vrot.slane %v551, 1
        %v717 = vsel %vm639, %v715, %v716
        %v718 = vrot.slane %v552, 1
        %v719 = vsel %vm639, %v716, %v718
        %720 = vrot.lane.b32.xlu0 %v642, 3
        %v721 = vpop.permute.xlu0 %720
        %722 = vrot.lane.b32.xlu0 %v644, 3
        %v723 = vpop.permute.xlu0 %722
        %724 = vrot.lane.b32.xlu0 %v647, 3
        %v725 = vpop.permute.xlu0 %724
        %726 = vrot.lane.b32.xlu0 %v649, 3
        %v727 = vpop.permute.xlu0 %726
        %728 = vrot.lane.b32.xlu0 %v652, 3
        %v729 = vpop.permute.xlu0 %728
        %730 = vrot.lane.b32.xlu0 %v654, 3
        %v731 = vpop.permute.xlu0 %730
        %732 = vrot.lane.b32.xlu0 %v657, 3
        %v733 = vpop.permute.xlu0 %732
        %734 = vrot.lane.b32.xlu0 %v659, 3
        %v735 = vpop.permute.xlu0 %734
        %736 = vrot.lane.b32.xlu0 %v662, 3
        %v737 = vpop.permute.xlu0 %736
        %738 = vrot.lane.b32.xlu0 %v664, 3
        %v739 = vpop.permute.xlu0 %738
        %740 = vrot.lane.b32.xlu0 %v667, 3
        %v741 = vpop.permute.xlu0 %740
        %742 = vrot.lane.b32.xlu0 %v669, 3
        %v743 = vpop.permute.xlu0 %742
        %744 = vrot.lane.b32.xlu0 %v672, 3
        %v745 = vpop.permute.xlu0 %744
        %746 = vrot.lane.b32.xlu0 %v674, 3
        %v747 = vpop.permute.xlu0 %746
        %748 = vrot.lane.b32.xlu0 %v677, 3
        %v749 = vpop.permute.xlu0 %748
        %750 = vrot.lane.b32.xlu0 %v679, 3
        %v751 = vpop.permute.xlu0 %750
        %752 = vrot.lane.b32.xlu0 %v682, 3
        %v753 = vpop.permute.xlu0 %752
        %754 = vrot.lane.b32.xlu0 %v684, 3
        %v755 = vpop.permute.xlu0 %754
        %756 = vrot.lane.b32.xlu0 %v687, 3
        %v757 = vpop.permute.xlu0 %756
        %758 = vrot.lane.b32.xlu0 %v689, 3
        %v759 = vpop.permute.xlu0 %758
        %760 = vrot.lane.b32.xlu0 %v692, 3
        %v761 = vpop.permute.xlu0 %760
        %762 = vrot.lane.b32.xlu0 %v694, 3
        %v763 = vpop.permute.xlu0 %762
        %764 = vrot.lane.b32.xlu0 %v697, 3
        %v765 = vpop.permute.xlu0 %764
        %766 = vrot.lane.b32.xlu0 %v699, 3
        %v767 = vpop.permute.xlu0 %766
        %768 = vrot.lane.b32.xlu0 %v702, 3
        %v769 = vpop.permute.xlu0 %768
        %770 = vrot.lane.b32.xlu0 %v704, 3
        %v771 = vpop.permute.xlu0 %770
        %772 = vrot.lane.b32.xlu0 %v707, 3
        %v773 = vpop.permute.xlu0 %772
        %774 = vrot.lane.b32.xlu0 %v709, 3
        %v775 = vpop.permute.xlu0 %774
        %776 = vrot.lane.b32.xlu0 %v712, 3
        %v777 = vpop.permute.xlu0 %776
        %778 = vrot.lane.b32.xlu0 %v714, 3
        %v779 = vpop.permute.xlu0 %778
        %780 = vrot.lane.b32.xlu0 %v717, 3
        %v781 = vpop.permute.xlu0 %780
        %782 = vrot.lane.b32.xlu0 %v719, 3
        %v783 = vpop.permute.xlu0 %782
        %vm816 = vcmask 48152
        %817 = vst.msk [vmem:[#allocation3] sm:$0xff] %vm816, %v721
        %818 = vst.msk [vmem:[#allocation3 + $0x8] sm:$0xff] %vm816, %v723
        %819 = vst.msk [vmem:[#allocation3 + $0x10] sm:$0xff] %vm816, %v725
        %820 = vst.msk [vmem:[#allocation3 + $0x18] sm:$0xff] %vm816, %v727
        %821 = vst.msk [vmem:[#allocation3 + $0x20] sm:$0xff] %vm816, %v729
        %822 = vst.msk [vmem:[#allocation3 + $0x28] sm:$0xff] %vm816, %v731
        %823 = vst.msk [vmem:[#allocation3 + $0x30] sm:$0xff] %vm816, %v733
        %824 = vst.msk [vmem:[#allocation3 + $0x38] sm:$0xff] %vm816, %v735
        %825 = vst.msk [vmem:[#allocation3 + $0x40] sm:$0xff] %vm816, %v737
        %826 = vst.msk [vmem:[#allocation3 + $0x48] sm:$0xff] %vm816, %v739
        %827 = vst.msk [vmem:[#allocation3 + $0x50] sm:$0xff] %vm816, %v741
        %828 = vst.msk [vmem:[#allocation3 + $0x58] sm:$0xff] %vm816, %v743
        %829 = vst.msk [vmem:[#allocation3 + $0x60] sm:$0xff] %vm816, %v745
        %830 = vst.msk [vmem:[#allocation3 + $0x68] sm:$0xff] %vm816, %v747
        %831 = vst.msk [vmem:[#allocation3 + $0x70] sm:$0xff] %vm816, %v749
        %832 = vst.msk [vmem:[#allocation3 + $0x78] sm:$0xff] %vm816, %v751
        %833 = vst.msk [vmem:[#allocation3 + $0x80] sm:$0xff] %vm816, %v753
        %834 = vst.msk [vmem:[#allocation3 + $0x88] sm:$0xff] %vm816, %v755
        %835 = vst.msk [vmem:[#allocation3 + $0x90] sm:$0xff] %vm816, %v757
        %836 = vst.msk [vmem:[#allocation3 + $0x98] sm:$0xff] %vm816, %v759
        %837 = vst.msk [vmem:[#allocation3 + $0xa0] sm:$0xff] %vm816, %v761
        %838 = vst.msk [vmem:[#allocation3 + $0xa8] sm:$0xff] %vm816, %v763
        %839 = vst.msk [vmem:[#allocation3 + $0xb0] sm:$0xff] %vm816, %v765
        %840 = vst.msk [vmem:[#allocation3 + $0xb8] sm:$0xff] %vm816, %v767
        %841 = vst.msk [vmem:[#allocation3 + $0xc0] sm:$0xff] %vm816, %v769
        %842 = vst.msk [vmem:[#allocation3 + $0xc8] sm:$0xff] %vm816, %v771
        %843 = vst.msk [vmem:[#allocation3 + $0xd0] sm:$0xff] %vm816, %v773
        %844 = vst.msk [vmem:[#allocation3 + $0xd8] sm:$0xff] %vm816, %v775
        %845 = vst.msk [vmem:[#allocation3 + $0xe0] sm:$0xff] %vm816, %v777
        %846 = vst.msk [vmem:[#allocation3 + $0xe8] sm:$0xff] %vm816, %v779
        %847 = vst.msk [vmem:[#allocation3 + $0xf0] sm:$0xff] %vm816, %v781
        %848 = vst.msk [vmem:[#allocation3 + $0xf8] sm:$0xff] %vm816, %v783
        %vm849 = vcmask 1045504
        %v850 = vrot.slane %v505, 2
        %v851 = vrot.slane %v506, 2
        %v852 = vsel %vm849, %v850, %v851
        %v853 = vrot.slane %v507, 2
        %v854 = vsel %vm849, %v851, %v853
        %v855 = vrot.slane %v508, 2
        %v856 = vrot.slane %v509, 2
        %v857 = vsel %vm849, %v855, %v856
        %v858 = vrot.slane %v510, 2
        %v859 = vsel %vm849, %v856, %v858
        %v860 = vrot.slane %v511, 2
        %v861 = vrot.slane %v512, 2
        %v862 = vsel %vm849, %v860, %v861
        %v863 = vrot.slane %v513, 2
        %v864 = vsel %vm849, %v861, %v863
        %v865 = vrot.slane %v514, 2
        %v866 = vrot.slane %v515, 2
        %v867 = vsel %vm849, %v865, %v866
        %v868 = vrot.slane %v516, 2
        %v869 = vsel %vm849, %v866, %v868
        %v870 = vrot.slane %v517, 2
        %v871 = vrot.slane %v518, 2
        %v872 = vsel %vm849, %v870, %v871
        %v873 = vrot.slane %v519, 2
        %v874 = vsel %vm849, %v871, %v873
        %v875 = vrot.slane %v520, 2
        %v876 = vrot.slane %v521, 2
        %v877 = vsel %vm849, %v875, %v876
        %v878 = vrot.slane %v522, 2
        %v879 = vsel %vm849, %v876, %v878
        %v880 = vrot.slane %v523, 2
        %v881 = vrot.slane %v524, 2
        %v882 = vsel %vm849, %v880, %v881
        %v883 = vrot.slane %v525, 2
        %v884 = vsel %vm849, %v881, %v883
        %v885 = vrot.slane %v526, 2
        %v886 = vrot.slane %v527, 2
        %v887 = vsel %vm849, %v885, %v886
        %v888 = vrot.slane %v528, 2
        %v889 = vsel %vm849, %v886, %v888
        %v890 = vrot.slane %v529, 2
        %v891 = vrot.slane %v530, 2
        %v892 = vsel %vm849, %v890, %v891
        %v893 = vrot.slane %v531, 2
        %v894 = vsel %vm849, %v891, %v893
        %v895 = vrot.slane %v532, 2
        %v896 = vrot.slane %v533, 2
        %v897 = vsel %vm849, %v895, %v896
        %v898 = vrot.slane %v534, 2
        %v899 = vsel %vm849, %v896, %v898
        %v900 = vrot.slane %v535, 2
        %v901 = vrot.slane %v536, 2
        %v902 = vsel %vm849, %v900, %v901
        %v903 = vrot.slane %v537, 2
        %v904 = vsel %vm849, %v901, %v903
        %v905 = vrot.slane %v538, 2
        %v906 = vrot.slane %v539, 2
        %v907 = vsel %vm849, %v905, %v906
        %v908 = vrot.slane %v540, 2
        %v909 = vsel %vm849, %v906, %v908
        %v910 = vrot.slane %v541, 2
        %v911 = vrot.slane %v542, 2
        %v912 = vsel %vm849, %v910, %v911
        %v913 = vrot.slane %v543, 2
        %v914 = vsel %vm849, %v911, %v913
        %v915 = vrot.slane %v544, 2
        %v916 = vrot.slane %v545, 2
        %v917 = vsel %vm849, %v915, %v916
        %v918 = vrot.slane %v546, 2
        %v919 = vsel %vm849, %v916, %v918
        %v920 = vrot.slane %v547, 2
        %v921 = vrot.slane %v548, 2
        %v922 = vsel %vm849, %v920, %v921
        %v923 = vrot.slane %v549, 2
        %v924 = vsel %vm849, %v921, %v923
        %v925 = vrot.slane %v550, 2
        %v926 = vrot.slane %v551, 2
        %v927 = vsel %vm849, %v925, %v926
        %v928 = vrot.slane %v552, 2
        %v929 = vsel %vm849, %v926, %v928
        %930 = vrot.lane.b32.xlu0 %v852, 6
        %v931 = vpop.permute.xlu0 %930
        %932 = vrot.lane.b32.xlu0 %v854, 6
        %v933 = vpop.permute.xlu0 %932
        %934 = vrot.lane.b32.xlu0 %v857, 6
        %v935 = vpop.permute.xlu0 %934
        %936 = vrot.lane.b32.xlu0 %v859, 6
        %v937 = vpop.permute.xlu0 %936
        %938 = vrot.lane.b32.xlu0 %v862, 6
        %v939 = vpop.permute.xlu0 %938
        %940 = vrot.lane.b32.xlu0 %v864, 6
        %v941 = vpop.permute.xlu0 %940
        %942 = vrot.lane.b32.xlu0 %v867, 6
        %v943 = vpop.permute.xlu0 %942
        %944 = vrot.lane.b32.xlu0 %v869, 6
        %v945 = vpop.permute.xlu0 %944
        %946 = vrot.lane.b32.xlu0 %v872, 6
        %v947 = vpop.permute.xlu0 %946
        %948 = vrot.lane.b32.xlu0 %v874, 6
        %v949 = vpop.permute.xlu0 %948
        %950 = vrot.lane.b32.xlu0 %v877, 6
        %v951 = vpop.permute.xlu0 %950
        %952 = vrot.lane.b32.xlu0 %v879, 6
        %v953 = vpop.permute.xlu0 %952
        %954 = vrot.lane.b32.xlu0 %v882, 6
        %v955 = vpop.permute.xlu0 %954
        %956 = vrot.lane.b32.xlu0 %v884, 6
        %v957 = vpop.permute.xlu0 %956
        %958 = vrot.lane.b32.xlu0 %v887, 6
        %v959 = vpop.permute.xlu0 %958
        %960 = vrot.lane.b32.xlu0 %v889, 6
        %v961 = vpop.permute.xlu0 %960
        %962 = vrot.lane.b32.xlu0 %v892, 6
        %v963 = vpop.permute.xlu0 %962
        %964 = vrot.lane.b32.xlu0 %v894, 6
        %v965 = vpop.permute.xlu0 %964
        %966 = vrot.lane.b32.xlu0 %v897, 6
        %v967 = vpop.permute.xlu0 %966
        %968 = vrot.lane.b32.xlu0 %v899, 6
        %v969 = vpop.permute.xlu0 %968
        %970 = vrot.lane.b32.xlu0 %v902, 6
        %v971 = vpop.permute.xlu0 %970
        %972 = vrot.lane.b32.xlu0 %v904, 6
        %v973 = vpop.permute.xlu0 %972
        %974 = vrot.lane.b32.xlu0 %v907, 6
        %v975 = vpop.permute.xlu0 %974
        %976 = vrot.lane.b32.xlu0 %v909, 6
        %v977 = vpop.permute.xlu0 %976
        %978 = vrot.lane.b32.xlu0 %v912, 6
        %v979 = vpop.permute.xlu0 %978
        %980 = vrot.lane.b32.xlu0 %v914, 6
        %v981 = vpop.permute.xlu0 %980
        %982 = vrot.lane.b32.xlu0 %v917, 6
        %v983 = vpop.permute.xlu0 %982
        %984 = vrot.lane.b32.xlu0 %v919, 6
        %v985 = vpop.permute.xlu0 %984
        %986 = vrot.lane.b32.xlu0 %v922, 6
        %v987 = vpop.permute.xlu0 %986
        %988 = vrot.lane.b32.xlu0 %v924, 6
        %v989 = vpop.permute.xlu0 %988
        %990 = vrot.lane.b32.xlu0 %v927, 6
        %v991 = vpop.permute.xlu0 %990
        %992 = vrot.lane.b32.xlu0 %v929, 6
        %v993 = vpop.permute.xlu0 %992
        %vm1026 = vcmask 72752
        %1027 = vst.msk [vmem:[#allocation3] sm:$0xff] %vm1026, %v931
        %1028 = vst.msk [vmem:[#allocation3 + $0x8] sm:$0xff] %vm1026, %v933
        %1029 = vst.msk [vmem:[#allocation3 + $0x10] sm:$0xff] %vm1026, %v935
        %1030 = vst.msk [vmem:[#allocation3 + $0x18] sm:$0xff] %vm1026, %v937
        %1031 = vst.msk [vmem:[#allocation3 + $0x20] sm:$0xff] %vm1026, %v939
        %1032 = vst.msk [vmem:[#allocation3 + $0x28] sm:$0xff] %vm1026, %v941
        %1033 = vst.msk [vmem:[#allocation3 + $0x30] sm:$0xff] %vm1026, %v943
        %1034 = vst.msk [vmem:[#allocation3 + $0x38] sm:$0xff] %vm1026, %v945
        %1035 = vst.msk [vmem:[#allocation3 + $0x40] sm:$0xff] %vm1026, %v947
        %1036 = vst.msk [vmem:[#allocation3 + $0x48] sm:$0xff] %vm1026, %v949
        %1037 = vst.msk [vmem:[#allocation3 + $0x50] sm:$0xff] %vm1026, %v951
        %1038 = vst.msk [vmem:[#allocation3 + $0x58] sm:$0xff] %vm1026, %v953
        %1039 = vst.msk [vmem:[#allocation3 + $0x60] sm:$0xff] %vm1026, %v955
        %1040 = vst.msk [vmem:[#allocation3 + $0x68] sm:$0xff] %vm1026, %v957
        %1041 = vst.msk [vmem:[#allocation3 + $0x70] sm:$0xff] %vm1026, %v959
        %1042 = vst.msk [vmem:[#allocation3 + $0x78] sm:$0xff] %vm1026, %v961
        %1043 = vst.msk [vmem:[#allocation3 + $0x80] sm:$0xff] %vm1026, %v963
        %1044 = vst.msk [vmem:[#allocation3 + $0x88] sm:$0xff] %vm1026, %v965
        %1045 = vst.msk [vmem:[#allocation3 + $0x90] sm:$0xff] %vm1026, %v967
        %1046 = vst.msk [vmem:[#allocation3 + $0x98] sm:$0xff] %vm1026, %v969
        %1047 = vst.msk [vmem:[#allocation3 + $0xa0] sm:$0xff] %vm1026, %v971
        %1048 = vst.msk [vmem:[#allocation3 + $0xa8] sm:$0xff] %vm1026, %v973
        %1049 = vst.msk [vmem:[#allocation3 + $0xb0] sm:$0xff] %vm1026, %v975
        %1050 = vst.msk [vmem:[#allocation3 + $0xb8] sm:$0xff] %vm1026, %v977
        %1051 = vst.msk [vmem:[#allocation3 + $0xc0] sm:$0xff] %vm1026, %v979
        %1052 = vst.msk [vmem:[#allocation3 + $0xc8] sm:$0xff] %vm1026, %v981
        %1053 = vst.msk [vmem:[#allocation3 + $0xd0] sm:$0xff] %vm1026, %v983
        %1054 = vst.msk [vmem:[#allocation3 + $0xd8] sm:$0xff] %vm1026, %v985
        %1055 = vst.msk [vmem:[#allocation3 + $0xe0] sm:$0xff] %vm1026, %v987
        %1056 = vst.msk [vmem:[#allocation3 + $0xe8] sm:$0xff] %vm1026, %v989
        %1057 = vst.msk [vmem:[#allocation3 + $0xf0] sm:$0xff] %vm1026, %v991
        %1058 = vst.msk [vmem:[#allocation3 + $0xf8] sm:$0xff] %vm1026, %v993
        %1061 = vrot.lane.b32.xlu0 %v508, 9
        %v1062 = vpop.permute.xlu0 %1061
        %1063 = vrot.lane.b32.xlu0 %v509, 9
        %v1064 = vpop.permute.xlu0 %1063
        %1065 = vrot.lane.b32.xlu0 %v511, 9
        %v1066 = vpop.permute.xlu0 %1065
        %1067 = vrot.lane.b32.xlu0 %v512, 9
        %v1068 = vpop.permute.xlu0 %1067
        %1069 = vrot.lane.b32.xlu0 %v514, 9
        %v1070 = vpop.permute.xlu0 %1069
        %1071 = vrot.lane.b32.xlu0 %v515, 9
        %v1072 = vpop.permute.xlu0 %1071
        %1073 = vrot.lane.b32.xlu0 %v517, 9
        %v1074 = vpop.permute.xlu0 %1073
        %1075 = vrot.lane.b32.xlu0 %v518, 9
        %v1076 = vpop.permute.xlu0 %1075
        %1077 = vrot.lane.b32.xlu0 %v520, 9
        %v1078 = vpop.permute.xlu0 %1077
        %1079 = vrot.lane.b32.xlu0 %v521, 9
        %v1080 = vpop.permute.xlu0 %1079
        %1081 = vrot.lane.b32.xlu0 %v523, 9
        %v1082 = vpop.permute.xlu0 %1081
        %1083 = vrot.lane.b32.xlu0 %v524, 9
        %v1084 = vpop.permute.xlu0 %1083
        %1085 = vrot.lane.b32.xlu0 %v526, 9
        %v1086 = vpop.permute.xlu0 %1085
        %1087 = vrot.lane.b32.xlu0 %v527, 9
        %v1088 = vpop.permute.xlu0 %1087
        %1089 = vrot.lane.b32.xlu0 %v529, 9
        %v1090 = vpop.permute.xlu0 %1089
        %1091 = vrot.lane.b32.xlu0 %v530, 9
        %v1092 = vpop.permute.xlu0 %1091
        %1093 = vrot.lane.b32.xlu0 %v532, 9
        %v1094 = vpop.permute.xlu0 %1093
        %1095 = vrot.lane.b32.xlu0 %v533, 9
        %v1096 = vpop.permute.xlu0 %1095
        %1097 = vrot.lane.b32.xlu0 %v535, 9
        %v1098 = vpop.permute.xlu0 %1097
        %1099 = vrot.lane.b32.xlu0 %v536, 9
        %v1100 = vpop.permute.xlu0 %1099
        %1101 = vrot.lane.b32.xlu0 %v538, 9
        %v1102 = vpop.permute.xlu0 %1101
        %1103 = vrot.lane.b32.xlu0 %v539, 9
        %v1104 = vpop.permute.xlu0 %1103
        %1105 = vrot.lane.b32.xlu0 %v541, 9
        %v1106 = vpop.permute.xlu0 %1105
        %1107 = vrot.lane.b32.xlu0 %v542, 9
        %v1108 = vpop.permute.xlu0 %1107
        %1109 = vrot.lane.b32.xlu0 %v544, 9
        %v1110 = vpop.permute.xlu0 %1109
        %1111 = vrot.lane.b32.xlu0 %v545, 9
        %v1112 = vpop.permute.xlu0 %1111
        %1113 = vrot.lane.b32.xlu0 %v547, 9
        %v1114 = vpop.permute.xlu0 %1113
        %1115 = vrot.lane.b32.xlu0 %v548, 9
        %v1116 = vpop.permute.xlu0 %1115
        %1117 = vrot.lane.b32.xlu0 %v550, 9
        %v1118 = vpop.permute.xlu0 %1117
        %1119 = vrot.lane.b32.xlu0 %v551, 9
        %v1120 = vpop.permute.xlu0 %1119
        %1121 = vrot.lane.b32.xlu0 %v553, 9
        %v1122 = vpop.permute.xlu0 %1121
        %1123 = vrot.lane.b32.xlu0 %v554, 9
        %v1124 = vpop.permute.xlu0 %1123
        %vm1157 = vcmask 97352
        %1158 = vst.msk [vmem:[#allocation3] sm:$0xff] %vm1157, %v1062
        %1159 = vst.msk [vmem:[#allocation3 + $0x8] sm:$0xff] %vm1157, %v1064
        %1160 = vst.msk [vmem:[#allocation3 + $0x10] sm:$0xff] %vm1157, %v1066
        %1161 = vst.msk [vmem:[#allocation3 + $0x18] sm:$0xff] %vm1157, %v1068
        %1162 = vst.msk [vmem:[#allocation3 + $0x20] sm:$0xff] %vm1157, %v1070
        %1163 = vst.msk [vmem:[#allocation3 + $0x28] sm:$0xff] %vm1157, %v1072
        %1164 = vst.msk [vmem:[#allocation3 + $0x30] sm:$0xff] %vm1157, %v1074
        %1165 = vst.msk [vmem:[#allocation3 + $0x38] sm:$0xff] %vm1157, %v1076
        %1166 = vst.msk [vmem:[#allocation3 + $0x40] sm:$0xff] %vm1157, %v1078
        %1167 = vst.msk [vmem:[#allocation3 + $0x48] sm:$0xff] %vm1157, %v1080
        %1168 = vst.msk [vmem:[#allocation3 + $0x50] sm:$0xff] %vm1157, %v1082
        %1169 = vst.msk [vmem:[#allocation3 + $0x58] sm:$0xff] %vm1157, %v1084
        %1170 = vst.msk [vmem:[#allocation3 + $0x60] sm:$0xff] %vm1157, %v1086
        %1171 = vst.msk [vmem:[#allocation3 + $0x68] sm:$0xff] %vm1157, %v1088
        %1172 = vst.msk [vmem:[#allocation3 + $0x70] sm:$0xff] %vm1157, %v1090
        %1173 = vst.msk [vmem:[#allocation3 + $0x78] sm:$0xff] %vm1157, %v1092
        %1174 = vst.msk [vmem:[#allocation3 + $0x80] sm:$0xff] %vm1157, %v1094
        %1175 = vst.msk [vmem:[#allocation3 + $0x88] sm:$0xff] %vm1157, %v1096
        %1176 = vst.msk [vmem:[#allocation3 + $0x90] sm:$0xff] %vm1157, %v1098
        %1177 = vst.msk [vmem:[#allocation3 + $0x98] sm:$0xff] %vm1157, %v1100
        %1178 = vst.msk [vmem:[#allocation3 + $0xa0] sm:$0xff] %vm1157, %v1102
        %1179 = vst.msk [vmem:[#allocation3 + $0xa8] sm:$0xff] %vm1157, %v1104
        %1180 = vst.msk [vmem:[#allocation3 + $0xb0] sm:$0xff] %vm1157, %v1106
        %1181 = vst.msk [vmem:[#allocation3 + $0xb8] sm:$0xff] %vm1157, %v1108
        %1182 = vst.msk [vmem:[#allocation3 + $0xc0] sm:$0xff] %vm1157, %v1110
        %1183 = vst.msk [vmem:[#allocation3 + $0xc8] sm:$0xff] %vm1157, %v1112
        %1184 = vst.msk [vmem:[#allocation3 + $0xd0] sm:$0xff] %vm1157, %v1114
        %1185 = vst.msk [vmem:[#allocation3 + $0xd8] sm:$0xff] %vm1157, %v1116
        %1186 = vst.msk [vmem:[#allocation3 + $0xe0] sm:$0xff] %vm1157, %v1118
        %1187 = vst.msk [vmem:[#allocation3 + $0xe8] sm:$0xff] %vm1157, %v1120
        %1188 = vst.msk [vmem:[#allocation3 + $0xf0] sm:$0xff] %vm1157, %v1122
        %1189 = vst.msk [vmem:[#allocation3 + $0xf8] sm:$0xff] %vm1157, %v1124
        %v1191 = vrot.slane %v553, 1
        %v1192 = vrot.slane %v554, 1
        %v1193 = vsel %vm639, %v1191, %v1192
        %v1194 = vrot.slane %v555, 1
        %v1195 = vsel %vm639, %v1192, %v1194
        %1196 = vrot.lane.b32.xlu0 %v647, 12
        %v1197 = vpop.permute.xlu0 %1196
        %1198 = vrot.lane.b32.xlu0 %v649, 12
        %v1199 = vpop.permute.xlu0 %1198
        %1200 = vrot.lane.b32.xlu0 %v652, 12
        %v1201 = vpop.permute.xlu0 %1200
        %1202 = vrot.lane.b32.xlu0 %v654, 12
        %v1203 = vpop.permute.xlu0 %1202
        %1204 = vrot.lane.b32.xlu0 %v657, 12
        %v1205 = vpop.permute.xlu0 %1204
        %1206 = vrot.lane.b32.xlu0 %v659, 12
        %v1207 = vpop.permute.xlu0 %1206
        %1208 = vrot.lane.b32.xlu0 %v662, 12
        %v1209 = vpop.permute.xlu0 %1208
        %1210 = vrot.lane.b32.xlu0 %v664, 12
        %v1211 = vpop.permute.xlu0 %1210
        %1212 = vrot.lane.b32.xlu0 %v667, 12
        %v1213 = vpop.permute.xlu0 %1212
        %1214 = vrot.lane.b32.xlu0 %v669, 12
        %v1215 = vpop.permute.xlu0 %1214
        %1216 = vrot.lane.b32.xlu0 %v672, 12
        %v1217 = vpop.permute.xlu0 %1216
        %1218 = vrot.lane.b32.xlu0 %v674, 12
        %v1219 = vpop.permute.xlu0 %1218
        %1220 = vrot.lane.b32.xlu0 %v677, 12
        %v1221 = vpop.permute.xlu0 %1220
        %1222 = vrot.lane.b32.xlu0 %v679, 12
        %v1223 = vpop.permute.xlu0 %1222
        %1224 = vrot.lane.b32.xlu0 %v682, 12
        %v1225 = vpop.permute.xlu0 %1224
        %1226 = vrot.lane.b32.xlu0 %v684, 12
        %v1227 = vpop.permute.xlu0 %1226
        %1228 = vrot.lane.b32.xlu0 %v687, 12
        %v1229 = vpop.permute.xlu0 %1228
        %1230 = vrot.lane.b32.xlu0 %v689, 12
        %v1231 = vpop.permute.xlu0 %1230
        %1232 = vrot.lane.b32.xlu0 %v692, 12
        %v1233 = vpop.permute.xlu0 %1232
        %1234 = vrot.lane.b32.xlu0 %v694, 12
        %v1235 = vpop.permute.xlu0 %1234
        %1236 = vrot.lane.b32.xlu0 %v697, 12
        %v1237 = vpop.permute.xlu0 %1236
        %1238 = vrot.lane.b32.xlu0 %v699, 12
        %v1239 = vpop.permute.xlu0 %1238
        %1240 = vrot.lane.b32.xlu0 %v702, 12
        %v1241 = vpop.permute.xlu0 %1240
        %1242 = vrot.lane.b32.xlu0 %v704, 12
        %v1243 = vpop.permute.xlu0 %1242
        %1244 = vrot.lane.b32.xlu0 %v707, 12
        %v1245 = vpop.permute.xlu0 %1244
        %1246 = vrot.lane.b32.xlu0 %v709, 12
        %v1247 = vpop.permute.xlu0 %1246
        %1248 = vrot.lane.b32.xlu0 %v712, 12
        %v1249 = vpop.permute.xlu0 %1248
        %1250 = vrot.lane.b32.xlu0 %v714, 12
        %v1251 = vpop.permute.xlu0 %1250
        %1252 = vrot.lane.b32.xlu0 %v717, 12
        %v1253 = vpop.permute.xlu0 %1252
        %1254 = vrot.lane.b32.xlu0 %v719, 12
        %v1255 = vpop.permute.xlu0 %1254
        %1256 = vrot.lane.b32.xlu0 %v1193, 12
        %v1257 = vpop.permute.xlu0 %1256
        %1258 = vrot.lane.b32.xlu0 %v1195, 12
        %v1259 = vpop.permute.xlu0 %1258
        %vm1292 = vcmask 121952
        %1293 = vst.msk [vmem:[#allocation3] sm:$0xff] %vm1292, %v1197
        %1294 = vst.msk [vmem:[#allocation3 + $0x8] sm:$0xff] %vm1292, %v1199
        %1295 = vst.msk [vmem:[#allocation3 + $0x10] sm:$0xff] %vm1292, %v1201
        %1296 = vst.msk [vmem:[#allocation3 + $0x18] sm:$0xff] %vm1292, %v1203
        %1297 = vst.msk [vmem:[#allocation3 + $0x20] sm:$0xff] %vm1292, %v1205
        %1298 = vst.msk [vmem:[#allocation3 + $0x28] sm:$0xff] %vm1292, %v1207
        %1299 = vst.msk [vmem:[#allocation3 + $0x30] sm:$0xff] %vm1292, %v1209
        %1300 = vst.msk [vmem:[#allocation3 + $0x38] sm:$0xff] %vm1292, %v1211
        %1301 = vst.msk [vmem:[#allocation3 + $0x40] sm:$0xff] %vm1292, %v1213
        %1302 = vst.msk [vmem:[#allocation3 + $0x48] sm:$0xff] %vm1292, %v1215
        %1303 = vst.msk [vmem:[#allocation3 + $0x50] sm:$0xff] %vm1292, %v1217
        %1304 = vst.msk [vmem:[#allocation3 + $0x58] sm:$0xff] %vm1292, %v1219
        %1305 = vst.msk [vmem:[#allocation3 + $0x60] sm:$0xff] %vm1292, %v1221
        %1306 = vst.msk [vmem:[#allocation3 + $0x68] sm:$0xff] %vm1292, %v1223
        %1307 = vst.msk [vmem:[#allocation3 + $0x70] sm:$0xff] %vm1292, %v1225
        %1308 = vst.msk [vmem:[#allocation3 + $0x78] sm:$0xff] %vm1292, %v1227
        %1309 = vst.msk [vmem:[#allocation3 + $0x80] sm:$0xff] %vm1292, %v1229
        %1310 = vst.msk [vmem:[#allocation3 + $0x88] sm:$0xff] %vm1292, %v1231
        %1311 = vst.msk [vmem:[#allocation3 + $0x90] sm:$0xff] %vm1292, %v1233
        %1312 = vst.msk [vmem:[#allocation3 + $0x98] sm:$0xff] %vm1292, %v1235
        %1313 = vst.msk [vmem:[#allocation3 + $0xa0] sm:$0xff] %vm1292, %v1237
        %1314 = vst.msk [vmem:[#allocation3 + $0xa8] sm:$0xff] %vm1292, %v1239
        %1315 = vst.msk [vmem:[#allocation3 + $0xb0] sm:$0xff] %vm1292, %v1241
        %1316 = vst.msk [vmem:[#allocation3 + $0xb8] sm:$0xff] %vm1292, %v1243
        %1317 = vst.msk [vmem:[#allocation3 + $0xc0] sm:$0xff] %vm1292, %v1245
        %1318 = vst.msk [vmem:[#allocation3 + $0xc8] sm:$0xff] %vm1292, %v1247
        %1319 = vst.msk [vmem:[#allocation3 + $0xd0] sm:$0xff] %vm1292, %v1249
        %1320 = vst.msk [vmem:[#allocation3 + $0xd8] sm:$0xff] %vm1292, %v1251
        %1321 = vst.msk [vmem:[#allocation3 + $0xe0] sm:$0xff] %vm1292, %v1253
        %1322 = vst.msk [vmem:[#allocation3 + $0xe8] sm:$0xff] %vm1292, %v1255
        %1323 = vst.msk [vmem:[#allocation3 + $0xf0] sm:$0xff] %vm1292, %v1257
        %1324 = vst.msk [vmem:[#allocation3 + $0xf8] sm:$0xff] %vm1292, %v1259
        %v1325 = vrot.slane %v553, 2
        %v1326 = vrot.slane %v554, 2
        %v1327 = vsel %vm849, %v1325, %v1326
        %v1328 = vrot.slane %v555, 2
        %v1329 = vsel %vm849, %v1326, %v1328
        %1330 = vrot.lane.b32.xlu0 %v857, 15
        %v1331 = vpop.permute.xlu0 %1330
        %1332 = vrot.lane.b32.xlu0 %v859, 15
        %v1333 = vpop.permute.xlu0 %1332
        %1334 = vrot.lane.b32.xlu0 %v862, 15
        %v1335 = vpop.permute.xlu0 %1334
        %1336 = vrot.lane.b32.xlu0 %v864, 15
        %v1337 = vpop.permute.xlu0 %1336
        %1338 = vrot.lane.b32.xlu0 %v867, 15
        %v1339 = vpop.permute.xlu0 %1338
        %1340 = vrot.lane.b32.xlu0 %v869, 15
        %v1341 = vpop.permute.xlu0 %1340
        %1342 = vrot.lane.b32.xlu0 %v872, 15
        %v1343 = vpop.permute.xlu0 %1342
        %1344 = vrot.lane.b32.xlu0 %v874, 15
        %v1345 = vpop.permute.xlu0 %1344
        %1346 = vrot.lane.b32.xlu0 %v877, 15
        %v1347 = vpop.permute.xlu0 %1346
        %1348 = vrot.lane.b32.xlu0 %v879, 15
        %v1349 = vpop.permute.xlu0 %1348
        %1350 = vrot.lane.b32.xlu0 %v882, 15
        %v1351 = vpop.permute.xlu0 %1350
        %1352 = vrot.lane.b32.xlu0 %v884, 15
        %v1353 = vpop.permute.xlu0 %1352
        %1354 = vrot.lane.b32.xlu0 %v887, 15
        %v1355 = vpop.permute.xlu0 %1354
        %1356 = vrot.lane.b32.xlu0 %v889, 15
        %v1357 = vpop.permute.xlu0 %1356
        %1358 = vrot.lane.b32.xlu0 %v892, 15
        %v1359 = vpop.permute.xlu0 %1358
        %1360 = vrot.lane.b32.xlu0 %v894, 15
        %v1361 = vpop.permute.xlu0 %1360
        %1362 = vrot.lane.b32.xlu0 %v897, 15
        %v1363 = vpop.permute.xlu0 %1362
        %1364 = vrot.lane.b32.xlu0 %v899, 15
        %v1365 = vpop.permute.xlu0 %1364
        %1366 = vrot.lane.b32.xlu0 %v902, 15
        %v1367 = vpop.permute.xlu0 %1366
        %1368 = vrot.lane.b32.xlu0 %v904, 15
        %v1369 = vpop.permute.xlu0 %1368
        %1370 = vrot.lane.b32.xlu0 %v907, 15
        %v1371 = vpop.permute.xlu0 %1370
        %1372 = vrot.lane.b32.xlu0 %v909, 15
        %v1373 = vpop.permute.xlu0 %1372
        %1374 = vrot.lane.b32.xlu0 %v912, 15
        %v1375 = vpop.permute.xlu0 %1374
        %1376 = vrot.lane.b32.xlu0 %v914, 15
        %v1377 = vpop.permute.xlu0 %1376
        %1378 = vrot.lane.b32.xlu0 %v917, 15
        %v1379 = vpop.permute.xlu0 %1378
        %1380 = vrot.lane.b32.xlu0 %v919, 15
        %v1381 = vpop.permute.xlu0 %1380
        %1382 = vrot.lane.b32.xlu0 %v922, 15
        %v1383 = vpop.permute.xlu0 %1382
        %1384 = vrot.lane.b32.xlu0 %v924, 15
        %v1385 = vpop.permute.xlu0 %1384
        %1386 = vrot.lane.b32.xlu0 %v927, 15
        %v1387 = vpop.permute.xlu0 %1386
        %1388 = vrot.lane.b32.xlu0 %v929, 15
        %v1389 = vpop.permute.xlu0 %1388
        %1390 = vrot.lane.b32.xlu0 %v1327, 15
        %v1391 = vpop.permute.xlu0 %1390
        %1392 = vrot.lane.b32.xlu0 %v1329, 15
        %v1393 = vpop.permute.xlu0 %1392
        %vm1426 = vcmask 146552
        %1427 = vst.msk [vmem:[#allocation3] sm:$0xff] %vm1426, %v1331
        %1428 = vst.msk [vmem:[#allocation3 + $0x8] sm:$0xff] %vm1426, %v1333
        %1429 = vst.msk [vmem:[#allocation3 + $0x10] sm:$0xff] %vm1426, %v1335
        %1430 = vst.msk [vmem:[#allocation3 + $0x18] sm:$0xff] %vm1426, %v1337
        %1431 = vst.msk [vmem:[#allocation3 + $0x20] sm:$0xff] %vm1426, %v1339
        %1432 = vst.msk [vmem:[#allocation3 + $0x28] sm:$0xff] %vm1426, %v1341
        %1433 = vst.msk [vmem:[#allocation3 + $0x30] sm:$0xff] %vm1426, %v1343
        %1434 = vst.msk [vmem:[#allocation3 + $0x38] sm:$0xff] %vm1426, %v1345
        %1435 = vst.msk [vmem:[#allocation3 + $0x40] sm:$0xff] %vm1426, %v1347
        %1436 = vst.msk [vmem:[#allocation3 + $0x48] sm:$0xff] %vm1426, %v1349
        %1437 = vst.msk [vmem:[#allocation3 + $0x50] sm:$0xff] %vm1426, %v1351
        %1438 = vst.msk [vmem:[#allocation3 + $0x58] sm:$0xff] %vm1426, %v1353
        %1439 = vst.msk [vmem:[#allocation3 + $0x60] sm:$0xff] %vm1426, %v1355
        %1440 = vst.msk [vmem:[#allocation3 + $0x68] sm:$0xff] %vm1426, %v1357
        %1441 = vst.msk [vmem:[#allocation3 + $0x70] sm:$0xff] %vm1426, %v1359
        %1442 = vst.msk [vmem:[#allocation3 + $0x78] sm:$0xff] %vm1426, %v1361
        %1443 = vst.msk [vmem:[#allocation3 + $0x80] sm:$0xff] %vm1426, %v1363
        %1444 = vst.msk [vmem:[#allocation3 + $0x88] sm:$0xff] %vm1426, %v1365
        %1445 = vst.msk [vmem:[#allocation3 + $0x90] sm:$0xff] %vm1426, %v1367
        %1446 = vst.msk [vmem:[#allocation3 + $0x98] sm:$0xff] %vm1426, %v1369
        %1447 = vst.msk [vmem:[#allocation3 + $0xa0] sm:$0xff] %vm1426, %v1371
        %1448 = vst.msk [vmem:[#allocation3 + $0xa8] sm:$0xff] %vm1426, %v1373
        %1449 = vst.msk [vmem:[#allocation3 + $0xb0] sm:$0xff] %vm1426, %v1375
        %1450 = vst.msk [vmem:[#allocation3 + $0xb8] sm:$0xff] %vm1426, %v1377
        %1451 = vst.msk [vmem:[#allocation3 + $0xc0] sm:$0xff] %vm1426, %v1379
        %1452 = vst.msk [vmem:[#allocation3 + $0xc8] sm:$0xff] %vm1426, %v1381
        %1453 = vst.msk [vmem:[#allocation3 + $0xd0] sm:$0xff] %vm1426, %v1383
        %1454 = vst.msk [vmem:[#allocation3 + $0xd8] sm:$0xff] %vm1426, %v1385
        %1455 = vst.msk [vmem:[#allocation3 + $0xe0] sm:$0xff] %vm1426, %v1387
        %1456 = vst.msk [vmem:[#allocation3 + $0xe8] sm:$0xff] %vm1426, %v1389
        %1457 = vst.msk [vmem:[#allocation3 + $0xf0] sm:$0xff] %vm1426, %v1391
        %1458 = vst.msk [vmem:[#allocation3 + $0xf8] sm:$0xff] %vm1426, %v1393
        %1461 = vrot.lane.b32.xlu0 %v511, 18
        %v1462 = vpop.permute.xlu0 %1461
        %1463 = vrot.lane.b32.xlu0 %v512, 18
        %v1464 = vpop.permute.xlu0 %1463
        %1465 = vrot.lane.b32.xlu0 %v514, 18
        %v1466 = vpop.permute.xlu0 %1465
        %1467 = vrot.lane.b32.xlu0 %v515, 18
        %v1468 = vpop.permute.xlu0 %1467
        %1469 = vrot.lane.b32.xlu0 %v517, 18
        %v1470 = vpop.permute.xlu0 %1469
        %1471 = vrot.lane.b32.xlu0 %v518, 18
        %v1472 = vpop.permute.xlu0 %1471
        %1473 = vrot.lane.b32.xlu0 %v520, 18
        %v1474 = vpop.permute.xlu0 %1473
        %1475 = vrot.lane.b32.xlu0 %v521, 18
        %v1476 = vpop.permute.xlu0 %1475
        %1477 = vrot.lane.b32.xlu0 %v523, 18
        %v1478 = vpop.permute.xlu0 %1477
        %1479 = vrot.lane.b32.xlu0 %v524, 18
        %v1480 = vpop.permute.xlu0 %1479
        %1481 = vrot.lane.b32.xlu0 %v526, 18
        %v1482 = vpop.permute.xlu0 %1481
        %1483 = vrot.lane.b32.xlu0 %v527, 18
        %v1484 = vpop.permute.xlu0 %1483
        %1485 = vrot.lane.b32.xlu0 %v529, 18
        %v1486 = vpop.permute.xlu0 %1485
        %1487 = vrot.lane.b32.xlu0 %v530, 18
        %v1488 = vpop.permute.xlu0 %1487
        %1489 = vrot.lane.b32.xlu0 %v532, 18
        %v1490 = vpop.permute.xlu0 %1489
        %1491 = vrot.lane.b32.xlu0 %v533, 18
        %v1492 = vpop.permute.xlu0 %1491
        %1493 = vrot.lane.b32.xlu0 %v535, 18
        %v1494 = vpop.permute.xlu0 %1493
        %1495 = vrot.lane.b32.xlu0 %v536, 18
        %v1496 = vpop.permute.xlu0 %1495
        %1497 = vrot.lane.b32.xlu0 %v538, 18
        %v1498 = vpop.permute.xlu0 %1497
        %1499 = vrot.lane.b32.xlu0 %v539, 18
        %v1500 = vpop.permute.xlu0 %1499
        %1501 = vrot.lane.b32.xlu0 %v541, 18
        %v1502 = vpop.permute.xlu0 %1501
        %1503 = vrot.lane.b32.xlu0 %v542, 18
        %v1504 = vpop.permute.xlu0 %1503
        %1505 = vrot.lane.b32.xlu0 %v544, 18
        %v1506 = vpop.permute.xlu0 %1505
        %1507 = vrot.lane.b32.xlu0 %v545, 18
        %v1508 = vpop.permute.xlu0 %1507
        %1509 = vrot.lane.b32.xlu0 %v547, 18
        %v1510 = vpop.permute.xlu0 %1509
        %1511 = vrot.lane.b32.xlu0 %v548, 18
        %v1512 = vpop.permute.xlu0 %1511
        %1513 = vrot.lane.b32.xlu0 %v550, 18
        %v1514 = vpop.permute.xlu0 %1513
        %1515 = vrot.lane.b32.xlu0 %v551, 18
        %v1516 = vpop.permute.xlu0 %1515
        %1517 = vrot.lane.b32.xlu0 %v553, 18
        %v1518 = vpop.permute.xlu0 %1517
        %1519 = vrot.lane.b32.xlu0 %v554, 18
        %v1520 = vpop.permute.xlu0 %1519
        %1521 = vrot.lane.b32.xlu0 %v556, 18
        %v1522 = vpop.permute.xlu0 %1521
        %1523 = vrot.lane.b32.xlu0 %v557, 18
        %v1524 = vpop.permute.xlu0 %1523
        %vm1557 = vcmask 171152
        %1558 = vst.msk [vmem:[#allocation3] sm:$0xff] %vm1557, %v1462
        %1559 = vst.msk [vmem:[#allocation3 + $0x8] sm:$0xff] %vm1557, %v1464
        %1560 = vst.msk [vmem:[#allocation3 + $0x10] sm:$0xff] %vm1557, %v1466
        %1561 = vst.msk [vmem:[#allocation3 + $0x18] sm:$0xff] %vm1557, %v1468
        %1562 = vst.msk [vmem:[#allocation3 + $0x20] sm:$0xff] %vm1557, %v1470
        %1563 = vst.msk [vmem:[#allocation3 + $0x28] sm:$0xff] %vm1557, %v1472
        %1564 = vst.msk [vmem:[#allocation3 + $0x30] sm:$0xff] %vm1557, %v1474
        %1565 = vst.msk [vmem:[#allocation3 + $0x38] sm:$0xff] %vm1557, %v1476
        %1566 = vst.msk [vmem:[#allocation3 + $0x40] sm:$0xff] %vm1557, %v1478
        %1567 = vst.msk [vmem:[#allocation3 + $0x48] sm:$0xff] %vm1557, %v1480
        %1568 = vst.msk [vmem:[#allocation3 + $0x50] sm:$0xff] %vm1557, %v1482
        %1569 = vst.msk [vmem:[#allocation3 + $0x58] sm:$0xff] %vm1557, %v1484
        %1570 = vst.msk [vmem:[#allocation3 + $0x60] sm:$0xff] %vm1557, %v1486
        %1571 = vst.msk [vmem:[#allocation3 + $0x68] sm:$0xff] %vm1557, %v1488
        %1572 = vst.msk [vmem:[#allocation3 + $0x70] sm:$0xff] %vm1557, %v1490
        %1573 = vst.msk [vmem:[#allocation3 + $0x78] sm:$0xff] %vm1557, %v1492
        %1574 = vst.msk [vmem:[#allocation3 + $0x80] sm:$0xff] %vm1557, %v1494
        %1575 = vst.msk [vmem:[#allocation3 + $0x88] sm:$0xff] %vm1557, %v1496
        %1576 = vst.msk [vmem:[#allocation3 + $0x90] sm:$0xff] %vm1557, %v1498
        %1577 = vst.msk [vmem:[#allocation3 + $0x98] sm:$0xff] %vm1557, %v1500
        %1578 = vst.msk [vmem:[#allocation3 + $0xa0] sm:$0xff] %vm1557, %v1502
        %1579 = vst.msk [vmem:[#allocation3 + $0xa8] sm:$0xff] %vm1557, %v1504
        %1580 = vst.msk [vmem:[#allocation3 + $0xb0] sm:$0xff] %vm1557, %v1506
        %1581 = vst.msk [vmem:[#allocation3 + $0xb8] sm:$0xff] %vm1557, %v1508
        %1582 = vst.msk [vmem:[#allocation3 + $0xc0] sm:$0xff] %vm1557, %v1510
        %1583 = vst.msk [vmem:[#allocation3 + $0xc8] sm:$0xff] %vm1557, %v1512
        %1584 = vst.msk [vmem:[#allocation3 + $0xd0] sm:$0xff] %vm1557, %v1514
        %1585 = vst.msk [vmem:[#allocation3 + $0xd8] sm:$0xff] %vm1557, %v1516
        %1586 = vst.msk [vmem:[#allocation3 + $0xe0] sm:$0xff] %vm1557, %v1518
        %1587 = vst.msk [vmem:[#allocation3 + $0xe8] sm:$0xff] %vm1557, %v1520
        %1588 = vst.msk [vmem:[#allocation3 + $0xf0] sm:$0xff] %vm1557, %v1522
        %1589 = vst.msk [vmem:[#allocation3 + $0xf8] sm:$0xff] %vm1557, %v1524
        %v1591 = vrot.slane %v556, 1
        %v1592 = vrot.slane %v557, 1
        %v1593 = vsel %vm639, %v1591, %v1592
        %v1594 = vrot.slane %v558, 1
        %v1595 = vsel %vm639, %v1592, %v1594
        %1596 = vrot.lane.b32.xlu0 %v652, 21
        %v1597 = vpop.permute.xlu0 %1596
        %1598 = vrot.lane.b32.xlu0 %v654, 21
        %v1599 = vpop.permute.xlu0 %1598
        %1600 = vrot.lane.b32.xlu0 %v657, 21
        %v1601 = vpop.permute.xlu0 %1600
        %1602 = vrot.lane.b32.xlu0 %v659, 21
        %v1603 = vpop.permute.xlu0 %1602
        %1604 = vrot.lane.b32.xlu0 %v662, 21
        %v1605 = vpop.permute.xlu0 %1604
        %1606 = vrot.lane.b32.xlu0 %v664, 21
        %v1607 = vpop.permute.xlu0 %1606
        %1608 = vrot.lane.b32.xlu0 %v667, 21
        %v1609 = vpop.permute.xlu0 %1608
        %1610 = vrot.lane.b32.xlu0 %v669, 21
        %v1611 = vpop.permute.xlu0 %1610
        %1612 = vrot.lane.b32.xlu0 %v672, 21
        %v1613 = vpop.permute.xlu0 %1612
        %1614 = vrot.lane.b32.xlu0 %v674, 21
        %v1615 = vpop.permute.xlu0 %1614
        %1616 = vrot.lane.b32.xlu0 %v677, 21
        %v1617 = vpop.permute.xlu0 %1616
        %1618 = vrot.lane.b32.xlu0 %v679, 21
        %v1619 = vpop.permute.xlu0 %1618
        %1620 = vrot.lane.b32.xlu0 %v682, 21
        %v1621 = vpop.permute.xlu0 %1620
        %1622 = vrot.lane.b32.xlu0 %v684, 21
        %v1623 = vpop.permute.xlu0 %1622
        %1624 = vrot.lane.b32.xlu0 %v687, 21
        %v1625 = vpop.permute.xlu0 %1624
        %1626 = vrot.lane.b32.xlu0 %v689, 21
        %v1627 = vpop.permute.xlu0 %1626
        %1628 = vrot.lane.b32.xlu0 %v692, 21
        %v1629 = vpop.permute.xlu0 %1628
        %1630 = vrot.lane.b32.xlu0 %v694, 21
        %v1631 = vpop.permute.xlu0 %1630
        %1632 = vrot.lane.b32.xlu0 %v697, 21
        %v1633 = vpop.permute.xlu0 %1632
        %1634 = vrot.lane.b32.xlu0 %v699, 21
        %v1635 = vpop.permute.xlu0 %1634
        %1636 = vrot.lane.b32.xlu0 %v702, 21
        %v1637 = vpop.permute.xlu0 %1636
        %1638 = vrot.lane.b32.xlu0 %v704, 21
        %v1639 = vpop.permute.xlu0 %1638
        %1640 = vrot.lane.b32.xlu0 %v707, 21
        %v1641 = vpop.permute.xlu0 %1640
        %1642 = vrot.lane.b32.xlu0 %v709, 21
        %v1643 = vpop.permute.xlu0 %1642
        %1644 = vrot.lane.b32.xlu0 %v712, 21
        %v1645 = vpop.permute.xlu0 %1644
        %1646 = vrot.lane.b32.xlu0 %v714, 21
        %v1647 = vpop.permute.xlu0 %1646
        %1648 = vrot.lane.b32.xlu0 %v717, 21
        %v1649 = vpop.permute.xlu0 %1648
        %1650 = vrot.lane.b32.xlu0 %v719, 21
        %v1651 = vpop.permute.xlu0 %1650
        %1652 = vrot.lane.b32.xlu0 %v1193, 21
        %v1653 = vpop.permute.xlu0 %1652
        %1654 = vrot.lane.b32.xlu0 %v1195, 21
        %v1655 = vpop.permute.xlu0 %1654
        %1656 = vrot.lane.b32.xlu0 %v1593, 21
        %v1657 = vpop.permute.xlu0 %1656
        %1658 = vrot.lane.b32.xlu0 %v1595, 21
        %v1659 = vpop.permute.xlu0 %1658
        %vm1692 = vcmask 195752
        %1693 = vst.msk [vmem:[#allocation3] sm:$0xff] %vm1692, %v1597
        %1694 = vst.msk [vmem:[#allocation3 + $0x8] sm:$0xff] %vm1692, %v1599
        %1695 = vst.msk [vmem:[#allocation3 + $0x10] sm:$0xff] %vm1692, %v1601
        %1696 = vst.msk [vmem:[#allocation3 + $0x18] sm:$0xff] %vm1692, %v1603
        %1697 = vst.msk [vmem:[#allocation3 + $0x20] sm:$0xff] %vm1692, %v1605
        %1698 = vst.msk [vmem:[#allocation3 + $0x28] sm:$0xff] %vm1692, %v1607
        %1699 = vst.msk [vmem:[#allocation3 + $0x30] sm:$0xff] %vm1692, %v1609
        %1700 = vst.msk [vmem:[#allocation3 + $0x38] sm:$0xff] %vm1692, %v1611
        %1701 = vst.msk [vmem:[#allocation3 + $0x40] sm:$0xff] %vm1692, %v1613
        %1702 = vst.msk [vmem:[#allocation3 + $0x48] sm:$0xff] %vm1692, %v1615
        %1703 = vst.msk [vmem:[#allocation3 + $0x50] sm:$0xff] %vm1692, %v1617
        %1704 = vst.msk [vmem:[#allocation3 + $0x58] sm:$0xff] %vm1692, %v1619
        %1705 = vst.msk [vmem:[#allocation3 + $0x60] sm:$0xff] %vm1692, %v1621
        %1706 = vst.msk [vmem:[#allocation3 + $0x68] sm:$0xff] %vm1692, %v1623
        %1707 = vst.msk [vmem:[#allocation3 + $0x70] sm:$0xff] %vm1692, %v1625
        %1708 = vst.msk [vmem:[#allocation3 + $0x78] sm:$0xff] %vm1692, %v1627
        %1709 = vst.msk [vmem:[#allocation3 + $0x80] sm:$0xff] %vm1692, %v1629
        %1710 = vst.msk [vmem:[#allocation3 + $0x88] sm:$0xff] %vm1692, %v1631
        %1711 = vst.msk [vmem:[#allocation3 + $0x90] sm:$0xff] %vm1692, %v1633
        %1712 = vst.msk [vmem:[#allocation3 + $0x98] sm:$0xff] %vm1692, %v1635
        %1713 = vst.msk [vmem:[#allocation3 + $0xa0] sm:$0xff] %vm1692, %v1637
        %1714 = vst.msk [vmem:[#allocation3 + $0xa8] sm:$0xff] %vm1692, %v1639
        %1715 = vst.msk [vmem:[#allocation3 + $0xb0] sm:$0xff] %vm1692, %v1641
        %1716 = vst.msk [vmem:[#allocation3 + $0xb8] sm:$0xff] %vm1692, %v1643
        %1717 = vst.msk [vmem:[#allocation3 + $0xc0] sm:$0xff] %vm1692, %v1645
        %1718 = vst.msk [vmem:[#allocation3 + $0xc8] sm:$0xff] %vm1692, %v1647
        %1719 = vst.msk [vmem:[#allocation3 + $0xd0] sm:$0xff] %vm1692, %v1649
        %1720 = vst.msk [vmem:[#allocation3 + $0xd8] sm:$0xff] %vm1692, %v1651
        %1721 = vst.msk [vmem:[#allocation3 + $0xe0] sm:$0xff] %vm1692, %v1653
        %1722 = vst.msk [vmem:[#allocation3 + $0xe8] sm:$0xff] %vm1692, %v1655
        %1723 = vst.msk [vmem:[#allocation3 + $0xf0] sm:$0xff] %vm1692, %v1657
        %1724 = vst.msk [vmem:[#allocation3 + $0xf8] sm:$0xff] %vm1692, %v1659
        %v1725 = vrot.slane %v556, 2
        %v1726 = vrot.slane %v557, 2
        %v1727 = vsel %vm849, %v1725, %v1726
        %v1728 = vrot.slane %v558, 2
        %v1729 = vsel %vm849, %v1726, %v1728
        %1730 = vrot.lane.b32.xlu0 %v862, 24
        %v1731 = vpop.permute.xlu0 %1730
        %1732 = vrot.lane.b32.xlu0 %v864, 24
        %v1733 = vpop.permute.xlu0 %1732
        %1734 = vrot.lane.b32.xlu0 %v867, 24
        %v1735 = vpop.permute.xlu0 %1734
        %1736 = vrot.lane.b32.xlu0 %v869, 24
        %v1737 = vpop.permute.xlu0 %1736
        %1738 = vrot.lane.b32.xlu0 %v872, 24
        %v1739 = vpop.permute.xlu0 %1738
        %1740 = vrot.lane.b32.xlu0 %v874, 24
        %v1741 = vpop.permute.xlu0 %1740
        %1742 = vrot.lane.b32.xlu0 %v877, 24
        %v1743 = vpop.permute.xlu0 %1742
        %1744 = vrot.lane.b32.xlu0 %v879, 24
        %v1745 = vpop.permute.xlu0 %1744
        %1746 = vrot.lane.b32.xlu0 %v882, 24
        %v1747 = vpop.permute.xlu0 %1746
        %1748 = vrot.lane.b32.xlu0 %v884, 24
        %v1749 = vpop.permute.xlu0 %1748
        %1750 = vrot.lane.b32.xlu0 %v887, 24
        %v1751 = vpop.permute.xlu0 %1750
        %1752 = vrot.lane.b32.xlu0 %v889, 24
        %v1753 = vpop.permute.xlu0 %1752
        %1754 = vrot.lane.b32.xlu0 %v892, 24
        %v1755 = vpop.permute.xlu0 %1754
        %1756 = vrot.lane.b32.xlu0 %v894, 24
        %v1757 = vpop.permute.xlu0 %1756
        %1758 = vrot.lane.b32.xlu0 %v897, 24
        %v1759 = vpop.permute.xlu0 %1758
        %1760 = vrot.lane.b32.xlu0 %v899, 24
        %v1761 = vpop.permute.xlu0 %1760
        %1762 = vrot.lane.b32.xlu0 %v902, 24
        %v1763 = vpop.permute.xlu0 %1762
        %1764 = vrot.lane.b32.xlu0 %v904, 24
        %v1765 = vpop.permute.xlu0 %1764
        %1766 = vrot.lane.b32.xlu0 %v907, 24
        %v1767 = vpop.permute.xlu0 %1766
        %1768 = vrot.lane.b32.xlu0 %v909, 24
        %v1769 = vpop.permute.xlu0 %1768
        %1770 = vrot.lane.b32.xlu0 %v912, 24
        %v1771 = vpop.permute.xlu0 %1770
        %1772 = vrot.lane.b32.xlu0 %v914, 24
        %v1773 = vpop.permute.xlu0 %1772
        %1774 = vrot.lane.b32.xlu0 %v917, 24
        %v1775 = vpop.permute.xlu0 %1774
        %1776 = vrot.lane.b32.xlu0 %v919, 24
        %v1777 = vpop.permute.xlu0 %1776
        %1778 = vrot.lane.b32.xlu0 %v922, 24
        %v1779 = vpop.permute.xlu0 %1778
        %1780 = vrot.lane.b32.xlu0 %v924, 24
        %v1781 = vpop.permute.xlu0 %1780
        %1782 = vrot.lane.b32.xlu0 %v927, 24
        %v1783 = vpop.permute.xlu0 %1782
        %1784 = vrot.lane.b32.xlu0 %v929, 24
        %v1785 = vpop.permute.xlu0 %1784
        %1786 = vrot.lane.b32.xlu0 %v1327, 24
        %v1787 = vpop.permute.xlu0 %1786
        %1788 = vrot.lane.b32.xlu0 %v1329, 24
        %v1789 = vpop.permute.xlu0 %1788
        %1790 = vrot.lane.b32.xlu0 %v1727, 24
        %v1791 = vpop.permute.xlu0 %1790
        %1792 = vrot.lane.b32.xlu0 %v1729, 24
        %v1793 = vpop.permute.xlu0 %1792
        %vm1826 = vcmask 220352
        %1827 = vst.msk [vmem:[#allocation3] sm:$0xff] %vm1826, %v1731
        %1828 = vst.msk [vmem:[#allocation3 + $0x8] sm:$0xff] %vm1826, %v1733
        %1829 = vst.msk [vmem:[#allocation3 + $0x10] sm:$0xff] %vm1826, %v1735
        %1830 = vst.msk [vmem:[#allocation3 + $0x18] sm:$0xff] %vm1826, %v1737
        %1831 = vst.msk [vmem:[#allocation3 + $0x20] sm:$0xff] %vm1826, %v1739
        %1832 = vst.msk [vmem:[#allocation3 + $0x28] sm:$0xff] %vm1826, %v1741
        %1833 = vst.msk [vmem:[#allocation3 + $0x30] sm:$0xff] %vm1826, %v1743
        %1834 = vst.msk [vmem:[#allocation3 + $0x38] sm:$0xff] %vm1826, %v1745
        %1835 = vst.msk [vmem:[#allocation3 + $0x40] sm:$0xff] %vm1826, %v1747
        %1836 = vst.msk [vmem:[#allocation3 + $0x48] sm:$0xff] %vm1826, %v1749
        %1837 = vst.msk [vmem:[#allocation3 + $0x50] sm:$0xff] %vm1826, %v1751
        %1838 = vst.msk [vmem:[#allocation3 + $0x58] sm:$0xff] %vm1826, %v1753
        %1839 = vst.msk [vmem:[#allocation3 + $0x60] sm:$0xff] %vm1826, %v1755
        %1840 = vst.msk [vmem:[#allocation3 + $0x68] sm:$0xff] %vm1826, %v1757
        %1841 = vst.msk [vmem:[#allocation3 + $0x70] sm:$0xff] %vm1826, %v1759
        %1842 = vst.msk [vmem:[#allocation3 + $0x78] sm:$0xff] %vm1826, %v1761
        %1843 = vst.msk [vmem:[#allocation3 + $0x80] sm:$0xff] %vm1826, %v1763
        %1844 = vst.msk [vmem:[#allocation3 + $0x88] sm:$0xff] %vm1826, %v1765
        %1845 = vst.msk [vmem:[#allocation3 + $0x90] sm:$0xff] %vm1826, %v1767
        %1846 = vst.msk [vmem:[#allocation3 + $0x98] sm:$0xff] %vm1826, %v1769
        %1847 = vst.msk [vmem:[#allocation3 + $0xa0] sm:$0xff] %vm1826, %v1771
        %1848 = vst.msk [vmem:[#allocation3 + $0xa8] sm:$0xff] %vm1826, %v1773
        %1849 = vst.msk [vmem:[#allocation3 + $0xb0] sm:$0xff] %vm1826, %v1775
        %1850 = vst.msk [vmem:[#allocation3 + $0xb8] sm:$0xff] %vm1826, %v1777
        %1851 = vst.msk [vmem:[#allocation3 + $0xc0] sm:$0xff] %vm1826, %v1779
        %1852 = vst.msk [vmem:[#allocation3 + $0xc8] sm:$0xff] %vm1826, %v1781
        %1853 = vst.msk [vmem:[#allocation3 + $0xd0] sm:$0xff] %vm1826, %v1783
        %1854 = vst.msk [vmem:[#allocation3 + $0xd8] sm:$0xff] %vm1826, %v1785
        %1855 = vst.msk [vmem:[#allocation3 + $0xe0] sm:$0xff] %vm1826, %v1787
        %1856 = vst.msk [vmem:[#allocation3 + $0xe8] sm:$0xff] %vm1826, %v1789
        %1857 = vst.msk [vmem:[#allocation3 + $0xf0] sm:$0xff] %vm1826, %v1791
        %1858 = vst.msk [vmem:[#allocation3 + $0xf8] sm:$0xff] %vm1826, %v1793
        %v1859 = vld [vmem:[#allocation3] sm:$0xff]
        %v1860 = vld [vmem:[#allocation3 + $0x8] sm:$0xff]
        %v1861 = vld [vmem:[#allocation3 + $0x10] sm:$0xff]
        %v1862 = vld [vmem:[#allocation3 + $0x18] sm:$0xff]
        %v1863 = vld [vmem:[#allocation3 + $0x20] sm:$0xff]
        %v1864 = vld [vmem:[#allocation3 + $0x28] sm:$0xff]
        %v1865 = vld [vmem:[#allocation3 + $0x30] sm:$0xff]
        %v1866 = vld [vmem:[#allocation3 + $0x38] sm:$0xff]
        %v1867 = vld [vmem:[#allocation3 + $0x40] sm:$0xff]
        %v1868 = vld [vmem:[#allocation3 + $0x48] sm:$0xff]
        %v1869 = vld [vmem:[#allocation3 + $0x50] sm:$0xff]
        %v1870 = vld [vmem:[#allocation3 + $0x58] sm:$0xff]
        %v1871 = vld [vmem:[#allocation3 + $0x60] sm:$0xff]
        %v1872 = vld [vmem:[#allocation3 + $0x68] sm:$0xff]
        %v1873 = vld [vmem:[#allocation3 + $0x70] sm:$0xff]
        %v1874 = vld [vmem:[#allocation3 + $0x78] sm:$0xff]
        %v1875 = vld [vmem:[#allocation3 + $0x80] sm:$0xff]
        %v1876 = vld [vmem:[#allocation3 + $0x88] sm:$0xff]
        %v1877 = vld [vmem:[#allocation3 + $0x90] sm:$0xff]
        %v1878 = vld [vmem:[#allocation3 + $0x98] sm:$0xff]
        %v1879 = vld [vmem:[#allocation3 + $0xa0] sm:$0xff]
        %v1880 = vld [vmem:[#allocation3 + $0xa8] sm:$0xff]
        %v1881 = vld [vmem:[#allocation3 + $0xb0] sm:$0xff]
        %v1882 = vld [vmem:[#allocation3 + $0xb8] sm:$0xff]
        %v1883 = vld [vmem:[#allocation3 + $0xc0] sm:$0xff]
        %v1884 = vld [vmem:[#allocation3 + $0xc8] sm:$0xff]
        %v1885 = vld [vmem:[#allocation3 + $0xd0] sm:$0xff]
        %v1886 = vld [vmem:[#allocation3 + $0xd8] sm:$0xff]
        %v1887 = vld [vmem:[#allocation3 + $0xe0] sm:$0xff]
        %v1888 = vld [vmem:[#allocation3 + $0xe8] sm:$0xff]
        %v1889 = vld [vmem:[#allocation3 + $0xf0] sm:$0xff]
        %v1890 = vld [vmem:[#allocation3 + $0xf8] sm:$0xff]
        %v1891 = vld [vmem:[%s1] sm:$0xff]
        %v1892 = vld [vmem:[%s1 + $0x8] sm:$0xff]
        %v1893 = vld [vmem:[%s1 + $0x10] sm:$0xff]
        %v1894 = vld [vmem:[%s1 + $0x18] sm:$0x7]
        %vm1895 = vcmask 220160
        %v1897 = vsel %vm1895, %v1859, 0
        %v1900 = vsel %vm1895, %v1860, 0
        %v1903 = vsel %vm1895, %v1861, 0
        %v1906 = vsel %vm1895, %v1862, 0
        %v1909 = vsel %vm1895, %v1863, 0
        %v1912 = vsel %vm1895, %v1864, 0
        %v1915 = vsel %vm1895, %v1865, 0
        %v1918 = vsel %vm1895, %v1866, 0
        %v1921 = vsel %vm1895, %v1867, 0
        %v1924 = vsel %vm1895, %v1868, 0
        %v1927 = vsel %vm1895, %v1869, 0
        %v1930 = vsel %vm1895, %v1870, 0
        %v1933 = vsel %vm1895, %v1871, 0
        %v1936 = vsel %vm1895, %v1872, 0
        %v1939 = vsel %vm1895, %v1873, 0
        %v1942 = vsel %vm1895, %v1874, 0
        %v1945 = vsel %vm1895, %v1875, 0
        %v1948 = vsel %vm1895, %v1876, 0
        %v1951 = vsel %vm1895, %v1877, 0
        %v1954 = vsel %vm1895, %v1878, 0
        %v1957 = vsel %vm1895, %v1879, 0
        %v1960 = vsel %vm1895, %v1880, 0
        %v1963 = vsel %vm1895, %v1881, 0
        %v1966 = vsel %vm1895, %v1882, 0
        %v1969 = vsel %vm1895, %v1883, 0
        %v1972 = vsel %vm1895, %v1884, 0
        %v1975 = vsel %vm1895, %v1885, 0
        %v1978 = vsel %vm1895, %v1886, 0
        %v1981 = vsel %vm1895, %v1887, 0
        %v1984 = vsel %vm1895, %v1888, 0
        %v1987 = vsel %vm1895, %v1889, 0
        %v1990 = vsel %vm1895, %v1890, 0
        %vm1992 = vcmask 1042432
        %v1994 = vsel %vm1992, %v1894, 0
        %1996 = vmatprep.subr.mxu0 0.0
        %1997 = vmatpush1.msra.mxu0 0.0
        %1998 = vmatprep.subr.mxu0 0.0
        %1999 = vmatpush1.msra.mxu0 0.0
        %2000 = vmatprep.subr.mxu0 0.0
        %2001 = vmatpush1.msra.mxu0 0.0
        %2002 = vmatprep.subr.mxu0 0.0
        %2003 = vmatpush1.msra.mxu0 0.0
        %2004 = vmatprep.subr.mxu0 0.0
        %2005 = vmatpush1.msra.mxu0 0.0
        %2006 = vmatprep.subr.mxu0 0.0
        %2007 = vmatpush1.msra.mxu0 0.0
        %2008 = vmatprep.subr.mxu0 0.0
        %2009 = vmatpush1.msra.mxu0 0.0
        %2010 = vmatprep.subr.mxu0 0.0
        %2011 = vmatpush1.msra.mxu0 0.0
        %2012 = vmatprep.subr.mxu0 0.0
        %2013 = vmatpush1.msra.mxu0 0.0
        %2014 = vmatprep.subr.mxu0 0.0
        %2015 = vmatpush1.msra.mxu0 0.0
        %2016 = vmatprep.subr.mxu0 0.0
        %2017 = vmatpush1.msra.mxu0 0.0
        %2018 = vmatprep.subr.mxu0 0.0
        %2019 = vmatpush1.msra.mxu0 0.0
        %2020 = vmatprep.subr.mxu0 0.0
        %2021 = vmatpush1.msra.mxu0 %v1994
        %2022 = vmatprep.subr.mxu0 0.0
        %2023 = vmatpush1.msra.mxu0 %v1893
        %2024 = vmatprep.subr.mxu0 0.0
        %2025 = vmatpush1.msra.mxu0 %v1892
        %2026 = vmatprep.subr.mxu0 0.0
        %2027 = vmatpush1.msra.mxu0 %v1891
        %2028 = vmatprep.subr.mxu0 0.0
        %2029 = vmatpush2.msra.mxu0 0.0
        %2030 = vmatprep.subr.mxu0 0.0
        %2031 = vmatpush2.msra.mxu0 0.0
        %2032 = vmatprep.subr.mxu0 0.0
        %2033 = vmatpush2.msra.mxu0 0.0
        %2034 = vmatprep.subr.mxu0 0.0
        %2035 = vmatpush2.msra.mxu0 0.0
        %2036 = vmatprep.subr.mxu0 0.0
        %2037 = vmatpush2.msra.mxu0 0.0
        %2038 = vmatprep.subr.mxu0 0.0
        %2039 = vmatpush2.msra.mxu0 0.0
        %2040 = vmatprep.subr.mxu0 0.0
        %2041 = vmatpush2.msra.mxu0 0.0
        %2042 = vmatprep.subr.mxu0 0.0
        %2043 = vmatpush2.msra.mxu0 0.0
        %2044 = vmatprep.subr.mxu0 0.0
        %2045 = vmatpush2.msra.mxu0 0.0
        %2046 = vmatprep.subr.mxu0 0.0
        %2047 = vmatpush2.msra.mxu0 0.0
        %2048 = vmatprep.subr.mxu0 0.0
        %2049 = vmatpush2.msra.mxu0 0.0
        %2050 = vmatprep.subr.mxu0 0.0
        %2051 = vmatpush2.msra.mxu0 0.0
        %2052 = vmatprep.subr.mxu0 0.0
        %2053 = vmatpush2.msra.mxu0 0.0
        %2054 = vmatprep.subr.mxu0 0.0
        %2055 = vmatpush2.msra.mxu0 0.0
        %2056 = vmatprep.subr.mxu0 0.0
        %2057 = vmatpush2.msra.mxu0 0.0
        %2058 = vmatprep.subr.mxu0 0.0
        %2059 = vmatpush2.msra.mxu0 0.0
        %2060 = vmatprep.mubr.f32.mxu0 0.0
        %2061 = vmatmul.mubr.f32.gmra.mxu0 %v1897
        %v2062 = vpop.f32.mrf.mxu0
        %v2063 = vadd.f32 0.0, %v2062
        %v2064 = vpop.f32.mrf.mxu0
        %2065 = vmatprep.mubr.f32.mxu0 0.0
        %2066 = vmatmul.mubr.f32.gmra.mxu0 %v1900
        %v2067 = vpop.f32.mrf.mxu0
        %v2068 = vadd.f32 0.0, %v2067
        %v2069 = vpop.f32.mrf.mxu0
        %2070 = vmatprep.mubr.f32.mxu0 0.0
        %2071 = vmatmul.mubr.f32.gmra.mxu0 %v1903
        %v2072 = vpop.f32.mrf.mxu0
        %v2073 = vadd.f32 0.0, %v2072
        %v2074 = vpop.f32.mrf.mxu0
        %2075 = vmatprep.mubr.f32.mxu0 0.0
        %2076 = vmatmul.mubr.f32.gmra.mxu0 %v1906
        %v2077 = vpop.f32.mrf.mxu0
        %v2078 = vadd.f32 0.0, %v2077
        %v2079 = vpop.f32.mrf.mxu0
        %2080 = vmatprep.mubr.f32.mxu0 0.0
        %2081 = vmatmul.mubr.f32.gmra.mxu0 %v1909
        %v2082 = vpop.f32.mrf.mxu0
        %v2083 = vadd.f32 0.0, %v2082
        %v2084 = vpop.f32.mrf.mxu0
        %2085 = vmatprep.mubr.f32.mxu0 0.0
        %2086 = vmatmul.mubr.f32.gmra.mxu0 %v1912
        %v2087 = vpop.f32.mrf.mxu0
        %v2088 = vadd.f32 0.0, %v2087
        %v2089 = vpop.f32.mrf.mxu0
        %2090 = vmatprep.mubr.f32.mxu0 0.0
        %2091 = vmatmul.mubr.f32.gmra.mxu0 %v1915
        %v2092 = vpop.f32.mrf.mxu0
        %v2093 = vadd.f32 0.0, %v2092
        %v2094 = vpop.f32.mrf.mxu0
        %2095 = vmatprep.mubr.f32.mxu0 0.0
        %2096 = vmatmul.mubr.f32.gmra.mxu0 %v1918
        %v2097 = vpop.f32.mrf.mxu0
        %v2098 = vadd.f32 0.0, %v2097
        %v2099 = vpop.f32.mrf.mxu0
        %2100 = vmatprep.mubr.f32.mxu0 0.0
        %2101 = vmatmul.mubr.f32.gmra.mxu0 %v1921
        %v2102 = vpop.f32.mrf.mxu0
        %v2103 = vadd.f32 0.0, %v2102
        %v2104 = vpop.f32.mrf.mxu0
        %2105 = vmatprep.mubr.f32.mxu0 0.0
        %2106 = vmatmul.mubr.f32.gmra.mxu0 %v1924
        %v2107 = vpop.f32.mrf.mxu0
        %v2108 = vadd.f32 0.0, %v2107
        %v2109 = vpop.f32.mrf.mxu0
        %2110 = vmatprep.mubr.f32.mxu0 0.0
        %2111 = vmatmul.mubr.f32.gmra.mxu0 %v1927
        %v2112 = vpop.f32.mrf.mxu0
        %v2113 = vadd.f32 0.0, %v2112
        %v2114 = vpop.f32.mrf.mxu0
        %2115 = vmatprep.mubr.f32.mxu0 0.0
        %2116 = vmatmul.mubr.f32.gmra.mxu0 %v1930
        %v2117 = vpop.f32.mrf.mxu0
        %v2118 = vadd.f32 0.0, %v2117
        %v2119 = vpop.f32.mrf.mxu0
        %2120 = vmatprep.mubr.f32.mxu0 0.0
        %2121 = vmatmul.mubr.f32.gmra.mxu0 %v1933
        %v2122 = vpop.f32.mrf.mxu0
        %v2123 = vadd.f32 0.0, %v2122
        %v2124 = vpop.f32.mrf.mxu0
        %2125 = vmatprep.mubr.f32.mxu0 0.0
        %2126 = vmatmul.mubr.f32.gmra.mxu0 %v1936
        %v2127 = vpop.f32.mrf.mxu0
        %v2128 = vadd.f32 0.0, %v2127
        %v2129 = vpop.f32.mrf.mxu0
        %2130 = vmatprep.mubr.f32.mxu0 0.0
        %2131 = vmatmul.mubr.f32.gmra.mxu0 %v1939
        %v2132 = vpop.f32.mrf.mxu0
        %v2133 = vadd.f32 0.0, %v2132
        %v2134 = vpop.f32.mrf.mxu0
        %2135 = vmatprep.mubr.f32.mxu0 0.0
        %2136 = vmatmul.mubr.f32.gmra.mxu0 %v1942
        %v2137 = vpop.f32.mrf.mxu0
        %v2138 = vadd.f32 0.0, %v2137
        %v2139 = vpop.f32.mrf.mxu0
        %2140 = vmatprep.mubr.f32.mxu0 0.0
        %2141 = vmatmul.mubr.f32.gmra.mxu0 %v1945
        %v2142 = vpop.f32.mrf.mxu0
        %v2143 = vadd.f32 0.0, %v2142
        %v2144 = vpop.f32.mrf.mxu0
        %2145 = vmatprep.mubr.f32.mxu0 0.0
        %2146 = vmatmul.mubr.f32.gmra.mxu0 %v1948
        %v2147 = vpop.f32.mrf.mxu0
        %v2148 = vadd.f32 0.0, %v2147
        %v2149 = vpop.f32.mrf.mxu0
        %2150 = vmatprep.mubr.f32.mxu0 0.0
        %2151 = vmatmul.mubr.f32.gmra.mxu0 %v1951
        %v2152 = vpop.f32.mrf.mxu0
        %v2153 = vadd.f32 0.0, %v2152
        %v2154 = vpop.f32.mrf.mxu0
        %2155 = vmatprep.mubr.f32.mxu0 0.0
        %2156 = vmatmul.mubr.f32.gmra.mxu0 %v1954
        %v2157 = vpop.f32.mrf.mxu0
        %v2158 = vadd.f32 0.0, %v2157
        %v2159 = vpop.f32.mrf.mxu0
        %2160 = vmatprep.mubr.f32.mxu0 0.0
        %2161 = vmatmul.mubr.f32.gmra.mxu0 %v1957
        %v2162 = vpop.f32.mrf.mxu0
        %v2163 = vadd.f32 0.0, %v2162
        %v2164 = vpop.f32.mrf.mxu0
        %2165 = vmatprep.mubr.f32.mxu0 0.0
        %2166 = vmatmul.mubr.f32.gmra.mxu0 %v1960
        %v2167 = vpop.f32.mrf.mxu0
        %v2168 = vadd.f32 0.0, %v2167
        %v2169 = vpop.f32.mrf.mxu0
        %2170 = vmatprep.mubr.f32.mxu0 0.0
        %2171 = vmatmul.mubr.f32.gmra.mxu0 %v1963
        %v2172 = vpop.f32.mrf.mxu0
        %v2173 = vadd.f32 0.0, %v2172
        %v2174 = vpop.f32.mrf.mxu0
        %2175 = vmatprep.mubr.f32.mxu0 0.0
        %2176 = vmatmul.mubr.f32.gmra.mxu0 %v1966
        %v2177 = vpop.f32.mrf.mxu0
        %v2178 = vadd.f32 0.0, %v2177
        %v2179 = vpop.f32.mrf.mxu0
        %2180 = vmatprep.mubr.f32.mxu0 0.0
        %2181 = vmatmul.mubr.f32.gmra.mxu0 %v1969
        %v2182 = vpop.f32.mrf.mxu0
        %v2183 = vadd.f32 0.0, %v2182
        %v2184 = vpop.f32.mrf.mxu0
        %2185 = vmatprep.mubr.f32.mxu0 0.0
        %2186 = vmatmul.mubr.f32.gmra.mxu0 %v1972
        %v2187 = vpop.f32.mrf.mxu0
        %v2188 = vadd.f32 0.0, %v2187
        %v2189 = vpop.f32.mrf.mxu0
        %2190 = vmatprep.mubr.f32.mxu0 0.0
        %2191 = vmatmul.mubr.f32.gmra.mxu0 %v1975
        %v2192 = vpop.f32.mrf.mxu0
        %v2193 = vadd.f32 0.0, %v2192
        %v2194 = vpop.f32.mrf.mxu0
        %2195 = vmatprep.mubr.f32.mxu0 0.0
        %2196 = vmatmul.mubr.f32.gmra.mxu0 %v1978
        %v2197 = vpop.f32.mrf.mxu0
        %v2198 = vadd.f32 0.0, %v2197
        %v2199 = vpop.f32.mrf.mxu0
        %2200 = vmatprep.mubr.f32.mxu0 0.0
        %2201 = vmatmul.mubr.f32.gmra.mxu0 %v1981
        %v2202 = vpop.f32.mrf.mxu0
        %v2203 = vadd.f32 0.0, %v2202
        %v2204 = vpop.f32.mrf.mxu0
        %2205 = vmatprep.mubr.f32.mxu0 0.0
        %2206 = vmatmul.mubr.f32.gmra.mxu0 %v1984
        %v2207 = vpop.f32.mrf.mxu0
        %v2208 = vadd.f32 0.0, %v2207
        %v2209 = vpop.f32.mrf.mxu0
        %2210 = vmatprep.mubr.f32.mxu0 0.0
        %2211 = vmatmul.mubr.f32.gmra.mxu0 %v1987
        %v2212 = vpop.f32.mrf.mxu0
        %v2213 = vadd.f32 0.0, %v2212
        %v2214 = vpop.f32.mrf.mxu0
        %2215 = vmatprep.mubr.f32.mxu0 0.0
        %2216 = vmatmul.mubr.f32.gmra.mxu0 %v1990
        %v2217 = vpop.f32.mrf.mxu0
        %v2218 = vadd.f32 0.0, %v2217
        %v2219 = vpop.f32.mrf.mxu0
        %2220 = vdwg.mxu0
        %v2221 = vld [vmem:[%s2] sm:$0x1]
        %v2223 = vlaneseq
        %v2224 = vshrl.u32 %v2223, 7
        %v2225 = vsub.s32 0, %v2224
        %v2226 = vrot.slane %v2221, %v2225
        %v2228 = vmul.f32 %v2063, %v2226
        %v2229 = vmul.f32 %v2068, %v2226
        %v2230 = vmul.f32 %v2073, %v2226
        %v2231 = vmul.f32 %v2078, %v2226
        %v2232 = vmul.f32 %v2083, %v2226
        %v2233 = vmul.f32 %v2088, %v2226
        %v2234 = vmul.f32 %v2093, %v2226
        %v2235 = vmul.f32 %v2098, %v2226
        %v2236 = vmul.f32 %v2103, %v2226
        %v2237 = vmul.f32 %v2108, %v2226
        %v2238 = vmul.f32 %v2113, %v2226
        %v2239 = vmul.f32 %v2118, %v2226
        %v2240 = vmul.f32 %v2123, %v2226
        %v2241 = vmul.f32 %v2128, %v2226
        %v2242 = vmul.f32 %v2133, %v2226
        %v2243 = vmul.f32 %v2138, %v2226
        %v2244 = vmul.f32 %v2143, %v2226
        %v2245 = vmul.f32 %v2148, %v2226
        %v2246 = vmul.f32 %v2153, %v2226
        %v2247 = vmul.f32 %v2158, %v2226
        %v2248 = vmul.f32 %v2163, %v2226
        %v2249 = vmul.f32 %v2168, %v2226
        %v2250 = vmul.f32 %v2173, %v2226
        %v2251 = vmul.f32 %v2178, %v2226
        %v2252 = vmul.f32 %v2183, %v2226
        %v2253 = vmul.f32 %v2188, %v2226
        %v2254 = vmul.f32 %v2193, %v2226
        %v2255 = vmul.f32 %v2198, %v2226
        %v2256 = vmul.f32 %v2203, %v2226
        %v2257 = vmul.f32 %v2208, %v2226
        %v2258 = vmul.f32 %v2213, %v2226
        %v2259 = vmul.f32 %v2218, %v2226
        %v2260 = vld [vmem:[%s3] sm:$0x1]
        %v2262 = vlaneseq
        %v2263 = vshrl.u32 %v2262, 7
        %v2264 = vsub.s32 0, %v2263
        %v2265 = vrot.slane %v2260, %v2264
        %v2267 = vadd.f32 %v2228, %v2265
        %v2268 = vadd.f32 %v2229, %v2265
        %v2269 = vadd.f32 %v2230, %v2265
        %v2270 = vadd.f32 %v2231, %v2265
        %v2271 = vadd.f32 %v2232, %v2265
        %v2272 = vadd.f32 %v2233, %v2265
        %v2273 = vadd.f32 %v2234, %v2265
        %v2274 = vadd.f32 %v2235, %v2265
        %v2275 = vadd.f32 %v2236, %v2265
        %v2276 = vadd.f32 %v2237, %v2265
        %v2277 = vadd.f32 %v2238, %v2265
        %v2278 = vadd.f32 %v2239, %v2265
        %v2279 = vadd.f32 %v2240, %v2265
        %v2280 = vadd.f32 %v2241, %v2265
        %v2281 = vadd.f32 %v2242, %v2265
        %v2282 = vadd.f32 %v2243, %v2265
        %v2283 = vadd.f32 %v2244, %v2265
        %v2284 = vadd.f32 %v2245, %v2265
        %v2285 = vadd.f32 %v2246, %v2265
        %v2286 = vadd.f32 %v2247, %v2265
        %v2287 = vadd.f32 %v2248, %v2265
        %v2288 = vadd.f32 %v2249, %v2265
        %v2289 = vadd.f32 %v2250, %v2265
        %v2290 = vadd.f32 %v2251, %v2265
        %v2291 = vadd.f32 %v2252, %v2265
        %v2292 = vadd.f32 %v2253, %v2265
        %v2293 = vadd.f32 %v2254, %v2265
        %v2294 = vadd.f32 %v2255, %v2265
        %v2295 = vadd.f32 %v2256, %v2265
        %v2296 = vadd.f32 %v2257, %v2265
        %v2297 = vadd.f32 %v2258, %v2265
        %v2298 = vadd.f32 %v2259, %v2265
        %v2299 = vmax.f32 %v2267, 0.0
        %v2300 = vmax.f32 %v2268, 0.0
        %v2301 = vmax.f32 %v2269, 0.0
        %v2302 = vmax.f32 %v2270, 0.0
        %v2303 = vmax.f32 %v2271, 0.0
        %v2304 = vmax.f32 %v2272, 0.0
        %v2305 = vmax.f32 %v2273, 0.0
        %v2306 = vmax.f32 %v2274, 0.0
        %v2307 = vmax.f32 %v2275, 0.0
        %v2308 = vmax.f32 %v2276, 0.0
        %v2309 = vmax.f32 %v2277, 0.0
        %v2310 = vmax.f32 %v2278, 0.0
        %v2311 = vmax.f32 %v2279, 0.0
        %v2312 = vmax.f32 %v2280, 0.0
        %v2313 = vmax.f32 %v2281, 0.0
        %v2314 = vmax.f32 %v2282, 0.0
        %v2315 = vmax.f32 %v2283, 0.0
        %v2316 = vmax.f32 %v2284, 0.0
        %v2317 = vmax.f32 %v2285, 0.0
        %v2318 = vmax.f32 %v2286, 0.0
        %v2319 = vmax.f32 %v2287, 0.0
        %v2320 = vmax.f32 %v2288, 0.0
        %v2321 = vmax.f32 %v2289, 0.0
        %v2322 = vmax.f32 %v2290, 0.0
        %v2323 = vmax.f32 %v2291, 0.0
        %v2324 = vmax.f32 %v2292, 0.0
        %v2325 = vmax.f32 %v2293, 0.0
        %v2326 = vmax.f32 %v2294, 0.0
        %v2327 = vmax.f32 %v2295, 0.0
        %v2328 = vmax.f32 %v2296, 0.0
        %v2329 = vmax.f32 %v2297, 0.0
        %v2330 = vmax.f32 %v2298, 0.0
        %v2363 = vcombine.high %v2299, %v2299
        %v2365 = vunpack.c.l.s4 1983009808
        %v2366 = vunpack.c.0.s8 %v2365
        %v2367 = vlaneseq
        %v2368 = vshrl.u32 %v2367, 7
        %v2369 = vsub.s32 %v2366, %v2368
        %v2370 = vrot.slane %v2299, %v2369
        %v2372 = vunpack.c.l.s4 1983009808
        %v2373 = vunpack.c.0.s8 %v2372
        %v2374 = vlaneseq
        %v2375 = vshrl.u32 %v2374, 7
        %v2376 = vsub.s32 %v2373, %v2375
        %v2377 = vrot.slane %v2363, %v2376
        %v2378 = vcombine.high %v2370, %v2370
        %v2379 = vcombine.high %v2377, %v2377
        %v2380 = vcombine.high %v2300, %v2300
        %v2382 = vunpack.c.l.s4 1983009808
        %v2383 = vunpack.c.0.s8 %v2382
        %v2384 = vlaneseq
        %v2385 = vshrl.u32 %v2384, 7
        %v2386 = vsub.s32 %v2383, %v2385
        %v2387 = vrot.slane %v2300, %v2386
        %v2389 = vunpack.c.l.s4 1983009808
        %v2390 = vunpack.c.0.s8 %v2389
        %v2391 = vlaneseq
        %v2392 = vshrl.u32 %v2391, 7
        %v2393 = vsub.s32 %v2390, %v2392
        %v2394 = vrot.slane %v2380, %v2393
        %v2395 = vcombine.high %v2387, %v2387
        %v2396 = vcombine.high %v2394, %v2394
        %v2397 = vcombine.high %v2301, %v2301
        %v2399 = vunpack.c.l.s4 1983009808
        %v2400 = vunpack.c.0.s8 %v2399
        %v2401 = vlaneseq
        %v2402 = vshrl.u32 %v2401, 7
        %v2403 = vsub.s32 %v2400, %v2402
        %v2404 = vrot.slane %v2301, %v2403
        %v2406 = vunpack.c.l.s4 1983009808
        %v2407 = vunpack.c.0.s8 %v2406
        %v2408 = vlaneseq
        %v2409 = vshrl.u32 %v2408, 7
        %v2410 = vsub.s32 %v2407, %v2409
        %v2411 = vrot.slane %v2397, %v2410
        %v2412 = vcombine.high %v2404, %v2404
        %v2413 = vcombine.high %v2411, %v2411
        %v2414 = vcombine.high %v2302, %v2302
        %v2416 = vunpack.c.l.s4 1983009808
        %v2417 = vunpack.c.0.s8 %v2416
        %v2418 = vlaneseq
        %v2419 = vshrl.u32 %v2418, 7
        %v2420 = vsub.s32 %v2417, %v2419
        %v2421 = vrot.slane %v2302, %v2420
        %v2423 = vunpack.c.l.s4 1983009808
        %v2424 = vunpack.c.0.s8 %v2423
        %v2425 = vlaneseq
        %v2426 = vshrl.u32 %v2425, 7
        %v2427 = vsub.s32 %v2424, %v2426
        %v2428 = vrot.slane %v2414, %v2427
        %v2429 = vcombine.high %v2421, %v2421
        %v2430 = vcombine.high %v2428, %v2428
        %v2431 = vcombine.high %v2303, %v2303
        %v2433 = vunpack.c.l.s4 1983009808
        %v2434 = vunpack.c.0.s8 %v2433
        %v2435 = vlaneseq
        %v2436 = vshrl.u32 %v2435, 7
        %v2437 = vsub.s32 %v2434, %v2436
        %v2438 = vrot.slane %v2303, %v2437
        %v2440 = vunpack.c.l.s4 1983009808
        %v2441 = vunpack.c.0.s8 %v2440
        %v2442 = vlaneseq
        %v2443 = vshrl.u32 %v2442, 7
        %v2444 = vsub.s32 %v2441, %v2443
        %v2445 = vrot.slane %v2431, %v2444
        %v2446 = vcombine.high %v2438, %v2438
        %v2447 = vcombine.high %v2445, %v2445
        %v2448 = vcombine.high %v2304, %v2304
        %v2450 = vunpack.c.l.s4 1983009808
        %v2451 = vunpack.c.0.s8 %v2450
        %v2452 = vlaneseq
        %v2453 = vshrl.u32 %v2452, 7
        %v2454 = vsub.s32 %v2451, %v2453
        %v2455 = vrot.slane %v2304, %v2454
        %v2457 = vunpack.c.l.s4 1983009808
        %v2458 = vunpack.c.0.s8 %v2457
        %v2459 = vlaneseq
        %v2460 = vshrl.u32 %v2459, 7
        %v2461 = vsub.s32 %v2458, %v2460
        %v2462 = vrot.slane %v2448, %v2461
        %v2463 = vcombine.high %v2455, %v2455
        %v2464 = vcombine.high %v2462, %v2462
        %v2465 = vcombine.high %v2305, %v2305
        %v2467 = vunpack.c.l.s4 1983009808
        %v2468 = vunpack.c.0.s8 %v2467
        %v2469 = vlaneseq
        %v2470 = vshrl.u32 %v2469, 7
        %v2471 = vsub.s32 %v2468, %v2470
        %v2472 = vrot.slane %v2305, %v2471
        %v2474 = vunpack.c.l.s4 1983009808
        %v2475 = vunpack.c.0.s8 %v2474
        %v2476 = vlaneseq
        %v2477 = vshrl.u32 %v2476, 7
        %v2478 = vsub.s32 %v2475, %v2477
        %v2479 = vrot.slane %v2465, %v2478
        %v2480 = vcombine.high %v2472, %v2472
        %v2481 = vcombine.high %v2479, %v2479
        %v2482 = vcombine.high %v2306, %v2306
        %v2484 = vunpack.c.l.s4 1983009808
        %v2485 = vunpack.c.0.s8 %v2484
        %v2486 = vlaneseq
        %v2487 = vshrl.u32 %v2486, 7
        %v2488 = vsub.s32 %v2485, %v2487
        %v2489 = vrot.slane %v2306, %v2488
        %v2491 = vunpack.c.l.s4 1983009808
        %v2492 = vunpack.c.0.s8 %v2491
        %v2493 = vlaneseq
        %v2494 = vshrl.u32 %v2493, 7
        %v2495 = vsub.s32 %v2492, %v2494
        %v2496 = vrot.slane %v2482, %v2495
        %v2497 = vcombine.high %v2489, %v2489
        %v2498 = vcombine.high %v2496, %v2496
        %v2499 = vcombine.high %v2307, %v2307
        %v2501 = vunpack.c.l.s4 1983009808
        %v2502 = vunpack.c.0.s8 %v2501
        %v2503 = vlaneseq
        %v2504 = vshrl.u32 %v2503, 7
        %v2505 = vsub.s32 %v2502, %v2504
        %v2506 = vrot.slane %v2307, %v2505
        %v2508 = vunpack.c.l.s4 1983009808
        %v2509 = vunpack.c.0.s8 %v2508
        %v2510 = vlaneseq
        %v2511 = vshrl.u32 %v2510, 7
        %v2512 = vsub.s32 %v2509, %v2511
        %v2513 = vrot.slane %v2499, %v2512
        %v2514 = vcombine.high %v2506, %v2506
        %v2515 = vcombine.high %v2513, %v2513
        %v2516 = vcombine.high %v2308, %v2308
        %v2518 = vunpack.c.l.s4 1983009808
        %v2519 = vunpack.c.0.s8 %v2518
        %v2520 = vlaneseq
        %v2521 = vshrl.u32 %v2520, 7
        %v2522 = vsub.s32 %v2519, %v2521
        %v2523 = vrot.slane %v2308, %v2522
        %v2525 = vunpack.c.l.s4 1983009808
        %v2526 = vunpack.c.0.s8 %v2525
        %v2527 = vlaneseq
        %v2528 = vshrl.u32 %v2527, 7
        %v2529 = vsub.s32 %v2526, %v2528
        %v2530 = vrot.slane %v2516, %v2529
        %v2531 = vcombine.high %v2523, %v2523
        %v2532 = vcombine.high %v2530, %v2530
        %v2533 = vcombine.high %v2309, %v2309
        %v2535 = vunpack.c.l.s4 1983009808
        %v2536 = vunpack.c.0.s8 %v2535
        %v2537 = vlaneseq
        %v2538 = vshrl.u32 %v2537, 7
        %v2539 = vsub.s32 %v2536, %v2538
        %v2540 = vrot.slane %v2309, %v2539
        %v2542 = vunpack.c.l.s4 1983009808
        %v2543 = vunpack.c.0.s8 %v2542
        %v2544 = vlaneseq
        %v2545 = vshrl.u32 %v2544, 7
        %v2546 = vsub.s32 %v2543, %v2545
        %v2547 = vrot.slane %v2533, %v2546
        %v2548 = vcombine.high %v2540, %v2540
        %v2549 = vcombine.high %v2547, %v2547
        %v2550 = vcombine.high %v2310, %v2310
        %v2552 = vunpack.c.l.s4 1983009808
        %v2553 = vunpack.c.0.s8 %v2552
        %v2554 = vlaneseq
        %v2555 = vshrl.u32 %v2554, 7
        %v2556 = vsub.s32 %v2553, %v2555
        %v2557 = vrot.slane %v2310, %v2556
        %v2559 = vunpack.c.l.s4 1983009808
        %v2560 = vunpack.c.0.s8 %v2559
        %v2561 = vlaneseq
        %v2562 = vshrl.u32 %v2561, 7
        %v2563 = vsub.s32 %v2560, %v2562
        %v2564 = vrot.slane %v2550, %v2563
        %v2565 = vcombine.high %v2557, %v2557
        %v2566 = vcombine.high %v2564, %v2564
        %v2567 = vcombine.high %v2311, %v2311
        %v2569 = vunpack.c.l.s4 1983009808
        %v2570 = vunpack.c.0.s8 %v2569
        %v2571 = vlaneseq
        %v2572 = vshrl.u32 %v2571, 7
        %v2573 = vsub.s32 %v2570, %v2572
        %v2574 = vrot.slane %v2311, %v2573
        %v2576 = vunpack.c.l.s4 1983009808
        %v2577 = vunpack.c.0.s8 %v2576
        %v2578 = vlaneseq
        %v2579 = vshrl.u32 %v2578, 7
        %v2580 = vsub.s32 %v2577, %v2579
        %v2581 = vrot.slane %v2567, %v2580
        %v2582 = vcombine.high %v2574, %v2574
        %v2583 = vcombine.high %v2581, %v2581
        %v2584 = vcombine.high %v2312, %v2312
        %v2586 = vunpack.c.l.s4 1983009808
        %v2587 = vunpack.c.0.s8 %v2586
        %v2588 = vlaneseq
        %v2589 = vshrl.u32 %v2588, 7
        %v2590 = vsub.s32 %v2587, %v2589
        %v2591 = vrot.slane %v2312, %v2590
        %v2593 = vunpack.c.l.s4 1983009808
        %v2594 = vunpack.c.0.s8 %v2593
        %v2595 = vlaneseq
        %v2596 = vshrl.u32 %v2595, 7
        %v2597 = vsub.s32 %v2594, %v2596
        %v2598 = vrot.slane %v2584, %v2597
        %v2599 = vcombine.high %v2591, %v2591
        %v2600 = vcombine.high %v2598, %v2598
        %v2601 = vcombine.high %v2313, %v2313
        %v2603 = vunpack.c.l.s4 1983009808
        %v2604 = vunpack.c.0.s8 %v2603
        %v2605 = vlaneseq
        %v2606 = vshrl.u32 %v2605, 7
        %v2607 = vsub.s32 %v2604, %v2606
        %v2608 = vrot.slane %v2313, %v2607
        %v2610 = vunpack.c.l.s4 1983009808
        %v2611 = vunpack.c.0.s8 %v2610
        %v2612 = vlaneseq
        %v2613 = vshrl.u32 %v2612, 7
        %v2614 = vsub.s32 %v2611, %v2613
        %v2615 = vrot.slane %v2601, %v2614
        %v2616 = vcombine.high %v2608, %v2608
        %v2617 = vcombine.high %v2615, %v2615
        %v2618 = vcombine.high %v2314, %v2314
        %v2620 = vunpack.c.l.s4 1983009808
        %v2621 = vunpack.c.0.s8 %v2620
        %v2622 = vlaneseq
        %v2623 = vshrl.u32 %v2622, 7
        %v2624 = vsub.s32 %v2621, %v2623
        %v2625 = vrot.slane %v2314, %v2624
        %v2627 = vunpack.c.l.s4 1983009808
        %v2628 = vunpack.c.0.s8 %v2627
        %v2629 = vlaneseq
        %v2630 = vshrl.u32 %v2629, 7
        %v2631 = vsub.s32 %v2628, %v2630
        %v2632 = vrot.slane %v2618, %v2631
        %v2633 = vcombine.high %v2625, %v2625
        %v2634 = vcombine.high %v2632, %v2632
        %v2635 = vcombine.high %v2315, %v2315
        %v2637 = vunpack.c.l.s4 1983009808
        %v2638 = vunpack.c.0.s8 %v2637
        %v2639 = vlaneseq
        %v2640 = vshrl.u32 %v2639, 7
        %v2641 = vsub.s32 %v2638, %v2640
        %v2642 = vrot.slane %v2315, %v2641
        %v2644 = vunpack.c.l.s4 1983009808
        %v2645 = vunpack.c.0.s8 %v2644
        %v2646 = vlaneseq
        %v2647 = vshrl.u32 %v2646, 7
        %v2648 = vsub.s32 %v2645, %v2647
        %v2649 = vrot.slane %v2635, %v2648
        %v2650 = vcombine.high %v2642, %v2642
        %v2651 = vcombine.high %v2649, %v2649
        %v2652 = vcombine.high %v2316, %v2316
        %v2654 = vunpack.c.l.s4 1983009808
        %v2655 = vunpack.c.0.s8 %v2654
        %v2656 = vlaneseq
        %v2657 = vshrl.u32 %v2656, 7
        %v2658 = vsub.s32 %v2655, %v2657
        %v2659 = vrot.slane %v2316, %v2658
        %v2661 = vunpack.c.l.s4 1983009808
        %v2662 = vunpack.c.0.s8 %v2661
        %v2663 = vlaneseq
        %v2664 = vshrl.u32 %v2663, 7
        %v2665 = vsub.s32 %v2662, %v2664
        %v2666 = vrot.slane %v2652, %v2665
        %v2667 = vcombine.high %v2659, %v2659
        %v2668 = vcombine.high %v2666, %v2666
        %v2669 = vcombine.high %v2317, %v2317
        %v2671 = vunpack.c.l.s4 1983009808
        %v2672 = vunpack.c.0.s8 %v2671
        %v2673 = vlaneseq
        %v2674 = vshrl.u32 %v2673, 7
        %v2675 = vsub.s32 %v2672, %v2674
        %v2676 = vrot.slane %v2317, %v2675
        %v2678 = vunpack.c.l.s4 1983009808
        %v2679 = vunpack.c.0.s8 %v2678
        %v2680 = vlaneseq
        %v2681 = vshrl.u32 %v2680, 7
        %v2682 = vsub.s32 %v2679, %v2681
        %v2683 = vrot.slane %v2669, %v2682
        %v2684 = vcombine.high %v2676, %v2676
        %v2685 = vcombine.high %v2683, %v2683
        %v2686 = vcombine.high %v2318, %v2318
        %v2688 = vunpack.c.l.s4 1983009808
        %v2689 = vunpack.c.0.s8 %v2688
        %v2690 = vlaneseq
        %v2691 = vshrl.u32 %v2690, 7
        %v2692 = vsub.s32 %v2689, %v2691
        %v2693 = vrot.slane %v2318, %v2692
        %v2695 = vunpack.c.l.s4 1983009808
        %v2696 = vunpack.c.0.s8 %v2695
        %v2697 = vlaneseq
        %v2698 = vshrl.u32 %v2697, 7
        %v2699 = vsub.s32 %v2696, %v2698
        %v2700 = vrot.slane %v2686, %v2699
        %v2701 = vcombine.high %v2693, %v2693
        %v2702 = vcombine.high %v2700, %v2700
        %v2703 = vcombine.high %v2319, %v2319
        %v2705 = vunpack.c.l.s4 1983009808
        %v2706 = vunpack.c.0.s8 %v2705
        %v2707 = vlaneseq
        %v2708 = vshrl.u32 %v2707, 7
        %v2709 = vsub.s32 %v2706, %v2708
        %v2710 = vrot.slane %v2319, %v2709
        %v2712 = vunpack.c.l.s4 1983009808
        %v2713 = vunpack.c.0.s8 %v2712
        %v2714 = vlaneseq
        %v2715 = vshrl.u32 %v2714, 7
        %v2716 = vsub.s32 %v2713, %v2715
        %v2717 = vrot.slane %v2703, %v2716
        %v2718 = vcombine.high %v2710, %v2710
        %v2719 = vcombine.high %v2717, %v2717
        %v2720 = vcombine.high %v2320, %v2320
        %v2722 = vunpack.c.l.s4 1983009808
        %v2723 = vunpack.c.0.s8 %v2722
        %v2724 = vlaneseq
        %v2725 = vshrl.u32 %v2724, 7
        %v2726 = vsub.s32 %v2723, %v2725
        %v2727 = vrot.slane %v2320, %v2726
        %v2729 = vunpack.c.l.s4 1983009808
        %v2730 = vunpack.c.0.s8 %v2729
        %v2731 = vlaneseq
        %v2732 = vshrl.u32 %v2731, 7
        %v2733 = vsub.s32 %v2730, %v2732
        %v2734 = vrot.slane %v2720, %v2733
        %v2735 = vcombine.high %v2727, %v2727
        %v2736 = vcombine.high %v2734, %v2734
        %v2737 = vcombine.high %v2321, %v2321
        %v2739 = vunpack.c.l.s4 1983009808
        %v2740 = vunpack.c.0.s8 %v2739
        %v2741 = vlaneseq
        %v2742 = vshrl.u32 %v2741, 7
        %v2743 = vsub.s32 %v2740, %v2742
        %v2744 = vrot.slane %v2321, %v2743
        %v2746 = vunpack.c.l.s4 1983009808
        %v2747 = vunpack.c.0.s8 %v2746
        %v2748 = vlaneseq
        %v2749 = vshrl.u32 %v2748, 7
        %v2750 = vsub.s32 %v2747, %v2749
        %v2751 = vrot.slane %v2737, %v2750
        %v2752 = vcombine.high %v2744, %v2744
        %v2753 = vcombine.high %v2751, %v2751
        %v2754 = vcombine.high %v2322, %v2322
        %v2756 = vunpack.c.l.s4 1983009808
        %v2757 = vunpack.c.0.s8 %v2756
        %v2758 = vlaneseq
        %v2759 = vshrl.u32 %v2758, 7
        %v2760 = vsub.s32 %v2757, %v2759
        %v2761 = vrot.slane %v2322, %v2760
        %v2763 = vunpack.c.l.s4 1983009808
        %v2764 = vunpack.c.0.s8 %v2763
        %v2765 = vlaneseq
        %v2766 = vshrl.u32 %v2765, 7
        %v2767 = vsub.s32 %v2764, %v2766
        %v2768 = vrot.slane %v2754, %v2767
        %v2769 = vcombine.high %v2761, %v2761
        %v2770 = vcombine.high %v2768, %v2768
        %v2771 = vcombine.high %v2323, %v2323
        %v2773 = vunpack.c.l.s4 1983009808
        %v2774 = vunpack.c.0.s8 %v2773
        %v2775 = vlaneseq
        %v2776 = vshrl.u32 %v2775, 7
        %v2777 = vsub.s32 %v2774, %v2776
        %v2778 = vrot.slane %v2323, %v2777
        %v2780 = vunpack.c.l.s4 1983009808
        %v2781 = vunpack.c.0.s8 %v2780
        %v2782 = vlaneseq
        %v2783 = vshrl.u32 %v2782, 7
        %v2784 = vsub.s32 %v2781, %v2783
        %v2785 = vrot.slane %v2771, %v2784
        %v2786 = vcombine.high %v2778, %v2778
        %v2787 = vcombine.high %v2785, %v2785
        %v2788 = vcombine.high %v2324, %v2324
        %v2790 = vunpack.c.l.s4 1983009808
        %v2791 = vunpack.c.0.s8 %v2790
        %v2792 = vlaneseq
        %v2793 = vshrl.u32 %v2792, 7
        %v2794 = vsub.s32 %v2791, %v2793
        %v2795 = vrot.slane %v2324, %v2794
        %v2797 = vunpack.c.l.s4 1983009808
        %v2798 = vunpack.c.0.s8 %v2797
        %v2799 = vlaneseq
        %v2800 = vshrl.u32 %v2799, 7
        %v2801 = vsub.s32 %v2798, %v2800
        %v2802 = vrot.slane %v2788, %v2801
        %v2803 = vcombine.high %v2795, %v2795
        %v2804 = vcombine.high %v2802, %v2802
        %v2805 = vcombine.high %v2325, %v2325
        %v2807 = vunpack.c.l.s4 1983009808
        %v2808 = vunpack.c.0.s8 %v2807
        %v2809 = vlaneseq
        %v2810 = vshrl.u32 %v2809, 7
        %v2811 = vsub.s32 %v2808, %v2810
        %v2812 = vrot.slane %v2325, %v2811
        %v2814 = vunpack.c.l.s4 1983009808
        %v2815 = vunpack.c.0.s8 %v2814
        %v2816 = vlaneseq
        %v2817 = vshrl.u32 %v2816, 7
        %v2818 = vsub.s32 %v2815, %v2817
        %v2819 = vrot.slane %v2805, %v2818
        %v2820 = vcombine.high %v2812, %v2812
        %v2821 = vcombine.high %v2819, %v2819
        %v2822 = vcombine.high %v2326, %v2326
        %v2824 = vunpack.c.l.s4 1983009808
        %v2825 = vunpack.c.0.s8 %v2824
        %v2826 = vlaneseq
        %v2827 = vshrl.u32 %v2826, 7
        %v2828 = vsub.s32 %v2825, %v2827
        %v2829 = vrot.slane %v2326, %v2828
        %v2831 = vunpack.c.l.s4 1983009808
        %v2832 = vunpack.c.0.s8 %v2831
        %v2833 = vlaneseq
        %v2834 = vshrl.u32 %v2833, 7
        %v2835 = vsub.s32 %v2832, %v2834
        %v2836 = vrot.slane %v2822, %v2835
        %v2837 = vcombine.high %v2829, %v2829
        %v2838 = vcombine.high %v2836, %v2836
        %v2839 = vcombine.high %v2327, %v2327
        %v2841 = vunpack.c.l.s4 1983009808
        %v2842 = vunpack.c.0.s8 %v2841
        %v2843 = vlaneseq
        %v2844 = vshrl.u32 %v2843, 7
        %v2845 = vsub.s32 %v2842, %v2844
        %v2846 = vrot.slane %v2327, %v2845
        %v2848 = vunpack.c.l.s4 1983009808
        %v2849 = vunpack.c.0.s8 %v2848
        %v2850 = vlaneseq
        %v2851 = vshrl.u32 %v2850, 7
        %v2852 = vsub.s32 %v2849, %v2851
        %v2853 = vrot.slane %v2839, %v2852
        %v2854 = vcombine.high %v2846, %v2846
        %v2855 = vcombine.high %v2853, %v2853
        %v2856 = vcombine.high %v2328, %v2328
        %v2858 = vunpack.c.l.s4 1983009808
        %v2859 = vunpack.c.0.s8 %v2858
        %v2860 = vlaneseq
        %v2861 = vshrl.u32 %v2860, 7
        %v2862 = vsub.s32 %v2859, %v2861
        %v2863 = vrot.slane %v2328, %v2862
        %v2865 = vunpack.c.l.s4 1983009808
        %v2866 = vunpack.c.0.s8 %v2865
        %v2867 = vlaneseq
        %v2868 = vshrl.u32 %v2867, 7
        %v2869 = vsub.s32 %v2866, %v2868
        %v2870 = vrot.slane %v2856, %v2869
        %v2871 = vcombine.high %v2863, %v2863
        %v2872 = vcombine.high %v2870, %v2870
        %v2873 = vcombine.high %v2329, %v2329
        %v2875 = vunpack.c.l.s4 1983009808
        %v2876 = vunpack.c.0.s8 %v2875
        %v2877 = vlaneseq
        %v2878 = vshrl.u32 %v2877, 7
        %v2879 = vsub.s32 %v2876, %v2878
        %v2880 = vrot.slane %v2329, %v2879
        %v2882 = vunpack.c.l.s4 1983009808
        %v2883 = vunpack.c.0.s8 %v2882
        %v2884 = vlaneseq
        %v2885 = vshrl.u32 %v2884, 7
        %v2886 = vsub.s32 %v2883, %v2885
        %v2887 = vrot.slane %v2873, %v2886
        %v2888 = vcombine.high %v2880, %v2880
        %v2889 = vcombine.high %v2887, %v2887
        %v2890 = vcombine.high %v2330, %v2330
        %v2892 = vunpack.c.l.s4 1983009808
        %v2893 = vunpack.c.0.s8 %v2892
        %v2894 = vlaneseq
        %v2895 = vshrl.u32 %v2894, 7
        %v2896 = vsub.s32 %v2893, %v2895
        %v2897 = vrot.slane %v2330, %v2896
        %v2899 = vunpack.c.l.s4 1983009808
        %v2900 = vunpack.c.0.s8 %v2899
        %v2901 = vlaneseq
        %v2902 = vshrl.u32 %v2901, 7
        %v2903 = vsub.s32 %v2900, %v2902
        %v2904 = vrot.slane %v2890, %v2903
        %v2905 = vcombine.high %v2897, %v2897
        %v2906 = vcombine.high %v2904, %v2904
        %vm3035 = vcmask 91136
        %v3036 = vsel %vm3035, %v2370, -inf
        %v3037 = vrot.slane %v3036, 4
        %v3038 = vmax.f32 %v3036, %v3037
        %v3039 = vrot.slane %v3038, 2
        %v3040 = vmax.f32 %v3038, %v3039
        %v3041 = vrot.slane %v3040, 1
        %v3042 = vmax.f32 %v3040, %v3041
        %v3043 = vsel %vm3035, %v2378, -inf
        %v3044 = vrot.slane %v3043, 4
        %v3045 = vmax.f32 %v3043, %v3044
        %v3046 = vrot.slane %v3045, 2
        %v3047 = vmax.f32 %v3045, %v3046
        %v3048 = vrot.slane %v3047, 1
        %v3049 = vmax.f32 %v3047, %v3048
        %v3050 = vsel %vm3035, %v2377, -inf
        %v3051 = vrot.slane %v3050, 4
        %v3052 = vmax.f32 %v3050, %v3051
        %v3053 = vrot.slane %v3052, 2
        %v3054 = vmax.f32 %v3052, %v3053
        %v3055 = vrot.slane %v3054, 1
        %v3056 = vmax.f32 %v3054, %v3055
        %v3057 = vsel %vm3035, %v2379, -inf
        %v3058 = vrot.slane %v3057, 4
        %v3059 = vmax.f32 %v3057, %v3058
        %v3060 = vrot.slane %v3059, 2
        %v3061 = vmax.f32 %v3059, %v3060
        %v3062 = vrot.slane %v3061, 1
        %v3063 = vmax.f32 %v3061, %v3062
        %v3064 = vsel %vm3035, %v2387, -inf
        %v3065 = vrot.slane %v3064, 4
        %v3066 = vmax.f32 %v3064, %v3065
        %v3067 = vrot.slane %v3066, 2
        %v3068 = vmax.f32 %v3066, %v3067
        %v3069 = vrot.slane %v3068, 1
        %v3070 = vmax.f32 %v3068, %v3069
        %v3071 = vsel %vm3035, %v2395, -inf
        %v3072 = vrot.slane %v3071, 4
        %v3073 = vmax.f32 %v3071, %v3072
        %v3074 = vrot.slane %v3073, 2
        %v3075 = vmax.f32 %v3073, %v3074
        %v3076 = vrot.slane %v3075, 1
        %v3077 = vmax.f32 %v3075, %v3076
        %v3078 = vsel %vm3035, %v2394, -inf
        %v3079 = vrot.slane %v3078, 4
        %v3080 = vmax.f32 %v3078, %v3079
        %v3081 = vrot.slane %v3080, 2
        %v3082 = vmax.f32 %v3080, %v3081
        %v3083 = vrot.slane %v3082, 1
        %v3084 = vmax.f32 %v3082, %v3083
        %v3085 = vsel %vm3035, %v2396, -inf
        %v3086 = vrot.slane %v3085, 4
        %v3087 = vmax.f32 %v3085, %v3086
        %v3088 = vrot.slane %v3087, 2
        %v3089 = vmax.f32 %v3087, %v3088
        %v3090 = vrot.slane %v3089, 1
        %v3091 = vmax.f32 %v3089, %v3090
        %v3092 = vsel %vm3035, %v2404, -inf
        %v3093 = vrot.slane %v3092, 4
        %v3094 = vmax.f32 %v3092, %v3093
        %v3095 = vrot.slane %v3094, 2
        %v3096 = vmax.f32 %v3094, %v3095
        %v3097 = vrot.slane %v3096, 1
        %v3098 = vmax.f32 %v3096, %v3097
        %v3099 = vsel %vm3035, %v2412, -inf
        %v3100 = vrot.slane %v3099, 4
        %v3101 = vmax.f32 %v3099, %v3100
        %v3102 = vrot.slane %v3101, 2
        %v3103 = vmax.f32 %v3101, %v3102
        %v3104 = vrot.slane %v3103, 1
        %v3105 = vmax.f32 %v3103, %v3104
        %v3106 = vsel %vm3035, %v2411, -inf
        %v3107 = vrot.slane %v3106, 4
        %v3108 = vmax.f32 %v3106, %v3107
        %v3109 = vrot.slane %v3108, 2
        %v3110 = vmax.f32 %v3108, %v3109
        %v3111 = vrot.slane %v3110, 1
        %v3112 = vmax.f32 %v3110, %v3111
        %v3113 = vsel %vm3035, %v2413, -inf
        %v3114 = vrot.slane %v3113, 4
        %v3115 = vmax.f32 %v3113, %v3114
        %v3116 = vrot.slane %v3115, 2
        %v3117 = vmax.f32 %v3115, %v3116
        %v3118 = vrot.slane %v3117, 1
        %v3119 = vmax.f32 %v3117, %v3118
        %v3120 = vsel %vm3035, %v2421, -inf
        %v3121 = vrot.slane %v3120, 4
        %v3122 = vmax.f32 %v3120, %v3121
        %v3123 = vrot.slane %v3122, 2
        %v3124 = vmax.f32 %v3122, %v3123
        %v3125 = vrot.slane %v3124, 1
        %v3126 = vmax.f32 %v3124, %v3125
        %v3127 = vsel %vm3035, %v2429, -inf
        %v3128 = vrot.slane %v3127, 4
        %v3129 = vmax.f32 %v3127, %v3128
        %v3130 = vrot.slane %v3129, 2
        %v3131 = vmax.f32 %v3129, %v3130
        %v3132 = vrot.slane %v3131, 1
        %v3133 = vmax.f32 %v3131, %v3132
        %v3134 = vsel %vm3035, %v2428, -inf
        %v3135 = vrot.slane %v3134, 4
        %v3136 = vmax.f32 %v3134, %v3135
        %v3137 = vrot.slane %v3136, 2
        %v3138 = vmax.f32 %v3136, %v3137
        %v3139 = vrot.slane %v3138, 1
        %v3140 = vmax.f32 %v3138, %v3139
        %v3141 = vsel %vm3035, %v2430, -inf
        %v3142 = vrot.slane %v3141, 4
        %v3143 = vmax.f32 %v3141, %v3142
        %v3144 = vrot.slane %v3143, 2
        %v3145 = vmax.f32 %v3143, %v3144
        %v3146 = vrot.slane %v3145, 1
        %v3147 = vmax.f32 %v3145, %v3146
        %v3148 = vsel %vm3035, %v2438, -inf
        %v3149 = vrot.slane %v3148, 4
        %v3150 = vmax.f32 %v3148, %v3149
        %v3151 = vrot.slane %v3150, 2
        %v3152 = vmax.f32 %v3150, %v3151
        %v3153 = vrot.slane %v3152, 1
        %v3154 = vmax.f32 %v3152, %v3153
        %v3155 = vsel %vm3035, %v2446, -inf
        %v3156 = vrot.slane %v3155, 4
        %v3157 = vmax.f32 %v3155, %v3156
        %v3158 = vrot.slane %v3157, 2
        %v3159 = vmax.f32 %v3157, %v3158
        %v3160 = vrot.slane %v3159, 1
        %v3161 = vmax.f32 %v3159, %v3160
        %v3162 = vsel %vm3035, %v2445, -inf
        %v3163 = vrot.slane %v3162, 4
        %v3164 = vmax.f32 %v3162, %v3163
        %v3165 = vrot.slane %v3164, 2
        %v3166 = vmax.f32 %v3164, %v3165
        %v3167 = vrot.slane %v3166, 1
        %v3168 = vmax.f32 %v3166, %v3167
        %v3169 = vsel %vm3035, %v2447, -inf
        %v3170 = vrot.slane %v3169, 4
        %v3171 = vmax.f32 %v3169, %v3170
        %v3172 = vrot.slane %v3171, 2
        %v3173 = vmax.f32 %v3171, %v3172
        %v3174 = vrot.slane %v3173, 1
        %v3175 = vmax.f32 %v3173, %v3174
        %v3176 = vsel %vm3035, %v2455, -inf
        %v3177 = vrot.slane %v3176, 4
        %v3178 = vmax.f32 %v3176, %v3177
        %v3179 = vrot.slane %v3178, 2
        %v3180 = vmax.f32 %v3178, %v3179
        %v3181 = vrot.slane %v3180, 1
        %v3182 = vmax.f32 %v3180, %v3181
        %v3183 = vsel %vm3035, %v2463, -inf
        %v3184 = vrot.slane %v3183, 4
        %v3185 = vmax.f32 %v3183, %v3184
        %v3186 = vrot.slane %v3185, 2
        %v3187 = vmax.f32 %v3185, %v3186
        %v3188 = vrot.slane %v3187, 1
        %v3189 = vmax.f32 %v3187, %v3188
        %v3190 = vsel %vm3035, %v2462, -inf
        %v3191 = vrot.slane %v3190, 4
        %v3192 = vmax.f32 %v3190, %v3191
        %v3193 = vrot.slane %v3192, 2
        %v3194 = vmax.f32 %v3192, %v3193
        %v3195 = vrot.slane %v3194, 1
        %v3196 = vmax.f32 %v3194, %v3195
        %v3197 = vsel %vm3035, %v2464, -inf
        %v3198 = vrot.slane %v3197, 4
        %v3199 = vmax.f32 %v3197, %v3198
        %v3200 = vrot.slane %v3199, 2
        %v3201 = vmax.f32 %v3199, %v3200
        %v3202 = vrot.slane %v3201, 1
        %v3203 = vmax.f32 %v3201, %v3202
        %v3204 = vsel %vm3035, %v2472, -inf
        %v3205 = vrot.slane %v3204, 4
        %v3206 = vmax.f32 %v3204, %v3205
        %v3207 = vrot.slane %v3206, 2
        %v3208 = vmax.f32 %v3206, %v3207
        %v3209 = vrot.slane %v3208, 1
        %v3210 = vmax.f32 %v3208, %v3209
        %v3211 = vsel %vm3035, %v2480, -inf
        %v3212 = vrot.slane %v3211, 4
        %v3213 = vmax.f32 %v3211, %v3212
        %v3214 = vrot.slane %v3213, 2
        %v3215 = vmax.f32 %v3213, %v3214
        %v3216 = vrot.slane %v3215, 1
        %v3217 = vmax.f32 %v3215, %v3216
        %v3218 = vsel %vm3035, %v2479, -inf
        %v3219 = vrot.slane %v3218, 4
        %v3220 = vmax.f32 %v3218, %v3219
        %v3221 = vrot.slane %v3220, 2
        %v3222 = vmax.f32 %v3220, %v3221
        %v3223 = vrot.slane %v3222, 1
        %v3224 = vmax.f32 %v3222, %v3223
        %v3225 = vsel %vm3035, %v2481, -inf
        %v3226 = vrot.slane %v3225, 4
        %v3227 = vmax.f32 %v3225, %v3226
        %v3228 = vrot.slane %v3227, 2
        %v3229 = vmax.f32 %v3227, %v3228
        %v3230 = vrot.slane %v3229, 1
        %v3231 = vmax.f32 %v3229, %v3230
        %v3232 = vsel %vm3035, %v2489, -inf
        %v3233 = vrot.slane %v3232, 4
        %v3234 = vmax.f32 %v3232, %v3233
        %v3235 = vrot.slane %v3234, 2
        %v3236 = vmax.f32 %v3234, %v3235
        %v3237 = vrot.slane %v3236, 1
        %v3238 = vmax.f32 %v3236, %v3237
        %v3239 = vsel %vm3035, %v2497, -inf
        %v3240 = vrot.slane %v3239, 4
        %v3241 = vmax.f32 %v3239, %v3240
        %v3242 = vrot.slane %v3241, 2
        %v3243 = vmax.f32 %v3241, %v3242
        %v3244 = vrot.slane %v3243, 1
        %v3245 = vmax.f32 %v3243, %v3244
        %v3246 = vsel %vm3035, %v2496, -inf
        %v3247 = vrot.slane %v3246, 4
        %v3248 = vmax.f32 %v3246, %v3247
        %v3249 = vrot.slane %v3248, 2
        %v3250 = vmax.f32 %v3248, %v3249
        %v3251 = vrot.slane %v3250, 1
        %v3252 = vmax.f32 %v3250, %v3251
        %v3253 = vsel %vm3035, %v2498, -inf
        %v3254 = vrot.slane %v3253, 4
        %v3255 = vmax.f32 %v3253, %v3254
        %v3256 = vrot.slane %v3255, 2
        %v3257 = vmax.f32 %v3255, %v3256
        %v3258 = vrot.slane %v3257, 1
        %v3259 = vmax.f32 %v3257, %v3258
        %v3260 = vsel %vm3035, %v2506, -inf
        %v3261 = vrot.slane %v3260, 4
        %v3262 = vmax.f32 %v3260, %v3261
        %v3263 = vrot.slane %v3262, 2
        %v3264 = vmax.f32 %v3262, %v3263
        %v3265 = vrot.slane %v3264, 1
        %v3266 = vmax.f32 %v3264, %v3265
        %v3267 = vsel %vm3035, %v2514, -inf
        %v3268 = vrot.slane %v3267, 4
        %v3269 = vmax.f32 %v3267, %v3268
        %v3270 = vrot.slane %v3269, 2
        %v3271 = vmax.f32 %v3269, %v3270
        %v3272 = vrot.slane %v3271, 1
        %v3273 = vmax.f32 %v3271, %v3272
        %v3274 = vsel %vm3035, %v2513, -inf
        %v3275 = vrot.slane %v3274, 4
        %v3276 = vmax.f32 %v3274, %v3275
        %v3277 = vrot.slane %v3276, 2
        %v3278 = vmax.f32 %v3276, %v3277
        %v3279 = vrot.slane %v3278, 1
        %v3280 = vmax.f32 %v3278, %v3279
        %v3281 = vsel %vm3035, %v2515, -inf
        %v3282 = vrot.slane %v3281, 4
        %v3283 = vmax.f32 %v3281, %v3282
        %v3284 = vrot.slane %v3283, 2
        %v3285 = vmax.f32 %v3283, %v3284
        %v3286 = vrot.slane %v3285, 1
        %v3287 = vmax.f32 %v3285, %v3286
        %v3288 = vsel %vm3035, %v2523, -inf
        %v3289 = vrot.slane %v3288, 4
        %v3290 = vmax.f32 %v3288, %v3289
        %v3291 = vrot.slane %v3290, 2
        %v3292 = vmax.f32 %v3290, %v3291
        %v3293 = vrot.slane %v3292, 1
        %v3294 = vmax.f32 %v3292, %v3293
        %v3295 = vsel %vm3035, %v2531, -inf
        %v3296 = vrot.slane %v3295, 4
        %v3297 = vmax.f32 %v3295, %v3296
        %v3298 = vrot.slane %v3297, 2
        %v3299 = vmax.f32 %v3297, %v3298
        %v3300 = vrot.slane %v3299, 1
        %v3301 = vmax.f32 %v3299, %v3300
        %v3302 = vsel %vm3035, %v2530, -inf
        %v3303 = vrot.slane %v3302, 4
        %v3304 = vmax.f32 %v3302, %v3303
        %v3305 = vrot.slane %v3304, 2
        %v3306 = vmax.f32 %v3304, %v3305
        %v3307 = vrot.slane %v3306, 1
        %v3308 = vmax.f32 %v3306, %v3307
        %v3309 = vsel %vm3035, %v2532, -inf
        %v3310 = vrot.slane %v3309, 4
        %v3311 = vmax.f32 %v3309, %v3310
        %v3312 = vrot.slane %v3311, 2
        %v3313 = vmax.f32 %v3311, %v3312
        %v3314 = vrot.slane %v3313, 1
        %v3315 = vmax.f32 %v3313, %v3314
        %v3316 = vsel %vm3035, %v2540, -inf
        %v3317 = vrot.slane %v3316, 4
        %v3318 = vmax.f32 %v3316, %v3317
        %v3319 = vrot.slane %v3318, 2
        %v3320 = vmax.f32 %v3318, %v3319
        %v3321 = vrot.slane %v3320, 1
        %v3322 = vmax.f32 %v3320, %v3321
        %v3323 = vsel %vm3035, %v2548, -inf
        %v3324 = vrot.slane %v3323, 4
        %v3325 = vmax.f32 %v3323, %v3324
        %v3326 = vrot.slane %v3325, 2
        %v3327 = vmax.f32 %v3325, %v3326
        %v3328 = vrot.slane %v3327, 1
        %v3329 = vmax.f32 %v3327, %v3328
        %v3330 = vsel %vm3035, %v2547, -inf
        %v3331 = vrot.slane %v3330, 4
        %v3332 = vmax.f32 %v3330, %v3331
        %v3333 = vrot.slane %v3332, 2
        %v3334 = vmax.f32 %v3332, %v3333
        %v3335 = vrot.slane %v3334, 1
        %v3336 = vmax.f32 %v3334, %v3335
        %v3337 = vsel %vm3035, %v2549, -inf
        %v3338 = vrot.slane %v3337, 4
        %v3339 = vmax.f32 %v3337, %v3338
        %v3340 = vrot.slane %v3339, 2
        %v3341 = vmax.f32 %v3339, %v3340
        %v3342 = vrot.slane %v3341, 1
        %v3343 = vmax.f32 %v3341, %v3342
        %v3344 = vsel %vm3035, %v2557, -inf
        %v3345 = vrot.slane %v3344, 4
        %v3346 = vmax.f32 %v3344, %v3345
        %v3347 = vrot.slane %v3346, 2
        %v3348 = vmax.f32 %v3346, %v3347
        %v3349 = vrot.slane %v3348, 1
        %v3350 = vmax.f32 %v3348, %v3349
        %v3351 = vsel %vm3035, %v2565, -inf
        %v3352 = vrot.slane %v3351, 4
        %v3353 = vmax.f32 %v3351, %v3352
        %v3354 = vrot.slane %v3353, 2
        %v3355 = vmax.f32 %v3353, %v3354
        %v3356 = vrot.slane %v3355, 1
        %v3357 = vmax.f32 %v3355, %v3356
        %v3358 = vsel %vm3035, %v2564, -inf
        %v3359 = vrot.slane %v3358, 4
        %v3360 = vmax.f32 %v3358, %v3359
        %v3361 = vrot.slane %v3360, 2
        %v3362 = vmax.f32 %v3360, %v3361
        %v3363 = vrot.slane %v3362, 1
        %v3364 = vmax.f32 %v3362, %v3363
        %v3365 = vsel %vm3035, %v2566, -inf
        %v3366 = vrot.slane %v3365, 4
        %v3367 = vmax.f32 %v3365, %v3366
        %v3368 = vrot.slane %v3367, 2
        %v3369 = vmax.f32 %v3367, %v3368
        %v3370 = vrot.slane %v3369, 1
        %v3371 = vmax.f32 %v3369, %v3370
        %v3372 = vsel %vm3035, %v2574, -inf
        %v3373 = vrot.slane %v3372, 4
        %v3374 = vmax.f32 %v3372, %v3373
        %v3375 = vrot.slane %v3374, 2
        %v3376 = vmax.f32 %v3374, %v3375
        %v3377 = vrot.slane %v3376, 1
        %v3378 = vmax.f32 %v3376, %v3377
        %v3379 = vsel %vm3035, %v2582, -inf
        %v3380 = vrot.slane %v3379, 4
        %v3381 = vmax.f32 %v3379, %v3380
        %v3382 = vrot.slane %v3381, 2
        %v3383 = vmax.f32 %v3381, %v3382
        %v3384 = vrot.slane %v3383, 1
        %v3385 = vmax.f32 %v3383, %v3384
        %v3386 = vsel %vm3035, %v2581, -inf
        %v3387 = vrot.slane %v3386, 4
        %v3388 = vmax.f32 %v3386, %v3387
        %v3389 = vrot.slane %v3388, 2
        %v3390 = vmax.f32 %v3388, %v3389
        %v3391 = vrot.slane %v3390, 1
        %v3392 = vmax.f32 %v3390, %v3391
        %v3393 = vsel %vm3035, %v2583, -inf
        %v3394 = vrot.slane %v3393, 4
        %v3395 = vmax.f32 %v3393, %v3394
        %v3396 = vrot.slane %v3395, 2
        %v3397 = vmax.f32 %v3395, %v3396
        %v3398 = vrot.slane %v3397, 1
        %v3399 = vmax.f32 %v3397, %v3398
        %v3400 = vsel %vm3035, %v2591, -inf
        %v3401 = vrot.slane %v3400, 4
        %v3402 = vmax.f32 %v3400, %v3401
        %v3403 = vrot.slane %v3402, 2
        %v3404 = vmax.f32 %v3402, %v3403
        %v3405 = vrot.slane %v3404, 1
        %v3406 = vmax.f32 %v3404, %v3405
        %v3407 = vsel %vm3035, %v2599, -inf
        %v3408 = vrot.slane %v3407, 4
        %v3409 = vmax.f32 %v3407, %v3408
        %v3410 = vrot.slane %v3409, 2
        %v3411 = vmax.f32 %v3409, %v3410
        %v3412 = vrot.slane %v3411, 1
        %v3413 = vmax.f32 %v3411, %v3412
        %v3414 = vsel %vm3035, %v2598, -inf
        %v3415 = vrot.slane %v3414, 4
        %v3416 = vmax.f32 %v3414, %v3415
        %v3417 = vrot.slane %v3416, 2
        %v3418 = vmax.f32 %v3416, %v3417
        %v3419 = vrot.slane %v3418, 1
        %v3420 = vmax.f32 %v3418, %v3419
        %v3421 = vsel %vm3035, %v2600, -inf
        %v3422 = vrot.slane %v3421, 4
        %v3423 = vmax.f32 %v3421, %v3422
        %v3424 = vrot.slane %v3423, 2
        %v3425 = vmax.f32 %v3423, %v3424
        %v3426 = vrot.slane %v3425, 1
        %v3427 = vmax.f32 %v3425, %v3426
        %v3428 = vsel %vm3035, %v2608, -inf
        %v3429 = vrot.slane %v3428, 4
        %v3430 = vmax.f32 %v3428, %v3429
        %v3431 = vrot.slane %v3430, 2
        %v3432 = vmax.f32 %v3430, %v3431
        %v3433 = vrot.slane %v3432, 1
        %v3434 = vmax.f32 %v3432, %v3433
        %v3435 = vsel %vm3035, %v2616, -inf
        %v3436 = vrot.slane %v3435, 4
        %v3437 = vmax.f32 %v3435, %v3436
        %v3438 = vrot.slane %v3437, 2
        %v3439 = vmax.f32 %v3437, %v3438
        %v3440 = vrot.slane %v3439, 1
        %v3441 = vmax.f32 %v3439, %v3440
        %v3442 = vsel %vm3035, %v2615, -inf
        %v3443 = vrot.slane %v3442, 4
        %v3444 = vmax.f32 %v3442, %v3443
        %v3445 = vrot.slane %v3444, 2
        %v3446 = vmax.f32 %v3444, %v3445
        %v3447 = vrot.slane %v3446, 1
        %v3448 = vmax.f32 %v3446, %v3447
        %v3449 = vsel %vm3035, %v2617, -inf
        %v3450 = vrot.slane %v3449, 4
        %v3451 = vmax.f32 %v3449, %v3450
        %v3452 = vrot.slane %v3451, 2
        %v3453 = vmax.f32 %v3451, %v3452
        %v3454 = vrot.slane %v3453, 1
        %v3455 = vmax.f32 %v3453, %v3454
        %v3456 = vsel %vm3035, %v2625, -inf
        %v3457 = vrot.slane %v3456, 4
        %v3458 = vmax.f32 %v3456, %v3457
        %v3459 = vrot.slane %v3458, 2
        %v3460 = vmax.f32 %v3458, %v3459
        %v3461 = vrot.slane %v3460, 1
        %v3462 = vmax.f32 %v3460, %v3461
        %v3463 = vsel %vm3035, %v2633, -inf
        %v3464 = vrot.slane %v3463, 4
        %v3465 = vmax.f32 %v3463, %v3464
        %v3466 = vrot.slane %v3465, 2
        %v3467 = vmax.f32 %v3465, %v3466
        %v3468 = vrot.slane %v3467, 1
        %v3469 = vmax.f32 %v3467, %v3468
        %v3470 = vsel %vm3035, %v2632, -inf
        %v3471 = vrot.slane %v3470, 4
        %v3472 = vmax.f32 %v3470, %v3471
        %v3473 = vrot.slane %v3472, 2
        %v3474 = vmax.f32 %v3472, %v3473
        %v3475 = vrot.slane %v3474, 1
        %v3476 = vmax.f32 %v3474, %v3475
        %v3477 = vsel %vm3035, %v2634, -inf
        %v3478 = vrot.slane %v3477, 4
        %v3479 = vmax.f32 %v3477, %v3478
        %v3480 = vrot.slane %v3479, 2
        %v3481 = vmax.f32 %v3479, %v3480
        %v3482 = vrot.slane %v3481, 1
        %v3483 = vmax.f32 %v3481, %v3482
        %v3484 = vsel %vm3035, %v2642, -inf
        %v3485 = vrot.slane %v3484, 4
        %v3486 = vmax.f32 %v3484, %v3485
        %v3487 = vrot.slane %v3486, 2
        %v3488 = vmax.f32 %v3486, %v3487
        %v3489 = vrot.slane %v3488, 1
        %v3490 = vmax.f32 %v3488, %v3489
        %v3491 = vsel %vm3035, %v2650, -inf
        %v3492 = vrot.slane %v3491, 4
        %v3493 = vmax.f32 %v3491, %v3492
        %v3494 = vrot.slane %v3493, 2
        %v3495 = vmax.f32 %v3493, %v3494
        %v3496 = vrot.slane %v3495, 1
        %v3497 = vmax.f32 %v3495, %v3496
        %v3498 = vsel %vm3035, %v2649, -inf
        %v3499 = vrot.slane %v3498, 4
        %v3500 = vmax.f32 %v3498, %v3499
        %v3501 = vrot.slane %v3500, 2
        %v3502 = vmax.f32 %v3500, %v3501
        %v3503 = vrot.slane %v3502, 1
        %v3504 = vmax.f32 %v3502, %v3503
        %v3505 = vsel %vm3035, %v2651, -inf
        %v3506 = vrot.slane %v3505, 4
        %v3507 = vmax.f32 %v3505, %v3506
        %v3508 = vrot.slane %v3507, 2
        %v3509 = vmax.f32 %v3507, %v3508
        %v3510 = vrot.slane %v3509, 1
        %v3511 = vmax.f32 %v3509, %v3510
        %v3512 = vsel %vm3035, %v2659, -inf
        %v3513 = vrot.slane %v3512, 4
        %v3514 = vmax.f32 %v3512, %v3513
        %v3515 = vrot.slane %v3514, 2
        %v3516 = vmax.f32 %v3514, %v3515
        %v3517 = vrot.slane %v3516, 1
        %v3518 = vmax.f32 %v3516, %v3517
        %v3519 = vsel %vm3035, %v2667, -inf
        %v3520 = vrot.slane %v3519, 4
        %v3521 = vmax.f32 %v3519, %v3520
        %v3522 = vrot.slane %v3521, 2
        %v3523 = vmax.f32 %v3521, %v3522
        %v3524 = vrot.slane %v3523, 1
        %v3525 = vmax.f32 %v3523, %v3524
        %v3526 = vsel %vm3035, %v2666, -inf
        %v3527 = vrot.slane %v3526, 4
        %v3528 = vmax.f32 %v3526, %v3527
        %v3529 = vrot.slane %v3528, 2
        %v3530 = vmax.f32 %v3528, %v3529
        %v3531 = vrot.slane %v3530, 1
        %v3532 = vmax.f32 %v3530, %v3531
        %v3533 = vsel %vm3035, %v2668, -inf
        %v3534 = vrot.slane %v3533, 4
        %v3535 = vmax.f32 %v3533, %v3534
        %v3536 = vrot.slane %v3535, 2
        %v3537 = vmax.f32 %v3535, %v3536
        %v3538 = vrot.slane %v3537, 1
        %v3539 = vmax.f32 %v3537, %v3538
        %v3540 = vsel %vm3035, %v2676, -inf
        %v3541 = vrot.slane %v3540, 4
        %v3542 = vmax.f32 %v3540, %v3541
        %v3543 = vrot.slane %v3542, 2
        %v3544 = vmax.f32 %v3542, %v3543
        %v3545 = vrot.slane %v3544, 1
        %v3546 = vmax.f32 %v3544, %v3545
        %v3547 = vsel %vm3035, %v2684, -inf
        %v3548 = vrot.slane %v3547, 4
        %v3549 = vmax.f32 %v3547, %v3548
        %v3550 = vrot.slane %v3549, 2
        %v3551 = vmax.f32 %v3549, %v3550
        %v3552 = vrot.slane %v3551, 1
        %v3553 = vmax.f32 %v3551, %v3552
        %v3554 = vsel %vm3035, %v2683, -inf
        %v3555 = vrot.slane %v3554, 4
        %v3556 = vmax.f32 %v3554, %v3555
        %v3557 = vrot.slane %v3556, 2
        %v3558 = vmax.f32 %v3556, %v3557
        %v3559 = vrot.slane %v3558, 1
        %v3560 = vmax.f32 %v3558, %v3559
        %v3561 = vsel %vm3035, %v2685, -inf
        %v3562 = vrot.slane %v3561, 4
        %v3563 = vmax.f32 %v3561, %v3562
        %v3564 = vrot.slane %v3563, 2
        %v3565 = vmax.f32 %v3563, %v3564
        %v3566 = vrot.slane %v3565, 1
        %v3567 = vmax.f32 %v3565, %v3566
        %v3568 = vsel %vm3035, %v2693, -inf
        %v3569 = vrot.slane %v3568, 4
        %v3570 = vmax.f32 %v3568, %v3569
        %v3571 = vrot.slane %v3570, 2
        %v3572 = vmax.f32 %v3570, %v3571
        %v3573 = vrot.slane %v3572, 1
        %v3574 = vmax.f32 %v3572, %v3573
        %v3575 = vsel %vm3035, %v2701, -inf
        %v3576 = vrot.slane %v3575, 4
        %v3577 = vmax.f32 %v3575, %v3576
        %v3578 = vrot.slane %v3577, 2
        %v3579 = vmax.f32 %v3577, %v3578
        %v3580 = vrot.slane %v3579, 1
        %v3581 = vmax.f32 %v3579, %v3580
        %v3582 = vsel %vm3035, %v2700, -inf
        %v3583 = vrot.slane %v3582, 4
        %v3584 = vmax.f32 %v3582, %v3583
        %v3585 = vrot.slane %v3584, 2
        %v3586 = vmax.f32 %v3584, %v3585
        %v3587 = vrot.slane %v3586, 1
        %v3588 = vmax.f32 %v3586, %v3587
        %v3589 = vsel %vm3035, %v2702, -inf
        %v3590 = vrot.slane %v3589, 4
        %v3591 = vmax.f32 %v3589, %v3590
        %v3592 = vrot.slane %v3591, 2
        %v3593 = vmax.f32 %v3591, %v3592
        %v3594 = vrot.slane %v3593, 1
        %v3595 = vmax.f32 %v3593, %v3594
        %v3596 = vsel %vm3035, %v2710, -inf
        %v3597 = vrot.slane %v3596, 4
        %v3598 = vmax.f32 %v3596, %v3597
        %v3599 = vrot.slane %v3598, 2
        %v3600 = vmax.f32 %v3598, %v3599
        %v3601 = vrot.slane %v3600, 1
        %v3602 = vmax.f32 %v3600, %v3601
        %v3603 = vsel %vm3035, %v2718, -inf
        %v3604 = vrot.slane %v3603, 4
        %v3605 = vmax.f32 %v3603, %v3604
        %v3606 = vrot.slane %v3605, 2
        %v3607 = vmax.f32 %v3605, %v3606
        %v3608 = vrot.slane %v3607, 1
        %v3609 = vmax.f32 %v3607, %v3608
        %v3610 = vsel %vm3035, %v2717, -inf
        %v3611 = vrot.slane %v3610, 4
        %v3612 = vmax.f32 %v3610, %v3611
        %v3613 = vrot.slane %v3612, 2
        %v3614 = vmax.f32 %v3612, %v3613
        %v3615 = vrot.slane %v3614, 1
        %v3616 = vmax.f32 %v3614, %v3615
        %v3617 = vsel %vm3035, %v2719, -inf
        %v3618 = vrot.slane %v3617, 4
        %v3619 = vmax.f32 %v3617, %v3618
        %v3620 = vrot.slane %v3619, 2
        %v3621 = vmax.f32 %v3619, %v3620
        %v3622 = vrot.slane %v3621, 1
        %v3623 = vmax.f32 %v3621, %v3622
        %v3624 = vsel %vm3035, %v2727, -inf
        %v3625 = vrot.slane %v3624, 4
        %v3626 = vmax.f32 %v3624, %v3625
        %v3627 = vrot.slane %v3626, 2
        %v3628 = vmax.f32 %v3626, %v3627
        %v3629 = vrot.slane %v3628, 1
        %v3630 = vmax.f32 %v3628, %v3629
        %v3631 = vsel %vm3035, %v2735, -inf
        %v3632 = vrot.slane %v3631, 4
        %v3633 = vmax.f32 %v3631, %v3632
        %v3634 = vrot.slane %v3633, 2
        %v3635 = vmax.f32 %v3633, %v3634
        %v3636 = vrot.slane %v3635, 1
        %v3637 = vmax.f32 %v3635, %v3636
        %v3638 = vsel %vm3035, %v2734, -inf
        %v3639 = vrot.slane %v3638, 4
        %v3640 = vmax.f32 %v3638, %v3639
        %v3641 = vrot.slane %v3640, 2
        %v3642 = vmax.f32 %v3640, %v3641
        %v3643 = vrot.slane %v3642, 1
        %v3644 = vmax.f32 %v3642, %v3643
        %v3645 = vsel %vm3035, %v2736, -inf
        %v3646 = vrot.slane %v3645, 4
        %v3647 = vmax.f32 %v3645, %v3646
        %v3648 = vrot.slane %v3647, 2
        %v3649 = vmax.f32 %v3647, %v3648
        %v3650 = vrot.slane %v3649, 1
        %v3651 = vmax.f32 %v3649, %v3650
        %v3652 = vsel %vm3035, %v2744, -inf
        %v3653 = vrot.slane %v3652, 4
        %v3654 = vmax.f32 %v3652, %v3653
        %v3655 = vrot.slane %v3654, 2
        %v3656 = vmax.f32 %v3654, %v3655
        %v3657 = vrot.slane %v3656, 1
        %v3658 = vmax.f32 %v3656, %v3657
        %v3659 = vsel %vm3035, %v2752, -inf
        %v3660 = vrot.slane %v3659, 4
        %v3661 = vmax.f32 %v3659, %v3660
        %v3662 = vrot.slane %v3661, 2
        %v3663 = vmax.f32 %v3661, %v3662
        %v3664 = vrot.slane %v3663, 1
        %v3665 = vmax.f32 %v3663, %v3664
        %v3666 = vsel %vm3035, %v2751, -inf
        %v3667 = vrot.slane %v3666, 4
        %v3668 = vmax.f32 %v3666, %v3667
        %v3669 = vrot.slane %v3668, 2
        %v3670 = vmax.f32 %v3668, %v3669
        %v3671 = vrot.slane %v3670, 1
        %v3672 = vmax.f32 %v3670, %v3671
        %v3673 = vsel %vm3035, %v2753, -inf
        %v3674 = vrot.slane %v3673, 4
        %v3675 = vmax.f32 %v3673, %v3674
        %v3676 = vrot.slane %v3675, 2
        %v3677 = vmax.f32 %v3675, %v3676
        %v3678 = vrot.slane %v3677, 1
        %v3679 = vmax.f32 %v3677, %v3678
        %v3680 = vsel %vm3035, %v2761, -inf
        %v3681 = vrot.slane %v3680, 4
        %v3682 = vmax.f32 %v3680, %v3681
        %v3683 = vrot.slane %v3682, 2
        %v3684 = vmax.f32 %v3682, %v3683
        %v3685 = vrot.slane %v3684, 1
        %v3686 = vmax.f32 %v3684, %v3685
        %v3687 = vsel %vm3035, %v2769, -inf
        %v3688 = vrot.slane %v3687, 4
        %v3689 = vmax.f32 %v3687, %v3688
        %v3690 = vrot.slane %v3689, 2
        %v3691 = vmax.f32 %v3689, %v3690
        %v3692 = vrot.slane %v3691, 1
        %v3693 = vmax.f32 %v3691, %v3692
        %v3694 = vsel %vm3035, %v2768, -inf
        %v3695 = vrot.slane %v3694, 4
        %v3696 = vmax.f32 %v3694, %v3695
        %v3697 = vrot.slane %v3696, 2
        %v3698 = vmax.f32 %v3696, %v3697
        %v3699 = vrot.slane %v3698, 1
        %v3700 = vmax.f32 %v3698, %v3699
        %v3701 = vsel %vm3035, %v2770, -inf
        %v3702 = vrot.slane %v3701, 4
        %v3703 = vmax.f32 %v3701, %v3702
        %v3704 = vrot.slane %v3703, 2
        %v3705 = vmax.f32 %v3703, %v3704
        %v3706 = vrot.slane %v3705, 1
        %v3707 = vmax.f32 %v3705, %v3706
        %v3708 = vsel %vm3035, %v2778, -inf
        %v3709 = vrot.slane %v3708, 4
        %v3710 = vmax.f32 %v3708, %v3709
        %v3711 = vrot.slane %v3710, 2
        %v3712 = vmax.f32 %v3710, %v3711
        %v3713 = vrot.slane %v3712, 1
        %v3714 = vmax.f32 %v3712, %v3713
        %v3715 = vsel %vm3035, %v2786, -inf
        %v3716 = vrot.slane %v3715, 4
        %v3717 = vmax.f32 %v3715, %v3716
        %v3718 = vrot.slane %v3717, 2
        %v3719 = vmax.f32 %v3717, %v3718
        %v3720 = vrot.slane %v3719, 1
        %v3721 = vmax.f32 %v3719, %v3720
        %v3722 = vsel %vm3035, %v2785, -inf
        %v3723 = vrot.slane %v3722, 4
        %v3724 = vmax.f32 %v3722, %v3723
        %v3725 = vrot.slane %v3724, 2
        %v3726 = vmax.f32 %v3724, %v3725
        %v3727 = vrot.slane %v3726, 1
        %v3728 = vmax.f32 %v3726, %v3727
        %v3729 = vsel %vm3035, %v2787, -inf
        %v3730 = vrot.slane %v3729, 4
        %v3731 = vmax.f32 %v3729, %v3730
        %v3732 = vrot.slane %v3731, 2
        %v3733 = vmax.f32 %v3731, %v3732
        %v3734 = vrot.slane %v3733, 1
        %v3735 = vmax.f32 %v3733, %v3734
        %v3736 = vsel %vm3035, %v2795, -inf
        %v3737 = vrot.slane %v3736, 4
        %v3738 = vmax.f32 %v3736, %v3737
        %v3739 = vrot.slane %v3738, 2
        %v3740 = vmax.f32 %v3738, %v3739
        %v3741 = vrot.slane %v3740, 1
        %v3742 = vmax.f32 %v3740, %v3741
        %v3743 = vsel %vm3035, %v2803, -inf
        %v3744 = vrot.slane %v3743, 4
        %v3745 = vmax.f32 %v3743, %v3744
        %v3746 = vrot.slane %v3745, 2
        %v3747 = vmax.f32 %v3745, %v3746
        %v3748 = vrot.slane %v3747, 1
        %v3749 = vmax.f32 %v3747, %v3748
        %v3750 = vsel %vm3035, %v2802, -inf
        %v3751 = vrot.slane %v3750, 4
        %v3752 = vmax.f32 %v3750, %v3751
        %v3753 = vrot.slane %v3752, 2
        %v3754 = vmax.f32 %v3752, %v3753
        %v3755 = vrot.slane %v3754, 1
        %v3756 = vmax.f32 %v3754, %v3755
        %v3757 = vsel %vm3035, %v2804, -inf
        %v3758 = vrot.slane %v3757, 4
        %v3759 = vmax.f32 %v3757, %v3758
        %v3760 = vrot.slane %v3759, 2
        %v3761 = vmax.f32 %v3759, %v3760
        %v3762 = vrot.slane %v3761, 1
        %v3763 = vmax.f32 %v3761, %v3762
        %v3764 = vsel %vm3035, %v2812, -inf
        %v3765 = vrot.slane %v3764, 4
        %v3766 = vmax.f32 %v3764, %v3765
        %v3767 = vrot.slane %v3766, 2
        %v3768 = vmax.f32 %v3766, %v3767
        %v3769 = vrot.slane %v3768, 1
        %v3770 = vmax.f32 %v3768, %v3769
        %v3771 = vsel %vm3035, %v2820, -inf
        %v3772 = vrot.slane %v3771, 4
        %v3773 = vmax.f32 %v3771, %v3772
        %v3774 = vrot.slane %v3773, 2
        %v3775 = vmax.f32 %v3773, %v3774
        %v3776 = vrot.slane %v3775, 1
        %v3777 = vmax.f32 %v3775, %v3776
        %v3778 = vsel %vm3035, %v2819, -inf
        %v3779 = vrot.slane %v3778, 4
        %v3780 = vmax.f32 %v3778, %v3779
        %v3781 = vrot.slane %v3780, 2
        %v3782 = vmax.f32 %v3780, %v3781
        %v3783 = vrot.slane %v3782, 1
        %v3784 = vmax.f32 %v3782, %v3783
        %v3785 = vsel %vm3035, %v2821, -inf
        %v3786 = vrot.slane %v3785, 4
        %v3787 = vmax.f32 %v3785, %v3786
        %v3788 = vrot.slane %v3787, 2
        %v3789 = vmax.f32 %v3787, %v3788
        %v3790 = vrot.slane %v3789, 1
        %v3791 = vmax.f32 %v3789, %v3790
        %v3792 = vsel %vm3035, %v2829, -inf
        %v3793 = vrot.slane %v3792, 4
        %v3794 = vmax.f32 %v3792, %v3793
        %v3795 = vrot.slane %v3794, 2
        %v3796 = vmax.f32 %v3794, %v3795
        %v3797 = vrot.slane %v3796, 1
        %v3798 = vmax.f32 %v3796, %v3797
        %v3799 = vsel %vm3035, %v2837, -inf
        %v3800 = vrot.slane %v3799, 4
        %v3801 = vmax.f32 %v3799, %v3800
        %v3802 = vrot.slane %v3801, 2
        %v3803 = vmax.f32 %v3801, %v3802
        %v3804 = vrot.slane %v3803, 1
        %v3805 = vmax.f32 %v3803, %v3804
        %v3806 = vsel %vm3035, %v2836, -inf
        %v3807 = vrot.slane %v3806, 4
        %v3808 = vmax.f32 %v3806, %v3807
        %v3809 = vrot.slane %v3808, 2
        %v3810 = vmax.f32 %v3808, %v3809
        %v3811 = vrot.slane %v3810, 1
        %v3812 = vmax.f32 %v3810, %v3811
        %v3813 = vsel %vm3035, %v2838, -inf
        %v3814 = vrot.slane %v3813, 4
        %v3815 = vmax.f32 %v3813, %v3814
        %v3816 = vrot.slane %v3815, 2
        %v3817 = vmax.f32 %v3815, %v3816
        %v3818 = vrot.slane %v3817, 1
        %v3819 = vmax.f32 %v3817, %v3818
        %v3820 = vsel %vm3035, %v2846, -inf
        %v3821 = vrot.slane %v3820, 4
        %v3822 = vmax.f32 %v3820, %v3821
        %v3823 = vrot.slane %v3822, 2
        %v3824 = vmax.f32 %v3822, %v3823
        %v3825 = vrot.slane %v3824, 1
        %v3826 = vmax.f32 %v3824, %v3825
        %v3827 = vsel %vm3035, %v2854, -inf
        %v3828 = vrot.slane %v3827, 4
        %v3829 = vmax.f32 %v3827, %v3828
        %v3830 = vrot.slane %v3829, 2
        %v3831 = vmax.f32 %v3829, %v3830
        %v3832 = vrot.slane %v3831, 1
        %v3833 = vmax.f32 %v3831, %v3832
        %v3834 = vsel %vm3035, %v2853, -inf
        %v3835 = vrot.slane %v3834, 4
        %v3836 = vmax.f32 %v3834, %v3835
        %v3837 = vrot.slane %v3836, 2
        %v3838 = vmax.f32 %v3836, %v3837
        %v3839 = vrot.slane %v3838, 1
        %v3840 = vmax.f32 %v3838, %v3839
        %v3841 = vsel %vm3035, %v2855, -inf
        %v3842 = vrot.slane %v3841, 4
        %v3843 = vmax.f32 %v3841, %v3842
        %v3844 = vrot.slane %v3843, 2
        %v3845 = vmax.f32 %v3843, %v3844
        %v3846 = vrot.slane %v3845, 1
        %v3847 = vmax.f32 %v3845, %v3846
        %v3848 = vsel %vm3035, %v2863, -inf
        %v3849 = vrot.slane %v3848, 4
        %v3850 = vmax.f32 %v3848, %v3849
        %v3851 = vrot.slane %v3850, 2
        %v3852 = vmax.f32 %v3850, %v3851
        %v3853 = vrot.slane %v3852, 1
        %v3854 = vmax.f32 %v3852, %v3853
        %v3855 = vsel %vm3035, %v2871, -inf
        %v3856 = vrot.slane %v3855, 4
        %v3857 = vmax.f32 %v3855, %v3856
        %v3858 = vrot.slane %v3857, 2
        %v3859 = vmax.f32 %v3857, %v3858
        %v3860 = vrot.slane %v3859, 1
        %v3861 = vmax.f32 %v3859, %v3860
        %v3862 = vsel %vm3035, %v2870, -inf
        %v3863 = vrot.slane %v3862, 4
        %v3864 = vmax.f32 %v3862, %v3863
        %v3865 = vrot.slane %v3864, 2
        %v3866 = vmax.f32 %v3864, %v3865
        %v3867 = vrot.slane %v3866, 1
        %v3868 = vmax.f32 %v3866, %v3867
        %v3869 = vsel %vm3035, %v2872, -inf
        %v3870 = vrot.slane %v3869, 4
        %v3871 = vmax.f32 %v3869, %v3870
        %v3872 = vrot.slane %v3871, 2
        %v3873 = vmax.f32 %v3871, %v3872
        %v3874 = vrot.slane %v3873, 1
        %v3875 = vmax.f32 %v3873, %v3874
        %v3876 = vsel %vm3035, %v2880, -inf
        %v3877 = vrot.slane %v3876, 4
        %v3878 = vmax.f32 %v3876, %v3877
        %v3879 = vrot.slane %v3878, 2
        %v3880 = vmax.f32 %v3878, %v3879
        %v3881 = vrot.slane %v3880, 1
        %v3882 = vmax.f32 %v3880, %v3881
        %v3883 = vsel %vm3035, %v2888, -inf
        %v3884 = vrot.slane %v3883, 4
        %v3885 = vmax.f32 %v3883, %v3884
        %v3886 = vrot.slane %v3885, 2
        %v3887 = vmax.f32 %v3885, %v3886
        %v3888 = vrot.slane %v3887, 1
        %v3889 = vmax.f32 %v3887, %v3888
        %v3890 = vsel %vm3035, %v2887, -inf
        %v3891 = vrot.slane %v3890, 4
        %v3892 = vmax.f32 %v3890, %v3891
        %v3893 = vrot.slane %v3892, 2
        %v3894 = vmax.f32 %v3892, %v3893
        %v3895 = vrot.slane %v3894, 1
        %v3896 = vmax.f32 %v3894, %v3895
        %v3897 = vsel %vm3035, %v2889, -inf
        %v3898 = vrot.slane %v3897, 4
        %v3899 = vmax.f32 %v3897, %v3898
        %v3900 = vrot.slane %v3899, 2
        %v3901 = vmax.f32 %v3899, %v3900
        %v3902 = vrot.slane %v3901, 1
        %v3903 = vmax.f32 %v3901, %v3902
        %v3904 = vsel %vm3035, %v2897, -inf
        %v3905 = vrot.slane %v3904, 4
        %v3906 = vmax.f32 %v3904, %v3905
        %v3907 = vrot.slane %v3906, 2
        %v3908 = vmax.f32 %v3906, %v3907
        %v3909 = vrot.slane %v3908, 1
        %v3910 = vmax.f32 %v3908, %v3909
        %v3911 = vsel %vm3035, %v2905, -inf
        %v3912 = vrot.slane %v3911, 4
        %v3913 = vmax.f32 %v3911, %v3912
        %v3914 = vrot.slane %v3913, 2
        %v3915 = vmax.f32 %v3913, %v3914
        %v3916 = vrot.slane %v3915, 1
        %v3917 = vmax.f32 %v3915, %v3916
        %v3918 = vsel %vm3035, %v2904, -inf
        %v3919 = vrot.slane %v3918, 4
        %v3920 = vmax.f32 %v3918, %v3919
        %v3921 = vrot.slane %v3920, 2
        %v3922 = vmax.f32 %v3920, %v3921
        %v3923 = vrot.slane %v3922, 1
        %v3924 = vmax.f32 %v3922, %v3923
        %v3925 = vsel %vm3035, %v2906, -inf
        %v3926 = vrot.slane %v3925, 4
        %v3927 = vmax.f32 %v3925, %v3926
        %v3928 = vrot.slane %v3927, 2
        %v3929 = vmax.f32 %v3927, %v3928
        %v3930 = vrot.slane %v3929, 1
        %v3931 = vmax.f32 %v3929, %v3930
        %vm3932 = vcmask 97280
        %v3933 = vsel %vm3932, %v3042, -inf
        %v3934 = vsel %vm3932, %v3098, -inf
        %v3935 = vmax.f32 %v3933, %v3934
        %v3936 = vsel %vm3932, %v3049, -inf
        %v3937 = vsel %vm3932, %v3105, -inf
        %v3938 = vmax.f32 %v3936, %v3937
        %v3939 = vsel %vm3932, %v3056, -inf
        %v3940 = vsel %vm3932, %v3112, -inf
        %v3941 = vmax.f32 %v3939, %v3940
        %v3942 = vsel %vm3932, %v3063, -inf
        %v3943 = vsel %vm3932, %v3119, -inf
        %v3944 = vmax.f32 %v3942, %v3943
        %v3945 = vsel %vm3932, %v3070, -inf
        %v3946 = vsel %vm3932, %v3126, -inf
        %v3947 = vmax.f32 %v3945, %v3946
        %v3948 = vsel %vm3932, %v3077, -inf
        %v3949 = vsel %vm3932, %v3133, -inf
        %v3950 = vmax.f32 %v3948, %v3949
        %v3951 = vsel %vm3932, %v3084, -inf
        %v3952 = vsel %vm3932, %v3140, -inf
        %v3953 = vmax.f32 %v3951, %v3952
        %v3954 = vsel %vm3932, %v3091, -inf
        %v3955 = vsel %vm3932, %v3147, -inf
        %v3956 = vmax.f32 %v3954, %v3955
        %v3957 = vsel %vm3932, %v3154, -inf
        %v3958 = vsel %vm3932, %v3210, -inf
        %v3959 = vmax.f32 %v3957, %v3958
        %v3960 = vsel %vm3932, %v3161, -inf
        %v3961 = vsel %vm3932, %v3217, -inf
        %v3962 = vmax.f32 %v3960, %v3961
        %v3963 = vsel %vm3932, %v3168, -inf
        %v3964 = vsel %vm3932, %v3224, -inf
        %v3965 = vmax.f32 %v3963, %v3964
        %v3966 = vsel %vm3932, %v3175, -inf
        %v3967 = vsel %vm3932, %v3231, -inf
        %v3968 = vmax.f32 %v3966, %v3967
        %v3969 = vsel %vm3932, %v3182, -inf
        %v3970 = vsel %vm3932, %v3238, -inf
        %v3971 = vmax.f32 %v3969, %v3970
        %v3972 = vsel %vm3932, %v3189, -inf
        %v3973 = vsel %vm3932, %v3245, -inf
        %v3974 = vmax.f32 %v3972, %v3973
        %v3975 = vsel %vm3932, %v3196, -inf
        %v3976 = vsel %vm3932, %v3252, -inf
        %v3977 = vmax.f32 %v3975, %v3976
        %v3978 = vsel %vm3932, %v3203, -inf
        %v3979 = vsel %vm3932, %v3259, -inf
        %v3980 = vmax.f32 %v3978, %v3979
        %v3981 = vsel %vm3932, %v3266, -inf
        %v3982 = vsel %vm3932, %v3322, -inf
        %v3983 = vmax.f32 %v3981, %v3982
        %v3984 = vsel %vm3932, %v3273, -inf
        %v3985 = vsel %vm3932, %v3329, -inf
        %v3986 = vmax.f32 %v3984, %v3985
        %v3987 = vsel %vm3932, %v3280, -inf
        %v3988 = vsel %vm3932, %v3336, -inf
        %v3989 = vmax.f32 %v3987, %v3988
        %v3990 = vsel %vm3932, %v3287, -inf
        %v3991 = vsel %vm3932, %v3343, -inf
        %v3992 = vmax.f32 %v3990, %v3991
        %v3993 = vsel %vm3932, %v3294, -inf
        %v3994 = vsel %vm3932, %v3350, -inf
        %v3995 = vmax.f32 %v3993, %v3994
        %v3996 = vsel %vm3932, %v3301, -inf
        %v3997 = vsel %vm3932, %v3357, -inf
        %v3998 = vmax.f32 %v3996, %v3997
        %v3999 = vsel %vm3932, %v3308, -inf
        %v4000 = vsel %vm3932, %v3364, -inf
        %v4001 = vmax.f32 %v3999, %v4000
        %v4002 = vsel %vm3932, %v3315, -inf
        %v4003 = vsel %vm3932, %v3371, -inf
        %v4004 = vmax.f32 %v4002, %v4003
        %v4005 = vsel %vm3932, %v3378, -inf
        %v4006 = vsel %vm3932, %v3434, -inf
        %v4007 = vmax.f32 %v4005, %v4006
        %v4008 = vsel %vm3932, %v3385, -inf
        %v4009 = vsel %vm3932, %v3441, -inf
        %v4010 = vmax.f32 %v4008, %v4009
        %v4011 = vsel %vm3932, %v3392, -inf
        %v4012 = vsel %vm3932, %v3448, -inf
        %v4013 = vmax.f32 %v4011, %v4012
        %v4014 = vsel %vm3932, %v3399, -inf
        %v4015 = vsel %vm3932, %v3455, -inf
        %v4016 = vmax.f32 %v4014, %v4015
        %v4017 = vsel %vm3932, %v3406, -inf
        %v4018 = vsel %vm3932, %v3462, -inf
        %v4019 = vmax.f32 %v4017, %v4018
        %v4020 = vsel %vm3932, %v3413, -inf
        %v4021 = vsel %vm3932, %v3469, -inf
        %v4022 = vmax.f32 %v4020, %v4021
        %v4023 = vsel %vm3932, %v3420, -inf
        %v4024 = vsel %vm3932, %v3476, -inf
        %v4025 = vmax.f32 %v4023, %v4024
        %v4026 = vsel %vm3932, %v3427, -inf
        %v4027 = vsel %vm3932, %v3483, -inf
        %v4028 = vmax.f32 %v4026, %v4027
        %v4029 = vsel %vm3932, %v3490, -inf
        %v4030 = vsel %vm3932, %v3546, -inf
        %v4031 = vmax.f32 %v4029, %v4030
        %v4032 = vsel %vm3932, %v3497, -inf
        %v4033 = vsel %vm3932, %v3553, -inf
        %v4034 = vmax.f32 %v4032, %v4033
        %v4035 = vsel %vm3932, %v3504, -inf
        %v4036 = vsel %vm3932, %v3560, -inf
        %v4037 = vmax.f32 %v4035, %v4036
        %v4038 = vsel %vm3932, %v3511, -inf
        %v4039 = vsel %vm3932, %v3567, -inf
        %v4040 = vmax.f32 %v4038, %v4039
        %v4041 = vsel %vm3932, %v3518, -inf
        %v4042 = vsel %vm3932, %v3574, -inf
        %v4043 = vmax.f32 %v4041, %v4042
        %v4044 = vsel %vm3932, %v3525, -inf
        %v4045 = vsel %vm3932, %v3581, -inf
        %v4046 = vmax.f32 %v4044, %v4045
        %v4047 = vsel %vm3932, %v3532, -inf
        %v4048 = vsel %vm3932, %v3588, -inf
        %v4049 = vmax.f32 %v4047, %v4048
        %v4050 = vsel %vm3932, %v3539, -inf
        %v4051 = vsel %vm3932, %v3595, -inf
        %v4052 = vmax.f32 %v4050, %v4051
        %v4053 = vsel %vm3932, %v3602, -inf
        %v4054 = vsel %vm3932, %v3658, -inf
        %v4055 = vmax.f32 %v4053, %v4054
        %v4056 = vsel %vm3932, %v3609, -inf
        %v4057 = vsel %vm3932, %v3665, -inf
        %v4058 = vmax.f32 %v4056, %v4057
        %v4059 = vsel %vm3932, %v3616, -inf
        %v4060 = vsel %vm3932, %v3672, -inf
        %v4061 = vmax.f32 %v4059, %v4060
        %v4062 = vsel %vm3932, %v3623, -inf
        %v4063 = vsel %vm3932, %v3679, -inf
        %v4064 = vmax.f32 %v4062, %v4063
        %v4065 = vsel %vm3932, %v3630, -inf
        %v4066 = vsel %vm3932, %v3686, -inf
        %v4067 = vmax.f32 %v4065, %v4066
        %v4068 = vsel %vm3932, %v3637, -inf
        %v4069 = vsel %vm3932, %v3693, -inf
        %v4070 = vmax.f32 %v4068, %v4069
        %v4071 = vsel %vm3932, %v3644, -inf
        %v4072 = vsel %vm3932, %v3700, -inf
        %v4073 = vmax.f32 %v4071, %v4072
        %v4074 = vsel %vm3932, %v3651, -inf
        %v4075 = vsel %vm3932, %v3707, -inf
        %v4076 = vmax.f32 %v4074, %v4075
        %v4077 = vsel %vm3932, %v3714, -inf
        %v4078 = vsel %vm3932, %v3770, -inf
        %v4079 = vmax.f32 %v4077, %v4078
        %v4080 = vsel %vm3932, %v3721, -inf
        %v4081 = vsel %vm3932, %v3777, -inf
        %v4082 = vmax.f32 %v4080, %v4081
        %v4083 = vsel %vm3932, %v3728, -inf
        %v4084 = vsel %vm3932, %v3784, -inf
        %v4085 = vmax.f32 %v4083, %v4084
        %v4086 = vsel %vm3932, %v3735, -inf
        %v4087 = vsel %vm3932, %v3791, -inf
        %v4088 = vmax.f32 %v4086, %v4087
        %v4089 = vsel %vm3932, %v3742, -inf
        %v4090 = vsel %vm3932, %v3798, -inf
        %v4091 = vmax.f32 %v4089, %v4090
        %v4092 = vsel %vm3932, %v3749, -inf
        %v4093 = vsel %vm3932, %v3805, -inf
        %v4094 = vmax.f32 %v4092, %v4093
        %v4095 = vsel %vm3932, %v3756, -inf
        %v4096 = vsel %vm3932, %v3812, -inf
        %v4097 = vmax.f32 %v4095, %v4096
        %v4098 = vsel %vm3932, %v3763, -inf
        %v4099 = vsel %vm3932, %v3819, -inf
        %v4100 = vmax.f32 %v4098, %v4099
        %v4101 = vsel %vm3932, %v3826, -inf
        %v4102 = vsel %vm3932, %v3882, -inf
        %v4103 = vmax.f32 %v4101, %v4102
        %v4104 = vsel %vm3932, %v3833, -inf
        %v4105 = vsel %vm3932, %v3889, -inf
        %v4106 = vmax.f32 %v4104, %v4105
        %v4107 = vsel %vm3932, %v3840, -inf
        %v4108 = vsel %vm3932, %v3896, -inf
        %v4109 = vmax.f32 %v4107, %v4108
        %v4110 = vsel %vm3932, %v3847, -inf
        %v4111 = vsel %vm3932, %v3903, -inf
        %v4112 = vmax.f32 %v4110, %v4111
        %v4113 = vsel %vm3932, %v3854, -inf
        %v4114 = vsel %vm3932, %v3910, -inf
        %v4115 = vmax.f32 %v4113, %v4114
        %v4116 = vsel %vm3932, %v3861, -inf
        %v4117 = vsel %vm3932, %v3917, -inf
        %v4118 = vmax.f32 %v4116, %v4117
        %v4119 = vsel %vm3932, %v3868, -inf
        %v4120 = vsel %vm3932, %v3924, -inf
        %v4121 = vmax.f32 %v4119, %v4120
        %v4122 = vsel %vm3932, %v3875, -inf
        %v4123 = vsel %vm3932, %v3931, -inf
        %v4124 = vmax.f32 %v4122, %v4123
        %4125 = vst.msk [vmem:[#allocation4] sm:$0xff] %vm3932, 0.0
        %4126 = vst.msk [vmem:[#allocation4 + $0x8] sm:$0x3] %vm3035, 0.0
        %4127 = vst.msk [vmem:[#allocation4 + $0x10] sm:$0xff] %vm3932, 0.0
        %4128 = vst.msk [vmem:[#allocation4 + $0x18] sm:$0x3] %vm3035, 0.0
        %4129 = vst.msk [vmem:[#allocation4 + $0x20] sm:$0xff] %vm3932, 0.0
        %4130 = vst.msk [vmem:[#allocation4 + $0x28] sm:$0x3] %vm3035, 0.0
        %4131 = vst.msk [vmem:[#allocation4 + $0x30] sm:$0xff] %vm3932, 0.0
        %4132 = vst.msk [vmem:[#allocation4 + $0x38] sm:$0x3] %vm3035, 0.0
        %4133 = vst.msk [vmem:[#allocation4 + $0x40] sm:$0xff] %vm3932, 0.0
        %4134 = vst.msk [vmem:[#allocation4 + $0x48] sm:$0x3] %vm3035, 0.0
        %4135 = vst.msk [vmem:[#allocation4 + $0x50] sm:$0xff] %vm3932, 0.0
        %4136 = vst.msk [vmem:[#allocation4 + $0x58] sm:$0x3] %vm3035, 0.0
        %4137 = vst.msk [vmem:[#allocation4 + $0x60] sm:$0xff] %vm3932, 0.0
        %4138 = vst.msk [vmem:[#allocation4 + $0x68] sm:$0x3] %vm3035, 0.0
        %4139 = vst.msk [vmem:[#allocation4 + $0x70] sm:$0xff] %vm3932, 0.0
        %4140 = vst.msk [vmem:[#allocation4 + $0x78] sm:$0x3] %vm3035, 0.0
        %4141 = vst.msk [vmem:[#allocation4 + $0x80] sm:$0xff] %vm3932, 0.0
        %4142 = vst.msk [vmem:[#allocation4 + $0x88] sm:$0x3] %vm3035, 0.0
        %4143 = vst.msk [vmem:[#allocation4 + $0x90] sm:$0xff] %vm3932, 0.0
        %4144 = vst.msk [vmem:[#allocation4 + $0x98] sm:$0x3] %vm3035, 0.0
        %vm4209 = vcmask 1041409
        %v4210 = vsel %vm4209, %v3938, %v3935
        %vm4211 = vcmask 1042434
        %v4212 = vsel %vm4211, %v3941, %v4210
        %vm4213 = vcmask 1043459
        %v4214 = vsel %vm4213, %v3944, %v4212
        %vm4215 = vcmask 1044484
        %v4216 = vsel %vm4215, %v3947, %v4214
        %vm4217 = vcmask 1045509
        %v4218 = vsel %vm4217, %v3950, %v4216
        %vm4219 = vcmask 1046534
        %v4220 = vsel %vm4219, %v3953, %v4218
        %vm4221 = vcmask 1047559
        %v4222 = vsel %vm4221, %v3956, %v4220
        %v4223 = vsel %vm4209, %v3962, %v3959
        %v4224 = vsel %vm4211, %v3965, %v4223
        %v4225 = vsel %vm4213, %v3968, %v4224
        %v4226 = vsel %vm4215, %v3971, %v4225
        %v4227 = vsel %vm4217, %v3974, %v4226
        %v4228 = vsel %vm4219, %v3977, %v4227
        %v4229 = vsel %vm4221, %v3980, %v4228
        %v4230 = vsel %vm4209, %v3986, %v3983
        %v4231 = vsel %vm4211, %v3989, %v4230
        %v4232 = vsel %vm4213, %v3992, %v4231
        %v4233 = vsel %vm4215, %v3995, %v4232
        %v4234 = vsel %vm4217, %v3998, %v4233
        %v4235 = vsel %vm4219, %v4001, %v4234
        %v4236 = vsel %vm4221, %v4004, %v4235
        %v4237 = vsel %vm4209, %v4010, %v4007
        %v4238 = vsel %vm4211, %v4013, %v4237
        %v4239 = vsel %vm4213, %v4016, %v4238
        %v4240 = vsel %vm4215, %v4019, %v4239
        %v4241 = vsel %vm4217, %v4022, %v4240
        %v4242 = vsel %vm4219, %v4025, %v4241
        %v4243 = vsel %vm4221, %v4028, %v4242
        %v4244 = vsel %vm4209, %v4034, %v4031
        %v4245 = vsel %vm4211, %v4037, %v4244
        %v4246 = vsel %vm4213, %v4040, %v4245
        %v4247 = vsel %vm4215, %v4043, %v4246
        %v4248 = vsel %vm4217, %v4046, %v4247
        %v4249 = vsel %vm4219, %v4049, %v4248
        %v4250 = vsel %vm4221, %v4052, %v4249
        %v4251 = vsel %vm4209, %v4058, %v4055
        %v4252 = vsel %vm4211, %v4061, %v4251
        %v4253 = vsel %vm4213, %v4064, %v4252
        %v4254 = vsel %vm4215, %v4067, %v4253
        %v4255 = vsel %vm4217, %v4070, %v4254
        %v4256 = vsel %vm4219, %v4073, %v4255
        %v4257 = vsel %vm4221, %v4076, %v4256
        %v4258 = vsel %vm4209, %v4082, %v4079
        %v4259 = vsel %vm4211, %v4085, %v4258
        %v4260 = vsel %vm4213, %v4088, %v4259
        %v4261 = vsel %vm4215, %v4091, %v4260
        %v4262 = vsel %vm4217, %v4094, %v4261
        %v4263 = vsel %vm4219, %v4097, %v4262
        %v4264 = vsel %vm4221, %v4100, %v4263
        %v4265 = vsel %vm4209, %v4106, %v4103
        %v4266 = vsel %vm4211, %v4109, %v4265
        %v4267 = vsel %vm4213, %v4112, %v4266
        %v4268 = vsel %vm4215, %v4115, %v4267
        %v4269 = vsel %vm4217, %v4118, %v4268
        %v4270 = vsel %vm4219, %v4121, %v4269
        %v4271 = vsel %vm4221, %v4124, %v4270
        %s4280 = scalar_lea.vmem [#allocation4], 16
        %4281 = vst.msk [vmem:[%s4280 + $0x1] sm:$0xff] %vm3932, %v4222
        %4282 = vst.msk [vmem:[%s4280 + $0x11] sm:$0xff] %vm3932, %v4229
        %4283 = vst.msk [vmem:[%s4280 + $0x21] sm:$0xff] %vm3932, %v4236
        %4284 = vst.msk [vmem:[%s4280 + $0x31] sm:$0xff] %vm3932, %v4243
        %4285 = vst.msk [vmem:[%s4280 + $0x41] sm:$0xff] %vm3932, %v4250
        %4286 = vst.msk [vmem:[%s4280 + $0x51] sm:$0xff] %vm3932, %v4257
        %4287 = vst.msk [vmem:[%s4280 + $0x61] sm:$0xff] %vm3932, %v4264
        %4288 = vst.msk [vmem:[%s4280 + $0x71] sm:$0xff] %vm3932, %v4271
        %v4289 = vld [vmem:[#allocation4] sm:$0xff]
        %v4290 = vld [vmem:[#allocation4 + $0x8] sm:$0x3]
        %v4291 = vld [vmem:[#allocation4 + $0x10] sm:$0xff]
        %v4292 = vld [vmem:[#allocation4 + $0x18] sm:$0x3]
        %v4293 = vld [vmem:[#allocation4 + $0x20] sm:$0xff]
        %v4294 = vld [vmem:[#allocation4 + $0x28] sm:$0x3]
        %v4295 = vld [vmem:[#allocation4 + $0x30] sm:$0xff]
        %v4296 = vld [vmem:[#allocation4 + $0x38] sm:$0x3]
        %v4297 = vld [vmem:[#allocation4 + $0x40] sm:$0xff]
        %v4298 = vld [vmem:[#allocation4 + $0x48] sm:$0x3]
        %v4299 = vld [vmem:[#allocation4 + $0x50] sm:$0xff]
        %v4300 = vld [vmem:[#allocation4 + $0x58] sm:$0x3]
        %v4301 = vld [vmem:[#allocation4 + $0x60] sm:$0xff]
        %v4302 = vld [vmem:[#allocation4 + $0x68] sm:$0x3]
        %v4303 = vld [vmem:[#allocation4 + $0x70] sm:$0xff]
        %v4304 = vld [vmem:[#allocation4 + $0x78] sm:$0x3]
        %v4305 = vld [vmem:[#allocation4 + $0x80] sm:$0xff]
        %v4306 = vld [vmem:[#allocation4 + $0x88] sm:$0x3]
        %v4307 = vld [vmem:[#allocation4 + $0x90] sm:$0xff]
        %v4308 = vld [vmem:[#allocation4 + $0x98] sm:$0x3]
        %4309 = vst.msk [vmem:[#allocation5] sm:$0xff] %vm3932, %v4289
        %4310 = vst.msk [vmem:[#allocation5 + $0x8] sm:$0xff] %vm3932, %v4291
        %4311 = vst.msk [vmem:[#allocation5 + $0x10] sm:$0xff] %vm3932, %v4293
        %4312 = vst.msk [vmem:[#allocation5 + $0x18] sm:$0xff] %vm3932, %v4295
        %4313 = vst.msk [vmem:[#allocation5 + $0x20] sm:$0xff] %vm3932, %v4297
        %4314 = vst.msk [vmem:[#allocation5 + $0x28] sm:$0xff] %vm3932, %v4299
        %4315 = vst.msk [vmem:[#allocation5 + $0x30] sm:$0xff] %vm3932, %v4301
        %4316 = vst.msk [vmem:[#allocation5 + $0x38] sm:$0xff] %vm3932, %v4303
        %v4333 = vrot.slane %v4289, 1
        %v4334 = vrot.slane %v4290, 1
        %v4335 = vsel %vm639, %v4333, %v4334
        %v4336 = vrot.slane %v4291, 1
        %v4337 = vrot.slane %v4292, 1
        %v4338 = vsel %vm639, %v4336, %v4337
        %v4339 = vrot.slane %v4293, 1
        %v4340 = vrot.slane %v4294, 1
        %v4341 = vsel %vm639, %v4339, %v4340
        %v4342 = vrot.slane %v4295, 1
        %v4343 = vrot.slane %v4296, 1
        %v4344 = vsel %vm639, %v4342, %v4343
        %v4345 = vrot.slane %v4297, 1
        %v4346 = vrot.slane %v4298, 1
        %v4347 = vsel %vm639, %v4345, %v4346
        %v4348 = vrot.slane %v4299, 1
        %v4349 = vrot.slane %v4300, 1
        %v4350 = vsel %vm639, %v4348, %v4349
        %v4351 = vrot.slane %v4301, 1
        %v4352 = vrot.slane %v4302, 1
        %v4353 = vsel %vm639, %v4351, %v4352
        %v4354 = vrot.slane %v4303, 1
        %v4355 = vrot.slane %v4304, 1
        %v4356 = vsel %vm639, %v4354, %v4355
        %4357 = vrot.lane.b32.xlu0 %v4335, 12
        %v4358 = vpop.permute.xlu0 %4357
        %4359 = vrot.lane.b32.xlu0 %v4338, 12
        %v4360 = vpop.permute.xlu0 %4359
        %4361 = vrot.lane.b32.xlu0 %v4341, 12
        %v4362 = vpop.permute.xlu0 %4361
        %4363 = vrot.lane.b32.xlu0 %v4344, 12
        %v4364 = vpop.permute.xlu0 %4363
        %4365 = vrot.lane.b32.xlu0 %v4347, 12
        %v4366 = vpop.permute.xlu0 %4365
        %4367 = vrot.lane.b32.xlu0 %v4350, 12
        %v4368 = vpop.permute.xlu0 %4367
        %4369 = vrot.lane.b32.xlu0 %v4353, 12
        %v4370 = vpop.permute.xlu0 %4369
        %4371 = vrot.lane.b32.xlu0 %v4356, 12
        %v4372 = vpop.permute.xlu0 %4371
        %vm4381 = vcmask 195680
        %4382 = vst.msk [vmem:[#allocation5] sm:$0xff] %vm4381, %v4358
        %4383 = vst.msk [vmem:[#allocation5 + $0x8] sm:$0xff] %vm4381, %v4360
        %4384 = vst.msk [vmem:[#allocation5 + $0x10] sm:$0xff] %vm4381, %v4362
        %4385 = vst.msk [vmem:[#allocation5 + $0x18] sm:$0xff] %vm4381, %v4364
        %4386 = vst.msk [vmem:[#allocation5 + $0x20] sm:$0xff] %vm4381, %v4366
        %4387 = vst.msk [vmem:[#allocation5 + $0x28] sm:$0xff] %vm4381, %v4368
        %4388 = vst.msk [vmem:[#allocation5 + $0x30] sm:$0xff] %vm4381, %v4370
        %4389 = vst.msk [vmem:[#allocation5 + $0x38] sm:$0xff] %vm4381, %v4372
        %v4390 = vrot.slane %v4289, 2
        %v4391 = vrot.slane %v4290, 2
        %v4392 = vsel %vm849, %v4390, %v4391
        %v4393 = vrot.slane %v4291, 2
        %v4394 = vrot.slane %v4292, 2
        %v4395 = vsel %vm849, %v4393, %v4394
        %v4396 = vrot.slane %v4293, 2
        %v4397 = vrot.slane %v4294, 2
        %v4398 = vsel %vm849, %v4396, %v4397
        %v4399 = vrot.slane %v4295, 2
        %v4400 = vrot.slane %v4296, 2
        %v4401 = vsel %vm849, %v4399, %v4400
        %v4402 = vrot.slane %v4297, 2
        %v4403 = vrot.slane %v4298, 2
        %v4404 = vsel %vm849, %v4402, %v4403
        %v4405 = vrot.slane %v4299, 2
        %v4406 = vrot.slane %v4300, 2
        %v4407 = vsel %vm849, %v4405, %v4406
        %v4408 = vrot.slane %v4301, 2
        %v4409 = vrot.slane %v4302, 2
        %v4410 = vsel %vm849, %v4408, %v4409
        %v4411 = vrot.slane %v4303, 2
        %v4412 = vrot.slane %v4304, 2
        %v4413 = vsel %vm849, %v4411, %v4412
        %4414 = vrot.lane.b32.xlu0 %v4392, 24
        %v4415 = vpop.permute.xlu0 %4414
        %4416 = vrot.lane.b32.xlu0 %v4395, 24
        %v4417 = vpop.permute.xlu0 %4416
        %4418 = vrot.lane.b32.xlu0 %v4398, 24
        %v4419 = vpop.permute.xlu0 %4418
        %4420 = vrot.lane.b32.xlu0 %v4401, 24
        %v4421 = vpop.permute.xlu0 %4420
        %4422 = vrot.lane.b32.xlu0 %v4404, 24
        %v4423 = vpop.permute.xlu0 %4422
        %4424 = vrot.lane.b32.xlu0 %v4407, 24
        %v4425 = vpop.permute.xlu0 %4424
        %4426 = vrot.lane.b32.xlu0 %v4410, 24
        %v4427 = vpop.permute.xlu0 %4426
        %4428 = vrot.lane.b32.xlu0 %v4413, 24
        %v4429 = vpop.permute.xlu0 %4428
        %vm4438 = vcmask 294080
        %4439 = vst.msk [vmem:[#allocation5] sm:$0xff] %vm4438, %v4415
        %4440 = vst.msk [vmem:[#allocation5 + $0x8] sm:$0xff] %vm4438, %v4417
        %4441 = vst.msk [vmem:[#allocation5 + $0x10] sm:$0xff] %vm4438, %v4419
        %4442 = vst.msk [vmem:[#allocation5 + $0x18] sm:$0xff] %vm4438, %v4421
        %4443 = vst.msk [vmem:[#allocation5 + $0x20] sm:$0xff] %vm4438, %v4423
        %4444 = vst.msk [vmem:[#allocation5 + $0x28] sm:$0xff] %vm4438, %v4425
        %4445 = vst.msk [vmem:[#allocation5 + $0x30] sm:$0xff] %vm4438, %v4427
        %4446 = vst.msk [vmem:[#allocation5 + $0x38] sm:$0xff] %vm4438, %v4429
        %4448 = vrot.lane.b32.xlu0 %v4291, 36
        %v4449 = vpop.permute.xlu0 %4448
        %4450 = vrot.lane.b32.xlu0 %v4293, 36
        %v4451 = vpop.permute.xlu0 %4450
        %4452 = vrot.lane.b32.xlu0 %v4295, 36
        %v4453 = vpop.permute.xlu0 %4452
        %4454 = vrot.lane.b32.xlu0 %v4297, 36
        %v4455 = vpop.permute.xlu0 %4454
        %4456 = vrot.lane.b32.xlu0 %v4299, 36
        %v4457 = vpop.permute.xlu0 %4456
        %4458 = vrot.lane.b32.xlu0 %v4301, 36
        %v4459 = vpop.permute.xlu0 %4458
        %4460 = vrot.lane.b32.xlu0 %v4303, 36
        %v4461 = vpop.permute.xlu0 %4460
        %4462 = vrot.lane.b32.xlu0 %v4305, 36
        %v4463 = vpop.permute.xlu0 %4462
        %vm4472 = vcmask 392480
        %4473 = vst.msk [vmem:[#allocation5] sm:$0xff] %vm4472, %v4449
        %4474 = vst.msk [vmem:[#allocation5 + $0x8] sm:$0xff] %vm4472, %v4451
        %4475 = vst.msk [vmem:[#allocation5 + $0x10] sm:$0xff] %vm4472, %v4453
        %4476 = vst.msk [vmem:[#allocation5 + $0x18] sm:$0xff] %vm4472, %v4455
        %4477 = vst.msk [vmem:[#allocation5 + $0x20] sm:$0xff] %vm4472, %v4457
        %4478 = vst.msk [vmem:[#allocation5 + $0x28] sm:$0xff] %vm4472, %v4459
        %4479 = vst.msk [vmem:[#allocation5 + $0x30] sm:$0xff] %vm4472, %v4461
        %4480 = vst.msk [vmem:[#allocation5 + $0x38] sm:$0xff] %vm4472, %v4463
        %v4482 = vrot.slane %v4305, 1
        %v4483 = vrot.slane %v4306, 1
        %v4484 = vsel %vm639, %v4482, %v4483
        %4485 = vrot.lane.b32.xlu0 %v4338, 48
        %v4486 = vpop.permute.xlu0 %4485
        %4487 = vrot.lane.b32.xlu0 %v4341, 48
        %v4488 = vpop.permute.xlu0 %4487
        %4489 = vrot.lane.b32.xlu0 %v4344, 48
        %v4490 = vpop.permute.xlu0 %4489
        %4491 = vrot.lane.b32.xlu0 %v4347, 48
        %v4492 = vpop.permute.xlu0 %4491
        %4493 = vrot.lane.b32.xlu0 %v4350, 48
        %v4494 = vpop.permute.xlu0 %4493
        %4495 = vrot.lane.b32.xlu0 %v4353, 48
        %v4496 = vpop.permute.xlu0 %4495
        %4497 = vrot.lane.b32.xlu0 %v4356, 48
        %v4498 = vpop.permute.xlu0 %4497
        %4499 = vrot.lane.b32.xlu0 %v4484, 48
        %v4500 = vpop.permute.xlu0 %4499
        %vm4509 = vcmask 490880
        %4510 = vst.msk [vmem:[#allocation5] sm:$0xff] %vm4509, %v4486
        %4511 = vst.msk [vmem:[#allocation5 + $0x8] sm:$0xff] %vm4509, %v4488
        %4512 = vst.msk [vmem:[#allocation5 + $0x10] sm:$0xff] %vm4509, %v4490
        %4513 = vst.msk [vmem:[#allocation5 + $0x18] sm:$0xff] %vm4509, %v4492
        %4514 = vst.msk [vmem:[#allocation5 + $0x20] sm:$0xff] %vm4509, %v4494
        %4515 = vst.msk [vmem:[#allocation5 + $0x28] sm:$0xff] %vm4509, %v4496
        %4516 = vst.msk [vmem:[#allocation5 + $0x30] sm:$0xff] %vm4509, %v4498
        %4517 = vst.msk [vmem:[#allocation5 + $0x38] sm:$0xff] %vm4509, %v4500
        %v4518 = vrot.slane %v4305, 2
        %v4519 = vrot.slane %v4306, 2
        %v4520 = vsel %vm849, %v4518, %v4519
        %4521 = vrot.lane.b32.xlu0 %v4395, 60
        %v4522 = vpop.permute.xlu0 %4521
        %4523 = vrot.lane.b32.xlu0 %v4398, 60
        %v4524 = vpop.permute.xlu0 %4523
        %4525 = vrot.lane.b32.xlu0 %v4401, 60
        %v4526 = vpop.permute.xlu0 %4525
        %4527 = vrot.lane.b32.xlu0 %v4404, 60
        %v4528 = vpop.permute.xlu0 %4527
        %4529 = vrot.lane.b32.xlu0 %v4407, 60
        %v4530 = vpop.permute.xlu0 %4529
        %4531 = vrot.lane.b32.xlu0 %v4410, 60
        %v4532 = vpop.permute.xlu0 %4531
        %4533 = vrot.lane.b32.xlu0 %v4413, 60
        %v4534 = vpop.permute.xlu0 %4533
        %4535 = vrot.lane.b32.xlu0 %v4520, 60
        %v4536 = vpop.permute.xlu0 %4535
        %vm4545 = vcmask 589280
        %4546 = vst.msk [vmem:[#allocation5] sm:$0xff] %vm4545, %v4522
        %4547 = vst.msk [vmem:[#allocation5 + $0x8] sm:$0xff] %vm4545, %v4524
        %4548 = vst.msk [vmem:[#allocation5 + $0x10] sm:$0xff] %vm4545, %v4526
        %4549 = vst.msk [vmem:[#allocation5 + $0x18] sm:$0xff] %vm4545, %v4528
        %4550 = vst.msk [vmem:[#allocation5 + $0x20] sm:$0xff] %vm4545, %v4530
        %4551 = vst.msk [vmem:[#allocation5 + $0x28] sm:$0xff] %vm4545, %v4532
        %4552 = vst.msk [vmem:[#allocation5 + $0x30] sm:$0xff] %vm4545, %v4534
        %4553 = vst.msk [vmem:[#allocation5 + $0x38] sm:$0xff] %vm4545, %v4536
        %4555 = vrot.lane.b32.xlu0 %v4293, 72
        %v4556 = vpop.permute.xlu0 %4555
        %4557 = vrot.lane.b32.xlu0 %v4295, 72
        %v4558 = vpop.permute.xlu0 %4557
        %4559 = vrot.lane.b32.xlu0 %v4297, 72
        %v4560 = vpop.permute.xlu0 %4559
        %4561 = vrot.lane.b32.xlu0 %v4299, 72
        %v4562 = vpop.permute.xlu0 %4561
        %4563 = vrot.lane.b32.xlu0 %v4301, 72
        %v4564 = vpop.permute.xlu0 %4563
        %4565 = vrot.lane.b32.xlu0 %v4303, 72
        %v4566 = vpop.permute.xlu0 %4565
        %4567 = vrot.lane.b32.xlu0 %v4305, 72
        %v4568 = vpop.permute.xlu0 %4567
        %4569 = vrot.lane.b32.xlu0 %v4307, 72
        %v4570 = vpop.permute.xlu0 %4569
        %vm4579 = vcmask 687680
        %4580 = vst.msk [vmem:[#allocation5] sm:$0xff] %vm4579, %v4556
        %4581 = vst.msk [vmem:[#allocation5 + $0x8] sm:$0xff] %vm4579, %v4558
        %4582 = vst.msk [vmem:[#allocation5 + $0x10] sm:$0xff] %vm4579, %v4560
        %4583 = vst.msk [vmem:[#allocation5 + $0x18] sm:$0xff] %vm4579, %v4562
        %4584 = vst.msk [vmem:[#allocation5 + $0x20] sm:$0xff] %vm4579, %v4564
        %4585 = vst.msk [vmem:[#allocation5 + $0x28] sm:$0xff] %vm4579, %v4566
        %4586 = vst.msk [vmem:[#allocation5 + $0x30] sm:$0xff] %vm4579, %v4568
        %4587 = vst.msk [vmem:[#allocation5 + $0x38] sm:$0xff] %vm4579, %v4570
        %v4589 = vrot.slane %v4307, 1
        %v4590 = vrot.slane %v4308, 1
        %v4591 = vsel %vm639, %v4589, %v4590
        %4592 = vrot.lane.b32.xlu0 %v4341, 84
        %v4593 = vpop.permute.xlu0 %4592
        %4594 = vrot.lane.b32.xlu0 %v4344, 84
        %v4595 = vpop.permute.xlu0 %4594
        %4596 = vrot.lane.b32.xlu0 %v4347, 84
        %v4597 = vpop.permute.xlu0 %4596
        %4598 = vrot.lane.b32.xlu0 %v4350, 84
        %v4599 = vpop.permute.xlu0 %4598
        %4600 = vrot.lane.b32.xlu0 %v4353, 84
        %v4601 = vpop.permute.xlu0 %4600
        %4602 = vrot.lane.b32.xlu0 %v4356, 84
        %v4603 = vpop.permute.xlu0 %4602
        %4604 = vrot.lane.b32.xlu0 %v4484, 84
        %v4605 = vpop.permute.xlu0 %4604
        %4606 = vrot.lane.b32.xlu0 %v4591, 84
        %v4607 = vpop.permute.xlu0 %4606
        %vm4616 = vcmask 786080
        %4617 = vst.msk [vmem:[#allocation5] sm:$0xff] %vm4616, %v4593
        %4618 = vst.msk [vmem:[#allocation5 + $0x8] sm:$0xff] %vm4616, %v4595
        %4619 = vst.msk [vmem:[#allocation5 + $0x10] sm:$0xff] %vm4616, %v4597
        %4620 = vst.msk [vmem:[#allocation5 + $0x18] sm:$0xff] %vm4616, %v4599
        %4621 = vst.msk [vmem:[#allocation5 + $0x20] sm:$0xff] %vm4616, %v4601
        %4622 = vst.msk [vmem:[#allocation5 + $0x28] sm:$0xff] %vm4616, %v4603
        %4623 = vst.msk [vmem:[#allocation5 + $0x30] sm:$0xff] %vm4616, %v4605
        %4624 = vst.msk [vmem:[#allocation5 + $0x38] sm:$0xff] %vm4616, %v4607
        %v4625 = vrot.slane %v4307, 2
        %v4626 = vrot.slane %v4308, 2
        %v4627 = vsel %vm849, %v4625, %v4626
        %4628 = vrot.lane.b32.xlu0 %v4398, 96
        %v4629 = vpop.permute.xlu0 %4628
        %4630 = vrot.lane.b32.xlu0 %v4401, 96
        %v4631 = vpop.permute.xlu0 %4630
        %4632 = vrot.lane.b32.xlu0 %v4404, 96
        %v4633 = vpop.permute.xlu0 %4632
        %4634 = vrot.lane.b32.xlu0 %v4407, 96
        %v4635 = vpop.permute.xlu0 %4634
        %4636 = vrot.lane.b32.xlu0 %v4410, 96
        %v4637 = vpop.permute.xlu0 %4636
        %4638 = vrot.lane.b32.xlu0 %v4413, 96
        %v4639 = vpop.permute.xlu0 %4638
        %4640 = vrot.lane.b32.xlu0 %v4520, 96
        %v4641 = vpop.permute.xlu0 %4640
        %4642 = vrot.lane.b32.xlu0 %v4627, 96
        %v4643 = vpop.permute.xlu0 %4642
        %vm4652 = vcmask 884480
        %4653 = vst.msk [vmem:[#allocation5] sm:$0xff] %vm4652, %v4629
        %4654 = vst.msk [vmem:[#allocation5 + $0x8] sm:$0xff] %vm4652, %v4631
        %4655 = vst.msk [vmem:[#allocation5 + $0x10] sm:$0xff] %vm4652, %v4633
        %4656 = vst.msk [vmem:[#allocation5 + $0x18] sm:$0xff] %vm4652, %v4635
        %4657 = vst.msk [vmem:[#allocation5 + $0x20] sm:$0xff] %vm4652, %v4637
        %4658 = vst.msk [vmem:[#allocation5 + $0x28] sm:$0xff] %vm4652, %v4639
        %4659 = vst.msk [vmem:[#allocation5 + $0x30] sm:$0xff] %vm4652, %v4641
        %4660 = vst.msk [vmem:[#allocation5 + $0x38] sm:$0xff] %vm4652, %v4643
        %v4661 = vld [vmem:[#allocation5] sm:$0xff]
        %v4662 = vld [vmem:[#allocation5 + $0x8] sm:$0xff]
        %v4663 = vld [vmem:[#allocation5 + $0x10] sm:$0xff]
        %v4664 = vld [vmem:[#allocation5 + $0x18] sm:$0xff]
        %v4665 = vld [vmem:[#allocation5 + $0x20] sm:$0xff]
        %v4666 = vld [vmem:[#allocation5 + $0x28] sm:$0xff]
        %v4667 = vld [vmem:[#allocation5 + $0x30] sm:$0xff]
        %v4668 = vld [vmem:[#allocation5 + $0x38] sm:$0xff]
        %v4669 = vld [vmem:[%s4] sm:$0xff]
        %v4670 = vld [vmem:[%s4 + $0x8] sm:$0xff]
        %v4671 = vld [vmem:[%s4 + $0x10] sm:$0xff]
        %v4672 = vld [vmem:[%s4 + $0x18] sm:$0xff]
        %v4673 = vld [vmem:[%s4 + $0x20] sm:$0xff]
        %v4674 = vld [vmem:[%s4 + $0x28] sm:$0xff]
        %v4675 = vld [vmem:[%s4 + $0x30] sm:$0xff]
        %v4676 = vld [vmem:[%s4 + $0x38] sm:$0xff]
        %v4677 = vld [vmem:[%s4 + $0x40] sm:$0xff]
        %v4678 = vld [vmem:[%s4 + $0x48] sm:$0xff]
        %v4679 = vld [vmem:[%s4 + $0x50] sm:$0xff]
        %v4680 = vld [vmem:[%s4 + $0x58] sm:$0xff]
        %v4681 = vld [vmem:[%s4 + $0x60] sm:$0xff]
        %v4682 = vld [vmem:[%s4 + $0x68] sm:$0xf]
        %v4683 = vld [vmem:[%s5] sm:$0x1]
        %v4685 = vlaneseq
        %v4686 = vshrl.u32 %v4685, 7
        %v4687 = vsub.s32 0, %v4686
        %v4688 = vrot.slane %v4683, %v4687
        %vm4690 = vcmask 883712
        %v4692 = vsel %vm4690, %v4661, 0
        %v4695 = vsel %vm4690, %v4662, 0
        %v4698 = vsel %vm4690, %v4663, 0
        %v4701 = vsel %vm4690, %v4664, 0
        %v4704 = vsel %vm4690, %v4665, 0
        %v4707 = vsel %vm4690, %v4666, 0
        %v4710 = vsel %vm4690, %v4667, 0
        %v4713 = vsel %vm4690, %v4668, 0
        %vm4715 = vcmask 1043456
        %v4717 = vsel %vm4715, %v4682, 0
        %4719 = vmatprep.subr.mxu0 0.0
        %4720 = vmatpush1.msra.mxu0 0.0
        %4721 = vmatprep.subr.mxu0 0.0
        %4722 = vmatpush1.msra.mxu0 0.0
        %4723 = vmatprep.subr.mxu0 0.0
        %4724 = vmatpush1.msra.mxu0 %v4717
        %4725 = vmatprep.subr.mxu0 0.0
        %4726 = vmatpush1.msra.mxu0 %v4681
        %4727 = vmatprep.subr.mxu0 0.0
        %4728 = vmatpush1.msra.mxu0 %v4680
        %4729 = vmatprep.subr.mxu0 0.0
        %4730 = vmatpush1.msra.mxu0 %v4679
        %4731 = vmatprep.subr.mxu0 0.0
        %4732 = vmatpush1.msra.mxu0 %v4678
        %4733 = vmatprep.subr.mxu0 0.0
        %4734 = vmatpush1.msra.mxu0 %v4677
        %4735 = vmatprep.subr.mxu0 0.0
        %4736 = vmatpush1.msra.mxu0 %v4676
        %4737 = vmatprep.subr.mxu0 0.0
        %4738 = vmatpush1.msra.mxu0 %v4675
        %4739 = vmatprep.subr.mxu0 0.0
        %4740 = vmatpush1.msra.mxu0 %v4674
        %4741 = vmatprep.subr.mxu0 0.0
        %4742 = vmatpush1.msra.mxu0 %v4673
        %4743 = vmatprep.subr.mxu0 0.0
        %4744 = vmatpush1.msra.mxu0 %v4672
        %4745 = vmatprep.subr.mxu0 0.0
        %4746 = vmatpush1.msra.mxu0 %v4671
        %4747 = vmatprep.subr.mxu0 0.0
        %4748 = vmatpush1.msra.mxu0 %v4670
        %4749 = vmatprep.subr.mxu0 0.0
        %4750 = vmatpush1.msra.mxu0 %v4669
        %4751 = vmatprep.subr.mxu0 0.0
        %4752 = vmatpush2.msra.mxu0 0.0
        %4753 = vmatprep.subr.mxu0 0.0
        %4754 = vmatpush2.msra.mxu0 0.0
        %4755 = vmatprep.subr.mxu0 0.0
        %4756 = vmatpush2.msra.mxu0 0.0
        %4757 = vmatprep.subr.mxu0 0.0
        %4758 = vmatpush2.msra.mxu0 0.0
        %4759 = vmatprep.subr.mxu0 0.0
        %4760 = vmatpush2.msra.mxu0 0.0
        %4761 = vmatprep.subr.mxu0 0.0
        %4762 = vmatpush2.msra.mxu0 0.0
        %4763 = vmatprep.subr.mxu0 0.0
        %4764 = vmatpush2.msra.mxu0 0.0
        %4765 = vmatprep.subr.mxu0 0.0
        %4766 = vmatpush2.msra.mxu0 0.0
        %4767 = vmatprep.subr.mxu0 0.0
        %4768 = vmatpush2.msra.mxu0 0.0
        %4769 = vmatprep.subr.mxu0 0.0
        %4770 = vmatpush2.msra.mxu0 0.0
        %4771 = vmatprep.subr.mxu0 0.0
        %4772 = vmatpush2.msra.mxu0 0.0
        %4773 = vmatprep.subr.mxu0 0.0
        %4774 = vmatpush2.msra.mxu0 0.0
        %4775 = vmatprep.subr.mxu0 0.0
        %4776 = vmatpush2.msra.mxu0 0.0
        %4777 = vmatprep.subr.mxu0 0.0
        %4778 = vmatpush2.msra.mxu0 0.0
        %4779 = vmatprep.subr.mxu0 0.0
        %4780 = vmatpush2.msra.mxu0 0.0
        %4781 = vmatprep.subr.mxu0 0.0
        %4782 = vmatpush2.msra.mxu0 0.0
        %4783 = vmatprep.mubr.f32.mxu0 0.0
        %4784 = vmatmul.mubr.f32.gmra.mxu0 %v4692
        %v4785 = vpop.f32.mrf.mxu0
        %v4786 = vadd.f32 %v4688, %v4785
        %v4787 = vpop.f32.mrf.mxu0
        %4788 = vmatprep.mubr.f32.mxu0 0.0
        %4789 = vmatmul.mubr.f32.gmra.mxu0 %v4695
        %v4790 = vpop.f32.mrf.mxu0
        %v4791 = vadd.f32 %v4688, %v4790
        %v4792 = vpop.f32.mrf.mxu0
        %4793 = vmatprep.mubr.f32.mxu0 0.0
        %4794 = vmatmul.mubr.f32.gmra.mxu0 %v4698
        %v4795 = vpop.f32.mrf.mxu0
        %v4796 = vadd.f32 %v4688, %v4795
        %v4797 = vpop.f32.mrf.mxu0
        %4798 = vmatprep.mubr.f32.mxu0 0.0
        %4799 = vmatmul.mubr.f32.gmra.mxu0 %v4701
        %v4800 = vpop.f32.mrf.mxu0
        %v4801 = vadd.f32 %v4688, %v4800
        %v4802 = vpop.f32.mrf.mxu0
        %4803 = vmatprep.mubr.f32.mxu0 0.0
        %4804 = vmatmul.mubr.f32.gmra.mxu0 %v4704
        %v4805 = vpop.f32.mrf.mxu0
        %v4806 = vadd.f32 %v4688, %v4805
        %v4807 = vpop.f32.mrf.mxu0
        %4808 = vmatprep.mubr.f32.mxu0 0.0
        %4809 = vmatmul.mubr.f32.gmra.mxu0 %v4707
        %v4810 = vpop.f32.mrf.mxu0
        %v4811 = vadd.f32 %v4688, %v4810
        %v4812 = vpop.f32.mrf.mxu0
        %4813 = vmatprep.mubr.f32.mxu0 0.0
        %4814 = vmatmul.mubr.f32.gmra.mxu0 %v4710
        %v4815 = vpop.f32.mrf.mxu0
        %v4816 = vadd.f32 %v4688, %v4815
        %v4817 = vpop.f32.mrf.mxu0
        %4818 = vmatprep.mubr.f32.mxu0 0.0
        %4819 = vmatmul.mubr.f32.gmra.mxu0 %v4713
        %v4820 = vpop.f32.mrf.mxu0
        %v4821 = vadd.f32 %v4688, %v4820
        %v4822 = vpop.f32.mrf.mxu0
        %4823 = vdwg.mxu0
        %v4824 = vmax.f32 %v4786, 0.0
        %v4825 = vmax.f32 %v4791, 0.0
        %v4826 = vmax.f32 %v4796, 0.0
        %v4827 = vmax.f32 %v4801, 0.0
        %v4828 = vmax.f32 %v4806, 0.0
        %v4829 = vmax.f32 %v4811, 0.0
        %v4830 = vmax.f32 %v4816, 0.0
        %v4831 = vmax.f32 %v4821, 0.0
        %vm4832 = vcmask 162816
        %4833 = vst.msk [vmem:[#allocation6] sm:$0xff] %vm4832, 0.0
        %vm4834 = vcmask 156672
        %4835 = vst.msk [vmem:[#allocation6 + $0x8] sm:$0x3] %vm4834, 0.0
        %4836 = vst.msk [vmem:[#allocation6 + $0x10] sm:$0xff] %vm4832, 0.0
        %4837 = vst.msk [vmem:[#allocation6 + $0x18] sm:$0x3] %vm4834, 0.0
        %4838 = vst.msk [vmem:[#allocation6 + $0x20] sm:$0xff] %vm4832, 0.0
        %4839 = vst.msk [vmem:[#allocation6 + $0x28] sm:$0x3] %vm4834, 0.0
        %4840 = vst.msk [vmem:[#allocation6 + $0x30] sm:$0xff] %vm4832, 0.0
        %4841 = vst.msk [vmem:[#allocation6 + $0x38] sm:$0x3] %vm4834, 0.0
        %4842 = vst.msk [vmem:[#allocation6 + $0x40] sm:$0xff] %vm4832, 0.0
        %4843 = vst.msk [vmem:[#allocation6 + $0x48] sm:$0x3] %vm4834, 0.0
        %4844 = vst.msk [vmem:[#allocation6 + $0x50] sm:$0xff] %vm4832, 0.0
        %4845 = vst.msk [vmem:[#allocation6 + $0x58] sm:$0x3] %vm4834, 0.0
        %4846 = vst.msk [vmem:[#allocation6 + $0x60] sm:$0xff] %vm4832, 0.0
        %4847 = vst.msk [vmem:[#allocation6 + $0x68] sm:$0x3] %vm4834, 0.0
        %4848 = vst.msk [vmem:[#allocation6 + $0x70] sm:$0xff] %vm4832, 0.0
        %4849 = vst.msk [vmem:[#allocation6 + $0x78] sm:$0x3] %vm4834, 0.0
        %4850 = vst.msk [vmem:[#allocation6 + $0x80] sm:$0xff] %vm4832, 0.0
        %4851 = vst.msk [vmem:[#allocation6 + $0x88] sm:$0x3] %vm4834, 0.0
        %4852 = vst.msk [vmem:[#allocation6 + $0x90] sm:$0xff] %vm4832, 0.0
        %4853 = vst.msk [vmem:[#allocation6 + $0x98] sm:$0x3] %vm4834, 0.0
        %s4854 = scalar_lea.vmem [#allocation6], 16
        %4855 = vst.msk [vmem:[%s4854 + $0x1] sm:$0xff] %vm4832, %v4824
        %4856 = vst.msk [vmem:[%s4854 + $0x11] sm:$0xff] %vm4832, %v4825
        %4857 = vst.msk [vmem:[%s4854 + $0x21] sm:$0xff] %vm4832, %v4826
        %4858 = vst.msk [vmem:[%s4854 + $0x31] sm:$0xff] %vm4832, %v4827
        %4859 = vst.msk [vmem:[%s4854 + $0x41] sm:$0xff] %vm4832, %v4828
        %4860 = vst.msk [vmem:[%s4854 + $0x51] sm:$0xff] %vm4832, %v4829
        %4861 = vst.msk [vmem:[%s4854 + $0x61] sm:$0xff] %vm4832, %v4830
        %4862 = vst.msk [vmem:[%s4854 + $0x71] sm:$0xff] %vm4832, %v4831
        %v4863 = vld [vmem:[#allocation6] sm:$0xff]
        %v4864 = vld [vmem:[#allocation6 + $0x8] sm:$0x3]
        %v4865 = vld [vmem:[#allocation6 + $0x10] sm:$0xff]
        %v4866 = vld [vmem:[#allocation6 + $0x18] sm:$0x3]
        %v4867 = vld [vmem:[#allocation6 + $0x20] sm:$0xff]
        %v4868 = vld [vmem:[#allocation6 + $0x28] sm:$0x3]
        %v4869 = vld [vmem:[#allocation6 + $0x30] sm:$0xff]
        %v4870 = vld [vmem:[#allocation6 + $0x38] sm:$0x3]
        %v4871 = vld [vmem:[#allocation6 + $0x40] sm:$0xff]
        %v4872 = vld [vmem:[#allocation6 + $0x48] sm:$0x3]
        %v4873 = vld [vmem:[#allocation6 + $0x50] sm:$0xff]
        %v4874 = vld [vmem:[#allocation6 + $0x58] sm:$0x3]
        %v4875 = vld [vmem:[#allocation6 + $0x60] sm:$0xff]
        %v4876 = vld [vmem:[#allocation6 + $0x68] sm:$0x3]
        %v4877 = vld [vmem:[#allocation6 + $0x70] sm:$0xff]
        %v4878 = vld [vmem:[#allocation6 + $0x78] sm:$0x3]
        %v4879 = vld [vmem:[#allocation6 + $0x80] sm:$0xff]
        %v4880 = vld [vmem:[#allocation6 + $0x88] sm:$0x3]
        %v4881 = vld [vmem:[#allocation6 + $0x90] sm:$0xff]
        %v4882 = vld [vmem:[#allocation6 + $0x98] sm:$0x3]
        %4883 = vst.msk [vmem:[#allocation7] sm:$0xff] %vm4832, %v4863
        %4884 = vst.msk [vmem:[#allocation7 + $0x10] sm:$0xff] %vm4832, %v4865
        %4885 = vst.msk [vmem:[#allocation7 + $0x20] sm:$0xff] %vm4832, %v4867
        %4886 = vst.msk [vmem:[#allocation7 + $0x30] sm:$0xff] %vm4832, %v4869
        %4887 = vst.msk [vmem:[#allocation7 + $0x40] sm:$0xff] %vm4832, %v4871
        %4888 = vst.msk [vmem:[#allocation7 + $0x50] sm:$0xff] %vm4832, %v4873
        %4889 = vst.msk [vmem:[#allocation7 + $0x60] sm:$0xff] %vm4832, %v4875
        %4890 = vst.msk [vmem:[#allocation7 + $0x70] sm:$0xff] %vm4832, %v4877
        %v4907 = vrot.slane %v4863, 1
        %v4908 = vrot.slane %v4864, 1
        %v4909 = vsel %vm639, %v4907, %v4908
        %v4910 = vrot.slane %v4865, 1
        %v4911 = vrot.slane %v4866, 1
        %v4912 = vsel %vm639, %v4910, %v4911
        %v4913 = vrot.slane %v4867, 1
        %v4914 = vrot.slane %v4868, 1
        %v4915 = vsel %vm639, %v4913, %v4914
        %v4916 = vrot.slane %v4869, 1
        %v4917 = vrot.slane %v4870, 1
        %v4918 = vsel %vm639, %v4916, %v4917
        %v4919 = vrot.slane %v4871, 1
        %v4920 = vrot.slane %v4872, 1
        %v4921 = vsel %vm639, %v4919, %v4920
        %v4922 = vrot.slane %v4873, 1
        %v4923 = vrot.slane %v4874, 1
        %v4924 = vsel %vm639, %v4922, %v4923
        %v4925 = vrot.slane %v4875, 1
        %v4926 = vrot.slane %v4876, 1
        %v4927 = vsel %vm639, %v4925, %v4926
        %v4928 = vrot.slane %v4877, 1
        %v4929 = vrot.slane %v4878, 1
        %v4930 = vsel %vm639, %v4928, %v4929
        %4931 = vrot.lane.b32.xlu0 %v4909, 20
        %v4932 = vpop.permute.xlu0 %4931
        %4933 = vrot.lane.b32.xlu0 %v4912, 20
        %v4934 = vpop.permute.xlu0 %4933
        %4935 = vrot.lane.b32.xlu0 %v4915, 20
        %v4936 = vpop.permute.xlu0 %4935
        %4937 = vrot.lane.b32.xlu0 %v4918, 20
        %v4938 = vpop.permute.xlu0 %4937
        %4939 = vrot.lane.b32.xlu0 %v4921, 20
        %v4940 = vpop.permute.xlu0 %4939
        %4941 = vrot.lane.b32.xlu0 %v4924, 20
        %v4942 = vpop.permute.xlu0 %4941
        %4943 = vrot.lane.b32.xlu0 %v4927, 20
        %v4944 = vpop.permute.xlu0 %4943
        %4945 = vrot.lane.b32.xlu0 %v4930, 20
        %v4946 = vpop.permute.xlu0 %4945
        %vm4955 = vcmask 326816
        %4956 = vst.msk [vmem:[#allocation7] sm:$0xff] %vm4955, %v4932
        %4957 = vst.msk [vmem:[#allocation7 + $0x10] sm:$0xff] %vm4955, %v4934
        %4958 = vst.msk [vmem:[#allocation7 + $0x20] sm:$0xff] %vm4955, %v4936
        %4959 = vst.msk [vmem:[#allocation7 + $0x30] sm:$0xff] %vm4955, %v4938
        %4960 = vst.msk [vmem:[#allocation7 + $0x40] sm:$0xff] %vm4955, %v4940
        %4961 = vst.msk [vmem:[#allocation7 + $0x50] sm:$0xff] %vm4955, %v4942
        %4962 = vst.msk [vmem:[#allocation7 + $0x60] sm:$0xff] %vm4955, %v4944
        %4963 = vst.msk [vmem:[#allocation7 + $0x70] sm:$0xff] %vm4955, %v4946
        %v4964 = vrot.slane %v4863, 2
        %v4965 = vrot.slane %v4864, 2
        %v4966 = vsel %vm849, %v4964, %v4965
        %v4967 = vrot.slane %v4865, 2
        %v4968 = vrot.slane %v4866, 2
        %v4969 = vsel %vm849, %v4967, %v4968
        %v4970 = vrot.slane %v4867, 2
        %v4971 = vrot.slane %v4868, 2
        %v4972 = vsel %vm849, %v4970, %v4971
        %v4973 = vrot.slane %v4869, 2
        %v4974 = vrot.slane %v4870, 2
        %v4975 = vsel %vm849, %v4973, %v4974
        %v4976 = vrot.slane %v4871, 2
        %v4977 = vrot.slane %v4872, 2
        %v4978 = vsel %vm849, %v4976, %v4977
        %v4979 = vrot.slane %v4873, 2
        %v4980 = vrot.slane %v4874, 2
        %v4981 = vsel %vm849, %v4979, %v4980
        %v4982 = vrot.slane %v4875, 2
        %v4983 = vrot.slane %v4876, 2
        %v4984 = vsel %vm849, %v4982, %v4983
        %v4985 = vrot.slane %v4877, 2
        %v4986 = vrot.slane %v4878, 2
        %v4987 = vsel %vm849, %v4985, %v4986
        %4988 = vrot.lane.b32.xlu0 %v4966, 40
        %v4989 = vpop.permute.xlu0 %4988
        %4990 = vrot.lane.b32.xlu0 %v4969, 40
        %v4991 = vpop.permute.xlu0 %4990
        %4992 = vrot.lane.b32.xlu0 %v4972, 40
        %v4993 = vpop.permute.xlu0 %4992
        %4994 = vrot.lane.b32.xlu0 %v4975, 40
        %v4995 = vpop.permute.xlu0 %4994
        %4996 = vrot.lane.b32.xlu0 %v4978, 40
        %v4997 = vpop.permute.xlu0 %4996
        %4998 = vrot.lane.b32.xlu0 %v4981, 40
        %v4999 = vpop.permute.xlu0 %4998
        %5000 = vrot.lane.b32.xlu0 %v4984, 40
        %v5001 = vpop.permute.xlu0 %5000
        %5002 = vrot.lane.b32.xlu0 %v4987, 40
        %v5003 = vpop.permute.xlu0 %5002
        %vm5012 = vcmask 490816
        %5013 = vst.msk [vmem:[#allocation7] sm:$0xff] %vm5012, %v4989
        %5014 = vst.msk [vmem:[#allocation7 + $0x10] sm:$0xff] %vm5012, %v4991
        %5015 = vst.msk [vmem:[#allocation7 + $0x20] sm:$0xff] %vm5012, %v4993
        %5016 = vst.msk [vmem:[#allocation7 + $0x30] sm:$0xff] %vm5012, %v4995
        %5017 = vst.msk [vmem:[#allocation7 + $0x40] sm:$0xff] %vm5012, %v4997
        %5018 = vst.msk [vmem:[#allocation7 + $0x50] sm:$0xff] %vm5012, %v4999
        %5019 = vst.msk [vmem:[#allocation7 + $0x60] sm:$0xff] %vm5012, %v5001
        %5020 = vst.msk [vmem:[#allocation7 + $0x70] sm:$0xff] %vm5012, %v5003
        %5022 = vrot.lane.b32.xlu0 %v4865, 60
        %v5023 = vpop.permute.xlu0 %5022
        %5024 = vrot.lane.b32.xlu0 %v4867, 60
        %v5025 = vpop.permute.xlu0 %5024
        %5026 = vrot.lane.b32.xlu0 %v4869, 60
        %v5027 = vpop.permute.xlu0 %5026
        %5028 = vrot.lane.b32.xlu0 %v4871, 60
        %v5029 = vpop.permute.xlu0 %5028
        %5030 = vrot.lane.b32.xlu0 %v4873, 60
        %v5031 = vpop.permute.xlu0 %5030
        %5032 = vrot.lane.b32.xlu0 %v4875, 60
        %v5033 = vpop.permute.xlu0 %5032
        %5034 = vrot.lane.b32.xlu0 %v4877, 60
        %v5035 = vpop.permute.xlu0 %5034
        %5036 = vrot.lane.b32.xlu0 %v4879, 60
        %v5037 = vpop.permute.xlu0 %5036
        %vm5046 = vcmask 654816
        %5047 = vst.msk [vmem:[#allocation7] sm:$0xff] %vm5046, %v5023
        %5048 = vst.msk [vmem:[#allocation7 + $0x10] sm:$0xff] %vm5046, %v5025
        %5049 = vst.msk [vmem:[#allocation7 + $0x20] sm:$0xff] %vm5046, %v5027
        %5050 = vst.msk [vmem:[#allocation7 + $0x30] sm:$0xff] %vm5046, %v5029
        %5051 = vst.msk [vmem:[#allocation7 + $0x40] sm:$0xff] %vm5046, %v5031
        %5052 = vst.msk [vmem:[#allocation7 + $0x50] sm:$0xff] %vm5046, %v5033
        %5053 = vst.msk [vmem:[#allocation7 + $0x60] sm:$0xff] %vm5046, %v5035
        %5054 = vst.msk [vmem:[#allocation7 + $0x70] sm:$0xff] %vm5046, %v5037
        %v5056 = vrot.slane %v4879, 1
        %v5057 = vrot.slane %v4880, 1
        %v5058 = vsel %vm639, %v5056, %v5057
        %5059 = vrot.lane.b32.xlu0 %v4912, 80
        %v5060 = vpop.permute.xlu0 %5059
        %5061 = vrot.lane.b32.xlu0 %v4915, 80
        %v5062 = vpop.permute.xlu0 %5061
        %5063 = vrot.lane.b32.xlu0 %v4918, 80
        %v5064 = vpop.permute.xlu0 %5063
        %5065 = vrot.lane.b32.xlu0 %v4921, 80
        %v5066 = vpop.permute.xlu0 %5065
        %5067 = vrot.lane.b32.xlu0 %v4924, 80
        %v5068 = vpop.permute.xlu0 %5067
        %5069 = vrot.lane.b32.xlu0 %v4927, 80
        %v5070 = vpop.permute.xlu0 %5069
        %5071 = vrot.lane.b32.xlu0 %v4930, 80
        %v5072 = vpop.permute.xlu0 %5071
        %5073 = vrot.lane.b32.xlu0 %v5058, 80
        %v5074 = vpop.permute.xlu0 %5073
        %vm5083 = vcmask 818816
        %5084 = vst.msk [vmem:[#allocation7] sm:$0xff] %vm5083, %v5060
        %5085 = vst.msk [vmem:[#allocation7 + $0x10] sm:$0xff] %vm5083, %v5062
        %5086 = vst.msk [vmem:[#allocation7 + $0x20] sm:$0xff] %vm5083, %v5064
        %5087 = vst.msk [vmem:[#allocation7 + $0x30] sm:$0xff] %vm5083, %v5066
        %5088 = vst.msk [vmem:[#allocation7 + $0x40] sm:$0xff] %vm5083, %v5068
        %5089 = vst.msk [vmem:[#allocation7 + $0x50] sm:$0xff] %vm5083, %v5070
        %5090 = vst.msk [vmem:[#allocation7 + $0x60] sm:$0xff] %vm5083, %v5072
        %5091 = vst.msk [vmem:[#allocation7 + $0x70] sm:$0xff] %vm5083, %v5074
        %v5092 = vrot.slane %v4879, 2
        %v5093 = vrot.slane %v4880, 2
        %v5094 = vsel %vm849, %v5092, %v5093
        %5095 = vrot.lane.b32.xlu0 %v4969, 100
        %v5096 = vpop.permute.xlu0 %5095
        %5097 = vrot.lane.b32.xlu0 %v4972, 100
        %v5098 = vpop.permute.xlu0 %5097
        %5099 = vrot.lane.b32.xlu0 %v4975, 100
        %v5100 = vpop.permute.xlu0 %5099
        %5101 = vrot.lane.b32.xlu0 %v4978, 100
        %v5102 = vpop.permute.xlu0 %5101
        %5103 = vrot.lane.b32.xlu0 %v4981, 100
        %v5104 = vpop.permute.xlu0 %5103
        %5105 = vrot.lane.b32.xlu0 %v4984, 100
        %v5106 = vpop.permute.xlu0 %5105
        %5107 = vrot.lane.b32.xlu0 %v4987, 100
        %v5108 = vpop.permute.xlu0 %5107
        %5109 = vrot.lane.b32.xlu0 %v5094, 100
        %v5110 = vpop.permute.xlu0 %5109
        %vm5119 = vcmask 982816
        %5120 = vst.msk [vmem:[#allocation7] sm:$0xff] %vm5119, %v5096
        %5121 = vst.msk [vmem:[#allocation7 + $0x10] sm:$0xff] %vm5119, %v5098
        %5122 = vst.msk [vmem:[#allocation7 + $0x20] sm:$0xff] %vm5119, %v5100
        %5123 = vst.msk [vmem:[#allocation7 + $0x30] sm:$0xff] %vm5119, %v5102
        %5124 = vst.msk [vmem:[#allocation7 + $0x40] sm:$0xff] %vm5119, %v5104
        %5125 = vst.msk [vmem:[#allocation7 + $0x50] sm:$0xff] %vm5119, %v5106
        %5126 = vst.msk [vmem:[#allocation7 + $0x60] sm:$0xff] %vm5119, %v5108
        %5127 = vst.msk [vmem:[#allocation7 + $0x70] sm:$0xff] %vm5119, %v5110
        %5129 = vrot.lane.b32.xlu0 %v4867, 120
        %v5130 = vpop.permute.xlu0 %5129
        %5131 = vrot.lane.b32.xlu0 %v4869, 120
        %v5132 = vpop.permute.xlu0 %5131
        %5133 = vrot.lane.b32.xlu0 %v4871, 120
        %v5134 = vpop.permute.xlu0 %5133
        %5135 = vrot.lane.b32.xlu0 %v4873, 120
        %v5136 = vpop.permute.xlu0 %5135
        %5137 = vrot.lane.b32.xlu0 %v4875, 120
        %v5138 = vpop.permute.xlu0 %5137
        %5139 = vrot.lane.b32.xlu0 %v4877, 120
        %v5140 = vpop.permute.xlu0 %5139
        %5141 = vrot.lane.b32.xlu0 %v4879, 120
        %v5142 = vpop.permute.xlu0 %5141
        %5143 = vrot.lane.b32.xlu0 %v4881, 120
        %v5144 = vpop.permute.xlu0 %5143
        %vm5153 = vcmask 1048512
        %5154 = vst.msk [vmem:[#allocation7] sm:$0xff] %vm5153, %v5130
        %5155 = vst.msk [vmem:[#allocation7 + $0x8] sm:$0xff] %vm3932, %v5130
        %5156 = vst.msk [vmem:[#allocation7 + $0x10] sm:$0xff] %vm5153, %v5132
        %5157 = vst.msk [vmem:[#allocation7 + $0x18] sm:$0xff] %vm3932, %v5132
        %5158 = vst.msk [vmem:[#allocation7 + $0x20] sm:$0xff] %vm5153, %v5134
        %5159 = vst.msk [vmem:[#allocation7 + $0x28] sm:$0xff] %vm3932, %v5134
        %5160 = vst.msk [vmem:[#allocation7 + $0x30] sm:$0xff] %vm5153, %v5136
        %5161 = vst.msk [vmem:[#allocation7 + $0x38] sm:$0xff] %vm3932, %v5136
        %5162 = vst.msk [vmem:[#allocation7 + $0x40] sm:$0xff] %vm5153, %v5138
        %5163 = vst.msk [vmem:[#allocation7 + $0x48] sm:$0xff] %vm3932, %v5138
        %5164 = vst.msk [vmem:[#allocation7 + $0x50] sm:$0xff] %vm5153, %v5140
        %5165 = vst.msk [vmem:[#allocation7 + $0x58] sm:$0xff] %vm3932, %v5140
        %5166 = vst.msk [vmem:[#allocation7 + $0x60] sm:$0xff] %vm5153, %v5142
        %5167 = vst.msk [vmem:[#allocation7 + $0x68] sm:$0xff] %vm3932, %v5142
        %5168 = vst.msk [vmem:[#allocation7 + $0x70] sm:$0xff] %vm5153, %v5144
        %5169 = vst.msk [vmem:[#allocation7 + $0x78] sm:$0xff] %vm3932, %v5144
        %v5171 = vrot.slane %v4881, 1
        %v5172 = vrot.slane %v4882, 1
        %v5173 = vsel %vm639, %v5171, %v5172
        %5174 = vrot.lane.b32.xlu0 %v4915, 12
        %v5175 = vpop.permute.xlu0 %5174
        %5176 = vrot.lane.b32.xlu0 %v4918, 12
        %v5177 = vpop.permute.xlu0 %5176
        %5178 = vrot.lane.b32.xlu0 %v4921, 12
        %v5179 = vpop.permute.xlu0 %5178
        %5180 = vrot.lane.b32.xlu0 %v4924, 12
        %v5181 = vpop.permute.xlu0 %5180
        %5182 = vrot.lane.b32.xlu0 %v4927, 12
        %v5183 = vpop.permute.xlu0 %5182
        %5184 = vrot.lane.b32.xlu0 %v4930, 12
        %v5185 = vpop.permute.xlu0 %5184
        %5186 = vrot.lane.b32.xlu0 %v5058, 12
        %v5187 = vpop.permute.xlu0 %5186
        %5188 = vrot.lane.b32.xlu0 %v5173, 12
        %v5189 = vpop.permute.xlu0 %5188
        %vm5198 = vcmask 261216
        %5199 = vst.msk [vmem:[#allocation7 + $0x8] sm:$0xff] %vm5198, %v5175
        %5200 = vst.msk [vmem:[#allocation7 + $0x18] sm:$0xff] %vm5198, %v5177
        %5201 = vst.msk [vmem:[#allocation7 + $0x28] sm:$0xff] %vm5198, %v5179
        %5202 = vst.msk [vmem:[#allocation7 + $0x38] sm:$0xff] %vm5198, %v5181
        %5203 = vst.msk [vmem:[#allocation7 + $0x48] sm:$0xff] %vm5198, %v5183
        %5204 = vst.msk [vmem:[#allocation7 + $0x58] sm:$0xff] %vm5198, %v5185
        %5205 = vst.msk [vmem:[#allocation7 + $0x68] sm:$0xff] %vm5198, %v5187
        %5206 = vst.msk [vmem:[#allocation7 + $0x78] sm:$0xff] %vm5198, %v5189
        %v5207 = vrot.slane %v4881, 2
        %v5208 = vrot.slane %v4882, 2
        %v5209 = vsel %vm849, %v5207, %v5208
        %5210 = vrot.lane.b32.xlu0 %v4972, 32
        %v5211 = vpop.permute.xlu0 %5210
        %5212 = vrot.lane.b32.xlu0 %v4975, 32
        %v5213 = vpop.permute.xlu0 %5212
        %5214 = vrot.lane.b32.xlu0 %v4978, 32
        %v5215 = vpop.permute.xlu0 %5214
        %5216 = vrot.lane.b32.xlu0 %v4981, 32
        %v5217 = vpop.permute.xlu0 %5216
        %5218 = vrot.lane.b32.xlu0 %v4984, 32
        %v5219 = vpop.permute.xlu0 %5218
        %5220 = vrot.lane.b32.xlu0 %v4987, 32
        %v5221 = vpop.permute.xlu0 %5220
        %5222 = vrot.lane.b32.xlu0 %v5094, 32
        %v5223 = vpop.permute.xlu0 %5222
        %5224 = vrot.lane.b32.xlu0 %v5209, 32
        %v5225 = vpop.permute.xlu0 %5224
        %vm5234 = vcmask 425216
        %5235 = vst.msk [vmem:[#allocation7 + $0x8] sm:$0xff] %vm5234, %v5211
        %5236 = vst.msk [vmem:[#allocation7 + $0x18] sm:$0xff] %vm5234, %v5213
        %5237 = vst.msk [vmem:[#allocation7 + $0x28] sm:$0xff] %vm5234, %v5215
        %5238 = vst.msk [vmem:[#allocation7 + $0x38] sm:$0xff] %vm5234, %v5217
        %5239 = vst.msk [vmem:[#allocation7 + $0x48] sm:$0xff] %vm5234, %v5219
        %5240 = vst.msk [vmem:[#allocation7 + $0x58] sm:$0xff] %vm5234, %v5221
        %5241 = vst.msk [vmem:[#allocation7 + $0x68] sm:$0xff] %vm5234, %v5223
        %5242 = vst.msk [vmem:[#allocation7 + $0x78] sm:$0xff] %vm5234, %v5225
        %v5243 = vld [vmem:[#allocation7] sm:$0xff]
        %v5244 = vld [vmem:[#allocation7 + $0x8] sm:$0xff]
        %v5245 = vld [vmem:[#allocation7 + $0x10] sm:$0xff]
        %v5246 = vld [vmem:[#allocation7 + $0x18] sm:$0xff]
        %v5247 = vld [vmem:[#allocation7 + $0x20] sm:$0xff]
        %v5248 = vld [vmem:[#allocation7 + $0x28] sm:$0xff]
        %v5249 = vld [vmem:[#allocation7 + $0x30] sm:$0xff]
        %v5250 = vld [vmem:[#allocation7 + $0x38] sm:$0xff]
        %v5251 = vld [vmem:[#allocation7 + $0x40] sm:$0xff]
        %v5252 = vld [vmem:[#allocation7 + $0x48] sm:$0xff]
        %v5253 = vld [vmem:[#allocation7 + $0x50] sm:$0xff]
        %v5254 = vld [vmem:[#allocation7 + $0x58] sm:$0xff]
        %v5255 = vld [vmem:[#allocation7 + $0x60] sm:$0xff]
        %v5256 = vld [vmem:[#allocation7 + $0x68] sm:$0xff]
        %v5257 = vld [vmem:[#allocation7 + $0x70] sm:$0xff]
        %v5258 = vld [vmem:[#allocation7 + $0x78] sm:$0xff]
        %v5259 = vld [vmem:[%s6] sm:$0xff]
        %v5260 = vld [vmem:[%s6 + $0x8] sm:$0xff]
        %v5261 = vld [vmem:[%s6 + $0x10] sm:$0xff]
        %v5262 = vld [vmem:[%s6 + $0x18] sm:$0xff]
        %v5263 = vld [vmem:[%s6 + $0x20] sm:$0xff]
        %v5264 = vld [vmem:[%s6 + $0x28] sm:$0xff]
        %v5265 = vld [vmem:[%s6 + $0x30] sm:$0xff]
        %v5266 = vld [vmem:[%s6 + $0x38] sm:$0xff]
        %v5267 = vld [vmem:[%s6 + $0x40] sm:$0xff]
        %v5268 = vld [vmem:[%s6 + $0x48] sm:$0xff]
        %v5269 = vld [vmem:[%s6 + $0x50] sm:$0xff]
        %v5270 = vld [vmem:[%s6 + $0x58] sm:$0xff]
        %v5271 = vld [vmem:[%s6 + $0x60] sm:$0xff]
        %v5272 = vld [vmem:[%s6 + $0x68] sm:$0xff]
        %v5273 = vld [vmem:[%s6 + $0x70] sm:$0xff]
        %v5274 = vld [vmem:[%s6 + $0x78] sm:$0xff]
        %v5275 = vld [vmem:[%s6 + $0x80] sm:$0xff]
        %v5276 = vld [vmem:[%s6 + $0x88] sm:$0xff]
        %v5277 = vld [vmem:[%s6 + $0x90] sm:$0xff]
        %v5278 = vld [vmem:[%s6 + $0x98] sm:$0xff]
        %v5279 = vld [vmem:[%s6 + $0xa0] sm:$0xff]
        %v5280 = vld [vmem:[%s6 + $0xa8] sm:$0xff]
        %v5281 = vld [vmem:[%s6 + $0xb0] sm:$0xf]
        %vm5282 = vcmask 424960
        %v5284 = vsel %vm5282, %v5244, 0
        %v5287 = vsel %vm5282, %v5246, 0
        %v5290 = vsel %vm5282, %v5248, 0
        %v5293 = vsel %vm5282, %v5250, 0
        %v5296 = vsel %vm5282, %v5252, 0
        %v5299 = vsel %vm5282, %v5254, 0
        %v5302 = vsel %vm5282, %v5256, 0
        %v5305 = vsel %vm5282, %v5258, 0
        %v5308 = vsel %vm4715, %v5281, 0
        %5310 = vmatprep.subr.mxu0 0.0
        %5311 = vmatpush1.msra.mxu0 %v5274
        %5312 = vmatprep.subr.mxu0 0.0
        %5313 = vmatpush1.msra.mxu0 %v5273
        %5314 = vmatprep.subr.mxu0 0.0
        %5315 = vmatpush1.msra.mxu0 %v5272
        %5316 = vmatprep.subr.mxu0 0.0
        %5317 = vmatpush1.msra.mxu0 %v5271
        %5318 = vmatprep.subr.mxu0 0.0
        %5319 = vmatpush1.msra.mxu0 %v5270
        %5320 = vmatprep.subr.mxu0 0.0
        %5321 = vmatpush1.msra.mxu0 %v5269
        %5322 = vmatprep.subr.mxu0 0.0
        %5323 = vmatpush1.msra.mxu0 %v5268
        %5324 = vmatprep.subr.mxu0 0.0
        %5325 = vmatpush1.msra.mxu0 %v5267
        %5326 = vmatprep.subr.mxu0 0.0
        %5327 = vmatpush1.msra.mxu0 %v5266
        %5328 = vmatprep.subr.mxu0 0.0
        %5329 = vmatpush1.msra.mxu0 %v5265
        %5330 = vmatprep.subr.mxu0 0.0
        %5331 = vmatpush1.msra.mxu0 %v5264
        %5332 = vmatprep.subr.mxu0 0.0
        %5333 = vmatpush1.msra.mxu0 %v5263
        %5334 = vmatprep.subr.mxu0 0.0
        %5335 = vmatpush1.msra.mxu0 %v5262
        %5336 = vmatprep.subr.mxu0 0.0
        %5337 = vmatpush1.msra.mxu0 %v5261
        %5338 = vmatprep.subr.mxu0 0.0
        %5339 = vmatpush1.msra.mxu0 %v5260
        %5340 = vmatprep.subr.mxu0 0.0
        %5341 = vmatpush1.msra.mxu0 %v5259
        %5342 = vmatprep.subr.mxu0 0.0
        %5343 = vmatpush2.msra.mxu0 0.0
        %5344 = vmatprep.subr.mxu0 0.0
        %5345 = vmatpush2.msra.mxu0 0.0
        %5346 = vmatprep.subr.mxu0 0.0
        %5347 = vmatpush2.msra.mxu0 0.0
        %5348 = vmatprep.subr.mxu0 0.0
        %5349 = vmatpush2.msra.mxu0 0.0
        %5350 = vmatprep.subr.mxu0 0.0
        %5351 = vmatpush2.msra.mxu0 0.0
        %5352 = vmatprep.subr.mxu0 0.0
        %5353 = vmatpush2.msra.mxu0 0.0
        %5354 = vmatprep.subr.mxu0 0.0
        %5355 = vmatpush2.msra.mxu0 0.0
        %5356 = vmatprep.subr.mxu0 0.0
        %5357 = vmatpush2.msra.mxu0 0.0
        %5358 = vmatprep.subr.mxu0 0.0
        %5359 = vmatpush2.msra.mxu0 0.0
        %5360 = vmatprep.subr.mxu0 0.0
        %5361 = vmatpush2.msra.mxu0 %v5308
        %5362 = vmatprep.subr.mxu0 0.0
        %5363 = vmatpush2.msra.mxu0 %v5280
        %5364 = vmatprep.subr.mxu0 0.0
        %5365 = vmatpush2.msra.mxu0 %v5279
        %5366 = vmatprep.subr.mxu0 0.0
        %5367 = vmatpush2.msra.mxu0 %v5278
        %5368 = vmatprep.subr.mxu0 0.0
        %5369 = vmatpush2.msra.mxu0 %v5277
        %5370 = vmatprep.subr.mxu0 0.0
        %5371 = vmatpush2.msra.mxu0 %v5276
        %5372 = vmatprep.subr.mxu0 0.0
        %5373 = vmatpush2.msra.mxu0 %v5275
        %5374 = vmatprep.mubr.f32.mxu0 %v5284
        %5375 = vmatmul.mubr.f32.gmra.mxu0 %v5243
        %v5376 = vpop.f32.mrf.mxu0
        %v5377 = vadd.f32 0.0, %v5376
        %v5378 = vpop.f32.mrf.mxu0
        %5379 = vmatprep.mubr.f32.mxu0 %v5287
        %5380 = vmatmul.mubr.f32.gmra.mxu0 %v5245
        %v5381 = vpop.f32.mrf.mxu0
        %v5382 = vadd.f32 0.0, %v5381
        %v5383 = vpop.f32.mrf.mxu0
        %5384 = vmatprep.mubr.f32.mxu0 %v5290
        %5385 = vmatmul.mubr.f32.gmra.mxu0 %v5247
        %v5386 = vpop.f32.mrf.mxu0
        %v5387 = vadd.f32 0.0, %v5386
        %v5388 = vpop.f32.mrf.mxu0
        %5389 = vmatprep.mubr.f32.mxu0 %v5293
        %5390 = vmatmul.mubr.f32.gmra.mxu0 %v5249
        %v5391 = vpop.f32.mrf.mxu0
        %v5392 = vadd.f32 0.0, %v5391
        %v5393 = vpop.f32.mrf.mxu0
        %5394 = vmatprep.mubr.f32.mxu0 %v5296
        %5395 = vmatmul.mubr.f32.gmra.mxu0 %v5251
        %v5396 = vpop.f32.mrf.mxu0
        %v5397 = vadd.f32 0.0, %v5396
        %v5398 = vpop.f32.mrf.mxu0
        %5399 = vmatprep.mubr.f32.mxu0 %v5299
        %5400 = vmatmul.mubr.f32.gmra.mxu0 %v5253
        %v5401 = vpop.f32.mrf.mxu0
        %v5402 = vadd.f32 0.0, %v5401
        %v5403 = vpop.f32.mrf.mxu0
        %5404 = vmatprep.mubr.f32.mxu0 %v5302
        %5405 = vmatmul.mubr.f32.gmra.mxu0 %v5255
        %v5406 = vpop.f32.mrf.mxu0
        %v5407 = vadd.f32 0.0, %v5406
        %v5408 = vpop.f32.mrf.mxu0
        %5409 = vmatprep.mubr.f32.mxu0 %v5305
        %5410 = vmatmul.mubr.f32.gmra.mxu0 %v5257
        %v5411 = vpop.f32.mrf.mxu0
        %v5412 = vadd.f32 0.0, %v5411
        %v5413 = vpop.f32.mrf.mxu0
        %5414 = vdwg.mxu0
        %v5415 = vld [vmem:[%s7] sm:$0x1]
        %v5417 = vlaneseq
        %v5418 = vshrl.u32 %v5417, 7
        %v5419 = vsub.s32 0, %v5418
        %v5420 = vrot.slane %v5415, %v5419
        %v5422 = vmul.f32 %v5377, %v5420
        %v5423 = vmul.f32 %v5382, %v5420
        %v5424 = vmul.f32 %v5387, %v5420
        %v5425 = vmul.f32 %v5392, %v5420
        %v5426 = vmul.f32 %v5397, %v5420
        %v5427 = vmul.f32 %v5402, %v5420
        %v5428 = vmul.f32 %v5407, %v5420
        %v5429 = vmul.f32 %v5412, %v5420
        %v5430 = vld [vmem:[%s8] sm:$0x1]
        %v5432 = vlaneseq
        %v5433 = vshrl.u32 %v5432, 7
        %v5434 = vsub.s32 0, %v5433
        %v5435 = vrot.slane %v5430, %v5434
        %v5437 = vadd.f32 %v5422, %v5435
        %v5438 = vadd.f32 %v5423, %v5435
        %v5439 = vadd.f32 %v5424, %v5435
        %v5440 = vadd.f32 %v5425, %v5435
        %v5441 = vadd.f32 %v5426, %v5435
        %v5442 = vadd.f32 %v5427, %v5435
        %v5443 = vadd.f32 %v5428, %v5435
        %v5444 = vadd.f32 %v5429, %v5435
        %v5445 = vmax.f32 %v5437, 0.0
        %v5446 = vmax.f32 %v5438, 0.0
        %v5447 = vmax.f32 %v5439, 0.0
        %v5448 = vmax.f32 %v5440, 0.0
        %v5449 = vmax.f32 %v5441, 0.0
        %v5450 = vmax.f32 %v5442, 0.0
        %v5451 = vmax.f32 %v5443, 0.0
        %v5452 = vmax.f32 %v5444, 0.0
        %v5453 = vlaneseq
        %v5454 = vand.u32 %v5453, 127
        %v5455 = vld [vmem:[%s9] sm:$0xff]
        %v5456 = vld [vmem:[%s9 + $0x8] sm:$0xff]
        %v5457 = vld [vmem:[%s9 + $0x10] sm:$0xff]
        %v5458 = vld [vmem:[%s9 + $0x18] sm:$0xff]
        %v5459 = vld [vmem:[%s9 + $0x20] sm:$0xff]
        %v5460 = vld [vmem:[%s9 + $0x28] sm:$0xff]
        %v5461 = vld [vmem:[%s9 + $0x30] sm:$0xff]
        %v5462 = vld [vmem:[%s9 + $0x38] sm:$0xff]
        %v5463 = vmul.f32 %v5445, %v5455
        %v5464 = vmul.f32 %v5446, %v5456
        %v5465 = vmul.f32 %v5447, %v5457
        %v5466 = vmul.f32 %v5448, %v5458
        %v5467 = vmul.f32 %v5449, %v5459
        %v5468 = vmul.f32 %v5450, %v5460
        %v5469 = vmul.f32 %v5451, %v5461
        %v5470 = vmul.f32 %v5452, %v5462
        %vm5471 = vcmask 261120
        %v5472 = vsel %vm5471, %v5463, 0.0
        %v5473 = vsel %vm5471, %v5464, 0.0
        %v5474 = vadd.f32 %v5472, %v5473
        %v5475 = vsel %vm5471, %v5465, 0.0
        %v5476 = vadd.f32 %v5474, %v5475
        %v5477 = vsel %vm5471, %v5466, 0.0
        %v5478 = vadd.f32 %v5476, %v5477
        %v5479 = vsel %vm5471, %v5467, 0.0
        %v5480 = vadd.f32 %v5478, %v5479
        %v5481 = vsel %vm5471, %v5468, 0.0
        %v5482 = vadd.f32 %v5480, %v5481
        %v5483 = vsel %vm5471, %v5469, 0.0
        %v5484 = vadd.f32 %v5482, %v5483
        %v5485 = vsel %vm5471, %v5470, 0.0
        %v5486 = vadd.f32 %v5484, %v5485
        %5487 = vadd.xlane.f32.xlu0 %v5486
        %v5488 = vpop.xlane.xlu0 %5487
        %v5489 = vrot.slane %v5488, 4
        %v5490 = vadd.f32 %v5488, %v5489
        %v5491 = vrot.slane %v5490, 2
        %v5492 = vadd.f32 %v5490, %v5491
        %v5493 = vrot.slane %v5492, 1
        %v5494 = vadd.f32 %v5492, %v5493
        %s5495 = vtos %v5494
        %vm5496 = vcmp.eq.s32.totalorder %v5454, 0
        %v5497 = vstv %s5495
        %v5498 = vsel %vm5496, %v5497, 0.0
        %s5499 = scalar_lea.vmem %s9, 64
        %v5500 = vld [vmem:[%s5499] sm:$0xff]
        %v5501 = vld [vmem:[%s5499 + $0x8] sm:$0xff]
        %v5502 = vld [vmem:[%s5499 + $0x10] sm:$0xff]
        %v5503 = vld [vmem:[%s5499 + $0x18] sm:$0xff]
        %v5504 = vld [vmem:[%s5499 + $0x20] sm:$0xff]
        %v5505 = vld [vmem:[%s5499 + $0x28] sm:$0xff]
        %v5506 = vld [vmem:[%s5499 + $0x30] sm:$0xff]
        %v5507 = vld [vmem:[%s5499 + $0x38] sm:$0xff]
        %v5508 = vmul.f32 %v5445, %v5500
        %v5509 = vmul.f32 %v5446, %v5501
        %v5510 = vmul.f32 %v5447, %v5502
        %v5511 = vmul.f32 %v5448, %v5503
        %v5512 = vmul.f32 %v5449, %v5504
        %v5513 = vmul.f32 %v5450, %v5505
        %v5514 = vmul.f32 %v5451, %v5506
        %v5515 = vmul.f32 %v5452, %v5507
        %v5516 = vsel %vm5471, %v5508, 0.0
        %v5517 = vsel %vm5471, %v5509, 0.0
        %v5518 = vadd.f32 %v5516, %v5517
        %v5519 = vsel %vm5471, %v5510, 0.0
        %v5520 = vadd.f32 %v5518, %v5519
        %v5521 = vsel %vm5471, %v5511, 0.0
        %v5522 = vadd.f32 %v5520, %v5521
        %v5523 = vsel %vm5471, %v5512, 0.0
        %v5524 = vadd.f32 %v5522, %v5523
        %v5525 = vsel %vm5471, %v5513, 0.0
        %v5526 = vadd.f32 %v5524, %v5525
        %v5527 = vsel %vm5471, %v5514, 0.0
        %v5528 = vadd.f32 %v5526, %v5527
        %v5529 = vsel %vm5471, %v5515, 0.0
        %v5530 = vadd.f32 %v5528, %v5529
        %5531 = vadd.xlane.f32.xlu0 %v5530
        %v5532 = vpop.xlane.xlu0 %5531
        %v5533 = vrot.slane %v5532, 4
        %v5534 = vadd.f32 %v5532, %v5533
        %v5535 = vrot.slane %v5534, 2
        %v5536 = vadd.f32 %v5534, %v5535
        %v5537 = vrot.slane %v5536, 1
        %v5538 = vadd.f32 %v5536, %v5537
        %s5539 = vtos %v5538
        %vm5540 = vcmp.eq.s32.totalorder %v5454, 1
        %v5541 = vstv %s5539
        %v5542 = vsel %vm5540, %v5541, %v5498
        %v5543 = vld [vmem:[%s10] sm:$0x1]
        %v5544 = vadd.f32 %v5542, %v5543
        %5545 = vst [vmem:[%s378] sm:$0x1] %v5544
        %s5546 = sand.u32 %s269, 1
        %s5547 = scalar_lea.sflag [#allocation9], %s5546
        %s5548 = sand.u32 %s269, 1
        %s5549 = scalar_lea.vmem [#allocation8], %s5548
        // Predicated region
        $region65: #{tpu_custom_call.1} parent=63 // pred_check
          %p5550 = pneg %p279
        $region66: #{tpu_custom_call.1} parent=63 // pred_check_branch
          %5552 = sbr.rel (%p5550) target = $region68
        $region67: #{tpu_custom_call.1} parent=63 // pred_region
          %s5554 = ssub.s32 16, 16
          %5555 = vsyncadd %s5547, %s5554
          %s5556 = smul.addr %s25, 16
          %s5557 = scalar_lea.hbm %s11, %s5556
          %s5559 = sshll.u32 %s5549, 4
          %s5560 = int_to_ptr.vmem [resolvable:$true] %s5559
          %5562 = dma.vmem_to_hbm [thread:$0]  %s5560, 16, %s5557, %s5547
        $region68: #{tpu_custom_call.1} parent=63 // pred_fallthru
          _
      $region64: #{tpu_custom_call.1} parent=5 // pred_fallthru
        _
      %p5563 = scmp.le.s32.totalorder 2, %s20
      // Predicated region
      $region69: #{tpu_custom_call.1} parent=5 // pred_check
        %p5564 = pneg %p5563
      $region70: #{tpu_custom_call.1} parent=5 // pred_check_branch
        %5566 = sbr.rel (%p5564) target = $region72
      $region71: #{tpu_custom_call.1} parent=5 // pred_region
        %s5567 = ssub.s32 %s20, 2
        // Predicated region
        $region73: #{tpu_custom_call.1} parent=71 // pred_check
          %p5568 = pneg %p285
        $region74: #{tpu_custom_call.1} parent=71 // pred_check_branch
          %5570 = sbr.rel (%p5568) target = $region76
        $region75: #{tpu_custom_call.1} parent=71 // pred_region
          %s5571 = sand.u32 %s270, 1
          %s5572 = scalar_lea.sflag [#allocation9], %s5571
          %s5573 = sand.u32 %s270, 1
          %s5574 = scalar_lea.vmem [#allocation8], %s5573
          %5575 = dma.done %s5572, 16
        $region76: #{tpu_custom_call.1} parent=71 // pred_fallthru
          _
      $region72: #{tpu_custom_call.1} parent=5 // pred_fallthru
        _
    $region6: #{tpu_custom_call.1} parent=1 // loop_footer
      %s24 = sadd.s32 1, %s20
    $region7: #{tpu_custom_call.1} parent=1 // loop_footer_branch
      %19 = sbr.rel target = $region3
    $region8: #{tpu_custom_call.1} parent=1 // loop_exit
      _
    %5576 = vsyncpa [#allocation9], 1
    %s5577 = scalar_lea.sflag [#allocation9], 1
    %5578 = vsyncpa %s5577, 1

</llo_original>
